<compile_context>
chip_gen: v7x
topology: tpu7x:2x2x1
jax: 0.10.0
libtpu: 0.0.40
codegen_flags: <defaults>
</compile_context>

<pallas_src>
import functools
import math

import jax
import jax.numpy as jnp
from jax.experimental import pallas as pl
from jax.experimental.pallas import tpu as pltpu  # noqa: F401  (not needed at this size)

# ----------------------------- model config (scaled down) -----------------------------
VOCAB = 50
TYPE_VOCAB = 2
MAX_POS = 64
HIDDEN = 32
NUM_HEADS = 2
HEAD_DIM = HIDDEN // NUM_HEADS
INTERMEDIATE = 64
NUM_LAYERS = 2
CWS_LABELS = 4
POS_LABELS = 20
NUM_LABELS = CWS_LABELS + POS_LABELS
HEAD_PAD = 128          # lane-dense classifier output width (real columns: NUM_LABELS)
LN_EPS = 1e-12


# ----------------------------- in-kernel helpers -----------------------------
def _ln(x, g, b, eps):
    mu = jnp.mean(x, axis=-1, keepdims=True)
    xc = x - mu
    var = jnp.mean(xc * xc, axis=-1, keepdims=True)
    return xc * jax.lax.rsqrt(var + eps) * g + b


def _gelu(x):
    # TODO(synk): HF BertModel's default gelu is erf-based; this is the tanh approximation.
    return 0.5 * x * (1.0 + jnp.tanh(0.7978845608028654 * (x + 0.044715 * x * x * x)))


def _dot(a, b):
    return jnp.dot(a, b, preferred_element_type=jnp.float32)


# ----------------------------- fused Pallas kernel -----------------------------
def _fused_bert_kernel(emb_ref, bias_ref, emb_g_ref, emb_b_ref,
                       wq_ref, bq_ref, wk_ref, bk_ref, wv_ref, bv_ref,
                       wo_ref, bo_ref, ln1_g_ref, ln1_b_ref,
                       ff1_w_ref, ff1_b_ref, ff2_w_ref, ff2_b_ref,
                       ln2_g_ref, ln2_b_ref,
                       head_w_ref, head_b_ref,
                       o_ref, *, num_layers, num_heads, eps, scale):
    """Embedding LN -> NUM_LAYERS encoder layers -> merged tagger head, all resident in VMEM."""
    bias = bias_ref[...]                                             # (M, M) block-diag + padding
    x = _ln(emb_ref[...], emb_g_ref[...], emb_b_ref[...], eps)       # (M, H)

    for l in range(num_layers):                                      # static unroll (L = 2)
        # -------- self-attention (heads split via static weight-ref views) --------
        attn = jnp.zeros_like(x)
        for h in range(num_heads):
            q = _dot(x, wq_ref[l, h]) + bq_ref[l, h]                 # (M, Dh)
            k = _dot(x, wk_ref[l, h]) + bk_ref[l, h]                 # (M, Dh)
            v = _dot(x, wv_ref[l, h]) + bv_ref[l, h]                 # (M, Dh)
            s = jax.lax.dot_general(q, k, (((1,), (1,)), ((), ())),
                                    preferred_element_type=jnp.float32) * scale + bias
            s = s - jnp.max(s, axis=-1, keepdims=True)
            p = jnp.exp(s)
            p = p / jnp.sum(p, axis=-1, keepdims=True)               # exact softmax
            ctx = _dot(p, v)                                         # (M, Dh)
            # fold this head's slice of the output projection -> no concat / lane relayout
            attn = attn + _dot(ctx, wo_ref[l, h])                    # (M, H)
        attn = attn + bo_ref[l]
        x1 = _ln(x + attn, ln1_g_ref[l], ln1_b_ref[l], eps)

        # -------- FFN + residual + LN --------
        ff = _gelu(_dot(x1, ff1_w_ref[l]) + ff1_b_ref[l])
        ff = _dot(ff, ff2_w_ref[l]) + ff2_b_ref[l]
        x = _ln(x1 + ff, ln2_g_ref[l], ln2_b_ref[l], eps)

    # -------- merged CWS+POS classifier head (padded to 128 lane-dense output) --------
    o_ref[...] = (_dot(x, head_w_ref[...]) + head_b_ref[...]).astype(o_ref.dtype)


def fused_bert_forward(emb, attn_bias, params):
    """emb: [M=B*T, H] embedding sums; attn_bias: [M, M] additive mask -> [M, HEAD_PAD] logits."""
    M, H = emb.shape
    head_w = jnp.pad(params["head_w"], ((0, 0), (0, HEAD_PAD - NUM_LABELS)))
    head_b = jnp.pad(params["head_b"], ((0, HEAD_PAD - NUM_LABELS),)).reshape(1, HEAD_PAD)
    args = (
        emb, attn_bias,
        params["emb_ln_g"].reshape(1, H), params["emb_ln_b"].reshape(1, H),
        params["wq"], params["bq"], params["wk"], params["bk"],
        params["wv"], params["bv"], params["wo"], params["bo"],
        params["ln1_g"], params["ln1_b"],
        params["ff1_w"], params["ff1_b"], params["ff2_w"], params["ff2_b"],
        params["ln2_g"], params["ln2_b"],
        head_w, head_b,
    )
    # Single no-grid invocation: every array (weights ~40 KB, activations <4 KB)
    # is placed whole in VMEM; one custom-call dispatch for the entire encoder.
    return pl.pallas_call(
        functools.partial(_fused_bert_kernel, num_layers=NUM_LAYERS,
                          num_heads=NUM_HEADS, eps=LN_EPS,
                          scale=1.0 / math.sqrt(HEAD_DIM)),
        out_shape=jax.ShapeDtypeStruct((M, HEAD_PAD), jnp.float32),
    )(*args)


# ----------------------------- CRF Viterbi decode (JAX glue) -----------------------------
def crf_viterbi_decode(emissions, mask, start_trans, end_trans, trans):
    """Viterbi decode (torchcrf semantics, batch_first=True). Returns padded [B, T] tags.

    # TODO(synk): torchcrf.decode returns variable-length Python lists (unmasked prefix
    # only); here we return a padded [B, T] int array.  The tiny DP stays in JAX
    # (lax.scan), not a Pallas kernel.
    """
    B, T, L = emissions.shape
    mask = mask.astype(jnp.int32)

    def fwd_body(score, inputs):
        emit_t, mask_t = inputs  # [B, L], [B]
        nxt = score[:, :, None] + trans[None, :, :] + emit_t[:, None, :]  # [B, L, L]
        best_prev = jnp.argmax(nxt, axis=1).astype(jnp.int32)             # [B, L]
        nxt = jnp.max(nxt, axis=1)                                        # [B, L]
        score = jnp.where(mask_t[:, None] > 0, nxt, score)
        return score, best_prev

    score0 = start_trans[None, :] + emissions[:, 0]
    em_rest = jnp.swapaxes(emissions[:, 1:], 0, 1)   # [T-1, B, L]
    mk_rest = jnp.swapaxes(mask[:, 1:], 0, 1)        # [T-1, B]
    score, history = jax.lax.scan(fwd_body, score0, (em_rest, mk_rest))
    score = score + end_trans[None, :]
    last_tag = jnp.argmax(score, axis=-1).astype(jnp.int32)  # [B]

    def back_body(state, inputs):
        bp_t, mask_t = inputs
        prev = jnp.take_along_axis(bp_t, state[:, None], axis=1)[:, 0]
        state = jnp.where(mask_t > 0, prev, state)
        return state, state

    _, tags_rev = jax.lax.scan(back_body, last_tag, (history[::-1], mk_rest[::-1]))
    path = jnp.concatenate([tags_rev[::-1], last_tag[None]], axis=0)  # [T, B]
    return path.T


# ----------------------------- forward -----------------------------
def bert_multi_tagger_forward(params, input_ids, token_type_ids, attention_mask):
    B, T = input_ids.shape
    M = B * T

    # BertModel embedding gathers (glue); LN happens inside the fused kernel.
    emb = (params["word_emb"][input_ids]
           + params["pos_emb"][jnp.arange(T)][None, :, :]
           + params["type_emb"][token_type_ids]).reshape(M, HIDDEN)

    # Block-diagonal (batch separation) + key-padding additive attention bias, [M, M].
    batch_ids = jnp.arange(M) // T
    same_batch = batch_ids[:, None] == batch_ids[None, :]
    key_valid = (attention_mask.reshape(M) > 0)[None, :]
    attn_bias = jnp.where(same_batch & key_valid, 0.0, -1e4).astype(jnp.float32)

    # NOTE: the BERT pooler output is unused by the tagger heads -> not computed.
    # Dropout is identity at inference time.
    logits = fused_bert_forward(emb, attn_bias, params)               # [M, 128]
    cws_logits = logits[:, :CWS_LABELS].reshape(B, T, CWS_LABELS)
    pos_logits = logits[:, CWS_LABELS:NUM_LABELS].reshape(B, T, POS_LABELS)

    cws_pred = crf_viterbi_decode(cws_logits, attention_mask, *params["cws_crf"])
    pos_pred = crf_viterbi_decode(pos_logits, attention_mask, *params["pos_crf"])
    return cws_pred, pos_pred


# ----------------------------- deterministic parameter init -----------------------------
def init_params(key):
    ks = iter(jax.random.split(key, 64))
    nrm = lambda shape, s=0.02: (s * jax.random.normal(next(ks), shape)).astype(jnp.float32)
    L, NH, H, Dh, I = NUM_LAYERS, NUM_HEADS, HIDDEN, HEAD_DIM, INTERMEDIATE

    params = dict(
        word_emb=nrm((VOCAB, H)),
        pos_emb=nrm((MAX_POS, H)),
        type_emb=nrm((TYPE_VOCAB, H)),
        emb_ln_g=jnp.ones((H,), jnp.float32),
        emb_ln_b=jnp.zeros((H,), jnp.float32),
        # Stacked per-layer encoder weights, pre-split per attention head.
        wq=nrm((L, NH, H, Dh)), bq=jnp.zeros((L, NH, 1, Dh), jnp.float32),
        wk=nrm((L, NH, H, Dh)), bk=jnp.zeros((L, NH, 1, Dh), jnp.float32),
        wv=nrm((L, NH, H, Dh)), bv=jnp.zeros((L, NH, 1, Dh), jnp.float32),
        wo=nrm((L, NH, Dh, H)), bo=jnp.zeros((L, 1, H), jnp.float32),
        ln1_g=jnp.ones((L, 1, H), jnp.float32), ln1_b=jnp.zeros((L, 1, H), jnp.float32),
        ff1_w=nrm((L, H, I)), ff1_b=jnp.zeros((L, 1, I), jnp.float32),
        ff2_w=nrm((L, I, H)), ff2_b=jnp.zeros((L, 1, H), jnp.float32),
        ln2_g=jnp.ones((L, 1, H), jnp.float32), ln2_b=jnp.zeros((L, 1, H), jnp.float32),
        # Merged CWS+POS classifier head.
        head_w=nrm((H, NUM_LABELS)),
        head_b=jnp.zeros((NUM_LABELS,), jnp.float32),
        # CRF params: (start_transitions, end_transitions, transitions)
        cws_crf=(nrm((CWS_LABELS,), 0.1), nrm((CWS_LABELS,), 0.1),
                 nrm((CWS_LABELS, CWS_LABELS), 0.1)),
        pos_crf=(nrm((POS_LABELS,), 0.1), nrm((POS_LABELS,), 0.1),
                 nrm((POS_LABELS, POS_LABELS), 0.1)),
    )
    return params


# ----------------------------- main -----------------------------
if __name__ == "__main__":
    key = jax.random.PRNGKey(0)
    pkey, ikey = jax.random.split(key)
    params = init_params(pkey)

    B, T = 2, 8
    input_ids = jax.random.randint(ikey, (B, T), 0, VOCAB, dtype=jnp.int32)
    token_type_ids = jnp.zeros((B, T), jnp.int32)
    attention_mask = jnp.ones((B, T), jnp.int32)

    forward = jax.jit(bert_multi_tagger_forward)
    cws_pred, pos_pred = forward(params, input_ids, token_type_ids, attention_mask)
    jax.block_until_ready((cws_pred, pos_pred))

    assert cws_pred.shape == (B, T) and pos_pred.shape == (B, T)
    print("KERNEL_OK")
</pallas_src>

<mosaic_0001>
module attributes {stable_mosaic.version = 11 : i64} {
  func.func @_fused_bert_kernel(%arg0: memref<16x32xf32, #tpu.memory_space<vmem>>, %arg1: memref<16x16xf32, #tpu.memory_space<vmem>>, %arg2: memref<1x32xf32, #tpu.memory_space<vmem>>, %arg3: memref<1x32xf32, #tpu.memory_space<vmem>>, %arg4: memref<2x2x32x16xf32, #tpu.memory_space<vmem>>, %arg5: memref<2x2x1x16xf32, #tpu.memory_space<vmem>>, %arg6: memref<2x2x32x16xf32, #tpu.memory_space<vmem>>, %arg7: memref<2x2x1x16xf32, #tpu.memory_space<vmem>>, %arg8: memref<2x2x32x16xf32, #tpu.memory_space<vmem>>, %arg9: memref<2x2x1x16xf32, #tpu.memory_space<vmem>>, %arg10: memref<2x2x16x32xf32, #tpu.memory_space<vmem>>, %arg11: memref<2x1x32xf32, #tpu.memory_space<vmem>>, %arg12: memref<2x1x32xf32, #tpu.memory_space<vmem>>, %arg13: memref<2x1x32xf32, #tpu.memory_space<vmem>>, %arg14: memref<2x32x64xf32, #tpu.memory_space<vmem>>, %arg15: memref<2x1x64xf32, #tpu.memory_space<vmem>>, %arg16: memref<2x64x32xf32, #tpu.memory_space<vmem>>, %arg17: memref<2x1x32xf32, #tpu.memory_space<vmem>>, %arg18: memref<2x1x32xf32, #tpu.memory_space<vmem>>, %arg19: memref<2x1x32xf32, #tpu.memory_space<vmem>>, %arg20: memref<32x128xf32, #tpu.memory_space<vmem>>, %arg21: memref<1x128xf32, #tpu.memory_space<vmem>>, %arg22: memref<16x128xf32, #tpu.memory_space<vmem>>) attributes {dimension_semantics = [], scalar_prefetch = 0 : i64, scratch_operands = 0 : i64, tpu.core_type = #tpu.core_type<tc>} {
    %c0 = arith.constant 0 : index
    %c0_0 = arith.constant 0 : index
    %0 = vector.load %arg1[%c0, %c0_0] : memref<16x16xf32, #tpu.memory_space<vmem>>, vector<16x16xf32>
    %c0_1 = arith.constant 0 : index
    %c0_2 = arith.constant 0 : index
    %1 = vector.load %arg0[%c0_1, %c0_2] : memref<16x32xf32, #tpu.memory_space<vmem>>, vector<16x32xf32>
    %c0_3 = arith.constant 0 : index
    %c0_4 = arith.constant 0 : index
    %2 = vector.load %arg2[%c0_3, %c0_4] : memref<1x32xf32, #tpu.memory_space<vmem>>, vector<1x32xf32>
    %c0_5 = arith.constant 0 : index
    %c0_6 = arith.constant 0 : index
    %3 = vector.load %arg3[%c0_5, %c0_6] : memref<1x32xf32, #tpu.memory_space<vmem>>, vector<1x32xf32>
    %cst = arith.constant dense<0.000000e+00> : vector<16xf32>
    %4 = vector.multi_reduction <add>, %1, %cst [1] : vector<16x32xf32> to vector<16xf32>
    %5 = vector.shape_cast %4 : vector<16xf32> to vector<16x1xf32>
    %cst_7 = arith.constant 3.200000e+01 : f32
    %6 = vector.broadcast %cst_7 : f32 to vector<16x1xf32>
    %7 = arith.divf %5, %6 : vector<16x1xf32>
    %8 = vector.broadcast %7 : vector<16x1xf32> to vector<16x32xf32>
    %9 = arith.subf %1, %8 : vector<16x32xf32>
    %10 = arith.mulf %9, %9 : vector<16x32xf32>
    %cst_8 = arith.constant dense<0.000000e+00> : vector<16xf32>
    %11 = vector.multi_reduction <add>, %10, %cst_8 [1] : vector<16x32xf32> to vector<16xf32>
    %12 = vector.shape_cast %11 : vector<16xf32> to vector<16x1xf32>
    %cst_9 = arith.constant 3.200000e+01 : f32
    %13 = vector.broadcast %cst_9 : f32 to vector<16x1xf32>
    %14 = arith.divf %12, %13 : vector<16x1xf32>
    %cst_10 = arith.constant 9.99999996E-13 : f32
    %15 = vector.broadcast %cst_10 : f32 to vector<16x1xf32>
    %16 = arith.addf %14, %15 : vector<16x1xf32>
    %17 = math.rsqrt %16 : vector<16x1xf32>
    %18 = vector.broadcast %17 : vector<16x1xf32> to vector<16x32xf32>
    %19 = arith.mulf %9, %18 : vector<16x32xf32>
    %20 = vector.broadcast %2 : vector<1x32xf32> to vector<16x32xf32>
    %21 = arith.mulf %19, %20 : vector<16x32xf32>
    %22 = vector.broadcast %3 : vector<1x32xf32> to vector<16x32xf32>
    %23 = arith.addf %21, %22 : vector<16x32xf32>
    %cst_11 = arith.constant 0.000000e+00 : f32
    %24 = vector.broadcast %cst_11 : f32 to vector<16x32xf32>
    %c0_12 = arith.constant 0 : index
    %c0_13 = arith.constant 0 : index
    %c0_14 = arith.constant 0 : index
    %c0_15 = arith.constant 0 : index
    %25 = vector.load %arg4[%c0_12, %c0_13, %c0_14, %c0_15] : memref<2x2x32x16xf32, #tpu.memory_space<vmem>>, vector<1x1x32x16xf32>
    %26 = vector.shape_cast %25 : vector<1x1x32x16xf32> to vector<32x16xf32>
    %cst_16 = arith.constant dense<0.000000e+00> : vector<16x16xf32>
    %27 = tpu.matmul %23, %26, %cst_16 {dimension_numbers = #tpu.dot_dimension_numbers<[1], [0], [0], [1], [0, 0, 1, 1], [], []>} : vector<16x32xf32>, vector<32x16xf32>, vector<16x16xf32> -> vector<16x16xf32>
    %c0_17 = arith.constant 0 : index
    %c0_18 = arith.constant 0 : index
    %c0_19 = arith.constant 0 : index
    %c0_20 = arith.constant 0 : index
    %28 = vector.load %arg5[%c0_17, %c0_18, %c0_19, %c0_20] : memref<2x2x1x16xf32, #tpu.memory_space<vmem>>, vector<1x1x1x16xf32>
    %29 = vector.shape_cast %28 : vector<1x1x1x16xf32> to vector<1x16xf32>
    %30 = vector.broadcast %29 : vector<1x16xf32> to vector<16x16xf32>
    %31 = arith.addf %27, %30 : vector<16x16xf32>
    %c0_21 = arith.constant 0 : index
    %c0_22 = arith.constant 0 : index
    %c0_23 = arith.constant 0 : index
    %c0_24 = arith.constant 0 : index
    %32 = vector.load %arg6[%c0_21, %c0_22, %c0_23, %c0_24] : memref<2x2x32x16xf32, #tpu.memory_space<vmem>>, vector<1x1x32x16xf32>
    %33 = vector.shape_cast %32 : vector<1x1x32x16xf32> to vector<32x16xf32>
    %cst_25 = arith.constant dense<0.000000e+00> : vector<16x16xf32>
    %34 = tpu.matmul %23, %33, %cst_25 {dimension_numbers = #tpu.dot_dimension_numbers<[1], [0], [0], [1], [0, 0, 1, 1], [], []>} : vector<16x32xf32>, vector<32x16xf32>, vector<16x16xf32> -> vector<16x16xf32>
    %c0_26 = arith.constant 0 : index
    %c0_27 = arith.constant 0 : index
    %c0_28 = arith.constant 0 : index
    %c0_29 = arith.constant 0 : index
    %35 = vector.load %arg7[%c0_26, %c0_27, %c0_28, %c0_29] : memref<2x2x1x16xf32, #tpu.memory_space<vmem>>, vector<1x1x1x16xf32>
    %36 = vector.shape_cast %35 : vector<1x1x1x16xf32> to vector<1x16xf32>
    %37 = vector.broadcast %36 : vector<1x16xf32> to vector<16x16xf32>
    %38 = arith.addf %34, %37 : vector<16x16xf32>
    %c0_30 = arith.constant 0 : index
    %c0_31 = arith.constant 0 : index
    %c0_32 = arith.constant 0 : index
    %c0_33 = arith.constant 0 : index
    %39 = vector.load %arg8[%c0_30, %c0_31, %c0_32, %c0_33] : memref<2x2x32x16xf32, #tpu.memory_space<vmem>>, vector<1x1x32x16xf32>
    %40 = vector.shape_cast %39 : vector<1x1x32x16xf32> to vector<32x16xf32>
    %cst_34 = arith.constant dense<0.000000e+00> : vector<16x16xf32>
    %41 = tpu.matmul %23, %40, %cst_34 {dimension_numbers = #tpu.dot_dimension_numbers<[1], [0], [0], [1], [0, 0, 1, 1], [], []>} : vector<16x32xf32>, vector<32x16xf32>, vector<16x16xf32> -> vector<16x16xf32>
    %c0_35 = arith.constant 0 : index
    %c0_36 = arith.constant 0 : index
    %c0_37 = arith.constant 0 : index
    %c0_38 = arith.constant 0 : index
    %42 = vector.load %arg9[%c0_35, %c0_36, %c0_37, %c0_38] : memref<2x2x1x16xf32, #tpu.memory_space<vmem>>, vector<1x1x1x16xf32>
    %43 = vector.shape_cast %42 : vector<1x1x1x16xf32> to vector<1x16xf32>
    %44 = vector.broadcast %43 : vector<1x16xf32> to vector<16x16xf32>
    %45 = arith.addf %41, %44 : vector<16x16xf32>
    %cst_39 = arith.constant dense<0.000000e+00> : vector<16x16xf32>
    %46 = tpu.matmul %31, %38, %cst_39 {dimension_numbers = #tpu.dot_dimension_numbers<[1], [1], [0], [0], [0, 0, 1, 0], [], []>} : vector<16x16xf32>, vector<16x16xf32>, vector<16x16xf32> -> vector<16x16xf32>
    %cst_40 = arith.constant 2.500000e-01 : f32
    %47 = vector.broadcast %cst_40 : f32 to vector<16x16xf32>
    %48 = arith.mulf %46, %47 : vector<16x16xf32>
    %49 = arith.addf %48, %0 : vector<16x16xf32>
    %cst_41 = arith.constant dense<0xFF800000> : vector<16xf32>
    %50 = vector.multi_reduction <maximumf>, %49, %cst_41 [1] : vector<16x16xf32> to vector<16xf32>
    %51 = vector.shape_cast %50 : vector<16xf32> to vector<16x1xf32>
    %52 = vector.broadcast %51 : vector<16x1xf32> to vector<16x16xf32>
    %53 = arith.subf %49, %52 : vector<16x16xf32>
    %54 = math.exp %53 : vector<16x16xf32>
    %cst_42 = arith.constant dense<0.000000e+00> : vector<16xf32>
    %55 = vector.multi_reduction <add>, %54, %cst_42 [1] : vector<16x16xf32> to vector<16xf32>
    %56 = vector.shape_cast %55 : vector<16xf32> to vector<16x1xf32>
    %57 = vector.broadcast %56 : vector<16x1xf32> to vector<16x16xf32>
    %58 = arith.divf %54, %57 : vector<16x16xf32>
    %cst_43 = arith.constant dense<0.000000e+00> : vector<16x16xf32>
    %59 = tpu.matmul %58, %45, %cst_43 {dimension_numbers = #tpu.dot_dimension_numbers<[1], [0], [0], [1], [0, 0, 1, 1], [], []>} : vector<16x16xf32>, vector<16x16xf32>, vector<16x16xf32> -> vector<16x16xf32>
    %c0_44 = arith.constant 0 : index
    %c0_45 = arith.constant 0 : index
    %c0_46 = arith.constant 0 : index
    %c0_47 = arith.constant 0 : index
    %60 = vector.load %arg10[%c0_44, %c0_45, %c0_46, %c0_47] : memref<2x2x16x32xf32, #tpu.memory_space<vmem>>, vector<1x1x16x32xf32>
    %61 = vector.shape_cast %60 : vector<1x1x16x32xf32> to vector<16x32xf32>
    %cst_48 = arith.constant dense<0.000000e+00> : vector<16x32xf32>
    %62 = tpu.matmul %59, %61, %cst_48 {dimension_numbers = #tpu.dot_dimension_numbers<[1], [0], [0], [1], [0, 0, 1, 1], [], []>} : vector<16x16xf32>, vector<16x32xf32>, vector<16x32xf32> -> vector<16x32xf32>
    %63 = arith.addf %24, %62 : vector<16x32xf32>
    %c0_49 = arith.constant 0 : index
    %c1 = arith.constant 1 : index
    %c0_50 = arith.constant 0 : index
    %c0_51 = arith.constant 0 : index
    %64 = vector.load %arg4[%c0_49, %c1, %c0_50, %c0_51] : memref<2x2x32x16xf32, #tpu.memory_space<vmem>>, vector<1x1x32x16xf32>
    %65 = vector.shape_cast %64 : vector<1x1x32x16xf32> to vector<32x16xf32>
    %cst_52 = arith.constant dense<0.000000e+00> : vector<16x16xf32>
    %66 = tpu.matmul %23, %65, %cst_52 {dimension_numbers = #tpu.dot_dimension_numbers<[1], [0], [0], [1], [0, 0, 1, 1], [], []>} : vector<16x32xf32>, vector<32x16xf32>, vector<16x16xf32> -> vector<16x16xf32>
    %c0_53 = arith.constant 0 : index
    %c1_54 = arith.constant 1 : index
    %c0_55 = arith.constant 0 : index
    %c0_56 = arith.constant 0 : index
    %67 = vector.load %arg5[%c0_53, %c1_54, %c0_55, %c0_56] : memref<2x2x1x16xf32, #tpu.memory_space<vmem>>, vector<1x1x1x16xf32>
    %68 = vector.shape_cast %67 : vector<1x1x1x16xf32> to vector<1x16xf32>
    %69 = vector.broadcast %68 : vector<1x16xf32> to vector<16x16xf32>
    %70 = arith.addf %66, %69 : vector<16x16xf32>
    %c0_57 = arith.constant 0 : index
    %c1_58 = arith.constant 1 : index
    %c0_59 = arith.constant 0 : index
    %c0_60 = arith.constant 0 : index
    %71 = vector.load %arg6[%c0_57, %c1_58, %c0_59, %c0_60] : memref<2x2x32x16xf32, #tpu.memory_space<vmem>>, vector<1x1x32x16xf32>
    %72 = vector.shape_cast %71 : vector<1x1x32x16xf32> to vector<32x16xf32>
    %cst_61 = arith.constant dense<0.000000e+00> : vector<16x16xf32>
    %73 = tpu.matmul %23, %72, %cst_61 {dimension_numbers = #tpu.dot_dimension_numbers<[1], [0], [0], [1], [0, 0, 1, 1], [], []>} : vector<16x32xf32>, vector<32x16xf32>, vector<16x16xf32> -> vector<16x16xf32>
    %c0_62 = arith.constant 0 : index
    %c1_63 = arith.constant 1 : index
    %c0_64 = arith.constant 0 : index
    %c0_65 = arith.constant 0 : index
    %74 = vector.load %arg7[%c0_62, %c1_63, %c0_64, %c0_65] : memref<2x2x1x16xf32, #tpu.memory_space<vmem>>, vector<1x1x1x16xf32>
    %75 = vector.shape_cast %74 : vector<1x1x1x16xf32> to vector<1x16xf32>
    %76 = vector.broadcast %75 : vector<1x16xf32> to vector<16x16xf32>
    %77 = arith.addf %73, %76 : vector<16x16xf32>
    %c0_66 = arith.constant 0 : index
    %c1_67 = arith.constant 1 : index
    %c0_68 = arith.constant 0 : index
    %c0_69 = arith.constant 0 : index
    %78 = vector.load %arg8[%c0_66, %c1_67, %c0_68, %c0_69] : memref<2x2x32x16xf32, #tpu.memory_space<vmem>>, vector<1x1x32x16xf32>
    %79 = vector.shape_cast %78 : vector<1x1x32x16xf32> to vector<32x16xf32>
    %cst_70 = arith.constant dense<0.000000e+00> : vector<16x16xf32>
    %80 = tpu.matmul %23, %79, %cst_70 {dimension_numbers = #tpu.dot_dimension_numbers<[1], [0], [0], [1], [0, 0, 1, 1], [], []>} : vector<16x32xf32>, vector<32x16xf32>, vector<16x16xf32> -> vector<16x16xf32>
    %c0_71 = arith.constant 0 : index
    %c1_72 = arith.constant 1 : index
    %c0_73 = arith.constant 0 : index
    %c0_74 = arith.constant 0 : index
    %81 = vector.load %arg9[%c0_71, %c1_72, %c0_73, %c0_74] : memref<2x2x1x16xf32, #tpu.memory_space<vmem>>, vector<1x1x1x16xf32>
    %82 = vector.shape_cast %81 : vector<1x1x1x16xf32> to vector<1x16xf32>
    %83 = vector.broadcast %82 : vector<1x16xf32> to vector<16x16xf32>
    %84 = arith.addf %80, %83 : vector<16x16xf32>
    %cst_75 = arith.constant dense<0.000000e+00> : vector<16x16xf32>
    %85 = tpu.matmul %70, %77, %cst_75 {dimension_numbers = #tpu.dot_dimension_numbers<[1], [1], [0], [0], [0, 0, 1, 0], [], []>} : vector<16x16xf32>, vector<16x16xf32>, vector<16x16xf32> -> vector<16x16xf32>
    %cst_76 = arith.constant 2.500000e-01 : f32
    %86 = vector.broadcast %cst_76 : f32 to vector<16x16xf32>
    %87 = arith.mulf %85, %86 : vector<16x16xf32>
    %88 = arith.addf %87, %0 : vector<16x16xf32>
    %cst_77 = arith.constant dense<0xFF800000> : vector<16xf32>
    %89 = vector.multi_reduction <maximumf>, %88, %cst_77 [1] : vector<16x16xf32> to vector<16xf32>
    %90 = vector.shape_cast %89 : vector<16xf32> to vector<16x1xf32>
    %91 = vector.broadcast %90 : vector<16x1xf32> to vector<16x16xf32>
    %92 = arith.subf %88, %91 : vector<16x16xf32>
    %93 = math.exp %92 : vector<16x16xf32>
    %cst_78 = arith.constant dense<0.000000e+00> : vector<16xf32>
    %94 = vector.multi_reduction <add>, %93, %cst_78 [1] : vector<16x16xf32> to vector<16xf32>
    %95 = vector.shape_cast %94 : vector<16xf32> to vector<16x1xf32>
    %96 = vector.broadcast %95 : vector<16x1xf32> to vector<16x16xf32>
    %97 = arith.divf %93, %96 : vector<16x16xf32>
    %cst_79 = arith.constant dense<0.000000e+00> : vector<16x16xf32>
    %98 = tpu.matmul %97, %84, %cst_79 {dimension_numbers = #tpu.dot_dimension_numbers<[1], [0], [0], [1], [0, 0, 1, 1], [], []>} : vector<16x16xf32>, vector<16x16xf32>, vector<16x16xf32> -> vector<16x16xf32>
    %c0_80 = arith.constant 0 : index
    %c1_81 = arith.constant 1 : index
    %c0_82 = arith.constant 0 : index
    %c0_83 = arith.constant 0 : index
    %99 = vector.load %arg10[%c0_80, %c1_81, %c0_82, %c0_83] : memref<2x2x16x32xf32, #tpu.memory_space<vmem>>, vector<1x1x16x32xf32>
    %100 = vector.shape_cast %99 : vector<1x1x16x32xf32> to vector<16x32xf32>
    %cst_84 = arith.constant dense<0.000000e+00> : vector<16x32xf32>
    %101 = tpu.matmul %98, %100, %cst_84 {dimension_numbers = #tpu.dot_dimension_numbers<[1], [0], [0], [1], [0, 0, 1, 1], [], []>} : vector<16x16xf32>, vector<16x32xf32>, vector<16x32xf32> -> vector<16x32xf32>
    %102 = arith.addf %63, %101 : vector<16x32xf32>
    %c0_85 = arith.constant 0 : index
    %c0_86 = arith.constant 0 : index
    %c0_87 = arith.constant 0 : index
    %103 = vector.load %arg11[%c0_85, %c0_86, %c0_87] : memref<2x1x32xf32, #tpu.memory_space<vmem>>, vector<1x1x32xf32>
    %104 = vector.shape_cast %103 : vector<1x1x32xf32> to vector<1x32xf32>
    %105 = vector.broadcast %104 : vector<1x32xf32> to vector<16x32xf32>
    %106 = arith.addf %102, %105 : vector<16x32xf32>
    %107 = arith.addf %23, %106 : vector<16x32xf32>
    %c0_88 = arith.constant 0 : index
    %c0_89 = arith.constant 0 : index
    %c0_90 = arith.constant 0 : index
    %108 = vector.load %arg12[%c0_88, %c0_89, %c0_90] : memref<2x1x32xf32, #tpu.memory_space<vmem>>, vector<1x1x32xf32>
    %109 = vector.shape_cast %108 : vector<1x1x32xf32> to vector<1x32xf32>
    %c0_91 = arith.constant 0 : index
    %c0_92 = arith.constant 0 : index
    %c0_93 = arith.constant 0 : index
    %110 = vector.load %arg13[%c0_91, %c0_92, %c0_93] : memref<2x1x32xf32, #tpu.memory_space<vmem>>, vector<1x1x32xf32>
    %111 = vector.shape_cast %110 : vector<1x1x32xf32> to vector<1x32xf32>
    %cst_94 = arith.constant dense<0.000000e+00> : vector<16xf32>
    %112 = vector.multi_reduction <add>, %107, %cst_94 [1] : vector<16x32xf32> to vector<16xf32>
    %113 = vector.shape_cast %112 : vector<16xf32> to vector<16x1xf32>
    %cst_95 = arith.constant 3.200000e+01 : f32
    %114 = vector.broadcast %cst_95 : f32 to vector<16x1xf32>
    %115 = arith.divf %113, %114 : vector<16x1xf32>
    %116 = vector.broadcast %115 : vector<16x1xf32> to vector<16x32xf32>
    %117 = arith.subf %107, %116 : vector<16x32xf32>
    %118 = arith.mulf %117, %117 : vector<16x32xf32>
    %cst_96 = arith.constant dense<0.000000e+00> : vector<16xf32>
    %119 = vector.multi_reduction <add>, %118, %cst_96 [1] : vector<16x32xf32> to vector<16xf32>
    %120 = vector.shape_cast %119 : vector<16xf32> to vector<16x1xf32>
    %cst_97 = arith.constant 3.200000e+01 : f32
    %121 = vector.broadcast %cst_97 : f32 to vector<16x1xf32>
    %122 = arith.divf %120, %121 : vector<16x1xf32>
    %cst_98 = arith.constant 9.99999996E-13 : f32
    %123 = vector.broadcast %cst_98 : f32 to vector<16x1xf32>
    %124 = arith.addf %122, %123 : vector<16x1xf32>
    %125 = math.rsqrt %124 : vector<16x1xf32>
    %126 = vector.broadcast %125 : vector<16x1xf32> to vector<16x32xf32>
    %127 = arith.mulf %117, %126 : vector<16x32xf32>
    %128 = vector.broadcast %109 : vector<1x32xf32> to vector<16x32xf32>
    %129 = arith.mulf %127, %128 : vector<16x32xf32>
    %130 = vector.broadcast %111 : vector<1x32xf32> to vector<16x32xf32>
    %131 = arith.addf %129, %130 : vector<16x32xf32>
    %c0_99 = arith.constant 0 : index
    %c0_100 = arith.constant 0 : index
    %c0_101 = arith.constant 0 : index
    %132 = vector.load %arg14[%c0_99, %c0_100, %c0_101] : memref<2x32x64xf32, #tpu.memory_space<vmem>>, vector<1x32x64xf32>
    %133 = vector.shape_cast %132 : vector<1x32x64xf32> to vector<32x64xf32>
    %cst_102 = arith.constant dense<0.000000e+00> : vector<16x64xf32>
    %134 = tpu.matmul %131, %133, %cst_102 {dimension_numbers = #tpu.dot_dimension_numbers<[1], [0], [0], [1], [0, 0, 1, 1], [], []>} : vector<16x32xf32>, vector<32x64xf32>, vector<16x64xf32> -> vector<16x64xf32>
    %c0_103 = arith.constant 0 : index
    %c0_104 = arith.constant 0 : index
    %c0_105 = arith.constant 0 : index
    %135 = vector.load %arg15[%c0_103, %c0_104, %c0_105] : memref<2x1x64xf32, #tpu.memory_space<vmem>>, vector<1x1x64xf32>
    %136 = vector.shape_cast %135 : vector<1x1x64xf32> to vector<1x64xf32>
    %137 = vector.broadcast %136 : vector<1x64xf32> to vector<16x64xf32>
    %138 = arith.addf %134, %137 : vector<16x64xf32>
    %cst_106 = arith.constant 5.000000e-01 : f32
    %139 = vector.broadcast %cst_106 : f32 to vector<16x64xf32>
    %140 = arith.mulf %139, %138 : vector<16x64xf32>
    %cst_107 = arith.constant 4.471500e-02 : f32
    %141 = vector.broadcast %cst_107 : f32 to vector<16x64xf32>
    %142 = arith.mulf %141, %138 : vector<16x64xf32>
    %143 = arith.mulf %142, %138 : vector<16x64xf32>
    %144 = arith.mulf %143, %138 : vector<16x64xf32>
    %145 = arith.addf %138, %144 : vector<16x64xf32>
    %cst_108 = arith.constant 0.797884583 : f32
    %146 = vector.broadcast %cst_108 : f32 to vector<16x64xf32>
    %147 = arith.mulf %146, %145 : vector<16x64xf32>
    %148 = math.tanh %147 : vector<16x64xf32>
    %cst_109 = arith.constant 1.000000e+00 : f32
    %149 = vector.broadcast %cst_109 : f32 to vector<16x64xf32>
    %150 = arith.addf %149, %148 : vector<16x64xf32>
    %151 = arith.mulf %140, %150 : vector<16x64xf32>
    %c0_110 = arith.constant 0 : index
    %c0_111 = arith.constant 0 : index
    %c0_112 = arith.constant 0 : index
    %152 = vector.load %arg16[%c0_110, %c0_111, %c0_112] : memref<2x64x32xf32, #tpu.memory_space<vmem>>, vector<1x64x32xf32>
    %153 = vector.shape_cast %152 : vector<1x64x32xf32> to vector<64x32xf32>
    %cst_113 = arith.constant dense<0.000000e+00> : vector<16x32xf32>
    %154 = tpu.matmul %151, %153, %cst_113 {dimension_numbers = #tpu.dot_dimension_numbers<[1], [0], [0], [1], [0, 0, 1, 1], [], []>} : vector<16x64xf32>, vector<64x32xf32>, vector<16x32xf32> -> vector<16x32xf32>
    %c0_114 = arith.constant 0 : index
    %c0_115 = arith.constant 0 : index
    %c0_116 = arith.constant 0 : index
    %155 = vector.load %arg17[%c0_114, %c0_115, %c0_116] : memref<2x1x32xf32, #tpu.memory_space<vmem>>, vector<1x1x32xf32>
    %156 = vector.shape_cast %155 : vector<1x1x32xf32> to vector<1x32xf32>
    %157 = vector.broadcast %156 : vector<1x32xf32> to vector<16x32xf32>
    %158 = arith.addf %154, %157 : vector<16x32xf32>
    %159 = arith.addf %131, %158 : vector<16x32xf32>
    %c0_117 = arith.constant 0 : index
    %c0_118 = arith.constant 0 : index
    %c0_119 = arith.constant 0 : index
    %160 = vector.load %arg18[%c0_117, %c0_118, %c0_119] : memref<2x1x32xf32, #tpu.memory_space<vmem>>, vector<1x1x32xf32>
    %161 = vector.shape_cast %160 : vector<1x1x32xf32> to vector<1x32xf32>
    %c0_120 = arith.constant 0 : index
    %c0_121 = arith.constant 0 : index
    %c0_122 = arith.constant 0 : index
    %162 = vector.load %arg19[%c0_120, %c0_121, %c0_122] : memref<2x1x32xf32, #tpu.memory_space<vmem>>, vector<1x1x32xf32>
    %163 = vector.shape_cast %162 : vector<1x1x32xf32> to vector<1x32xf32>
    %cst_123 = arith.constant dense<0.000000e+00> : vector<16xf32>
    %164 = vector.multi_reduction <add>, %159, %cst_123 [1] : vector<16x32xf32> to vector<16xf32>
    %165 = vector.shape_cast %164 : vector<16xf32> to vector<16x1xf32>
    %cst_124 = arith.constant 3.200000e+01 : f32
    %166 = vector.broadcast %cst_124 : f32 to vector<16x1xf32>
    %167 = arith.divf %165, %166 : vector<16x1xf32>
    %168 = vector.broadcast %167 : vector<16x1xf32> to vector<16x32xf32>
    %169 = arith.subf %159, %168 : vector<16x32xf32>
    %170 = arith.mulf %169, %169 : vector<16x32xf32>
    %cst_125 = arith.constant dense<0.000000e+00> : vector<16xf32>
    %171 = vector.multi_reduction <add>, %170, %cst_125 [1] : vector<16x32xf32> to vector<16xf32>
    %172 = vector.shape_cast %171 : vector<16xf32> to vector<16x1xf32>
    %cst_126 = arith.constant 3.200000e+01 : f32
    %173 = vector.broadcast %cst_126 : f32 to vector<16x1xf32>
    %174 = arith.divf %172, %173 : vector<16x1xf32>
    %cst_127 = arith.constant 9.99999996E-13 : f32
    %175 = vector.broadcast %cst_127 : f32 to vector<16x1xf32>
    %176 = arith.addf %174, %175 : vector<16x1xf32>
    %177 = math.rsqrt %176 : vector<16x1xf32>
    %178 = vector.broadcast %177 : vector<16x1xf32> to vector<16x32xf32>
    %179 = arith.mulf %169, %178 : vector<16x32xf32>
    %180 = vector.broadcast %161 : vector<1x32xf32> to vector<16x32xf32>
    %181 = arith.mulf %179, %180 : vector<16x32xf32>
    %182 = vector.broadcast %163 : vector<1x32xf32> to vector<16x32xf32>
    %183 = arith.addf %181, %182 : vector<16x32xf32>
    %cst_128 = arith.constant 0.000000e+00 : f32
    %184 = vector.broadcast %cst_128 : f32 to vector<16x32xf32>
    %c1_129 = arith.constant 1 : index
    %c0_130 = arith.constant 0 : index
    %c0_131 = arith.constant 0 : index
    %c0_132 = arith.constant 0 : index
    %185 = vector.load %arg4[%c1_129, %c0_130, %c0_131, %c0_132] : memref<2x2x32x16xf32, #tpu.memory_space<vmem>>, vector<1x1x32x16xf32>
    %186 = vector.shape_cast %185 : vector<1x1x32x16xf32> to vector<32x16xf32>
    %cst_133 = arith.constant dense<0.000000e+00> : vector<16x16xf32>
    %187 = tpu.matmul %183, %186, %cst_133 {dimension_numbers = #tpu.dot_dimension_numbers<[1], [0], [0], [1], [0, 0, 1, 1], [], []>} : vector<16x32xf32>, vector<32x16xf32>, vector<16x16xf32> -> vector<16x16xf32>
    %c1_134 = arith.constant 1 : index
    %c0_135 = arith.constant 0 : index
    %c0_136 = arith.constant 0 : index
    %c0_137 = arith.constant 0 : index
    %188 = vector.load %arg5[%c1_134, %c0_135, %c0_136, %c0_137] : memref<2x2x1x16xf32, #tpu.memory_space<vmem>>, vector<1x1x1x16xf32>
    %189 = vector.shape_cast %188 : vector<1x1x1x16xf32> to vector<1x16xf32>
    %190 = vector.broadcast %189 : vector<1x16xf32> to vector<16x16xf32>
    %191 = arith.addf %187, %190 : vector<16x16xf32>
    %c1_138 = arith.constant 1 : index
    %c0_139 = arith.constant 0 : index
    %c0_140 = arith.constant 0 : index
    %c0_141 = arith.constant 0 : index
    %192 = vector.load %arg6[%c1_138, %c0_139, %c0_140, %c0_141] : memref<2x2x32x16xf32, #tpu.memory_space<vmem>>, vector<1x1x32x16xf32>
    %193 = vector.shape_cast %192 : vector<1x1x32x16xf32> to vector<32x16xf32>
    %cst_142 = arith.constant dense<0.000000e+00> : vector<16x16xf32>
    %194 = tpu.matmul %183, %193, %cst_142 {dimension_numbers = #tpu.dot_dimension_numbers<[1], [0], [0], [1], [0, 0, 1, 1], [], []>} : vector<16x32xf32>, vector<32x16xf32>, vector<16x16xf32> -> vector<16x16xf32>
    %c1_143 = arith.constant 1 : index
    %c0_144 = arith.constant 0 : index
    %c0_145 = arith.constant 0 : index
    %c0_146 = arith.constant 0 : index
    %195 = vector.load %arg7[%c1_143, %c0_144, %c0_145, %c0_146] : memref<2x2x1x16xf32, #tpu.memory_space<vmem>>, vector<1x1x1x16xf32>
    %196 = vector.shape_cast %195 : vector<1x1x1x16xf32> to vector<1x16xf32>
    %197 = vector.broadcast %196 : vector<1x16xf32> to vector<16x16xf32>
    %198 = arith.addf %194, %197 : vector<16x16xf32>
    %c1_147 = arith.constant 1 : index
    %c0_148 = arith.constant 0 : index
    %c0_149 = arith.constant 0 : index
    %c0_150 = arith.constant 0 : index
    %199 = vector.load %arg8[%c1_147, %c0_148, %c0_149, %c0_150] : memref<2x2x32x16xf32, #tpu.memory_space<vmem>>, vector<1x1x32x16xf32>
    %200 = vector.shape_cast %199 : vector<1x1x32x16xf32> to vector<32x16xf32>
    %cst_151 = arith.constant dense<0.000000e+00> : vector<16x16xf32>
    %201 = tpu.matmul %183, %200, %cst_151 {dimension_numbers = #tpu.dot_dimension_numbers<[1], [0], [0], [1], [0, 0, 1, 1], [], []>} : vector<16x32xf32>, vector<32x16xf32>, vector<16x16xf32> -> vector<16x16xf32>
    %c1_152 = arith.constant 1 : index
    %c0_153 = arith.constant 0 : index
    %c0_154 = arith.constant 0 : index
    %c0_155 = arith.constant 0 : index
    %202 = vector.load %arg9[%c1_152, %c0_153, %c0_154, %c0_155] : memref<2x2x1x16xf32, #tpu.memory_space<vmem>>, vector<1x1x1x16xf32>
    %203 = vector.shape_cast %202 : vector<1x1x1x16xf32> to vector<1x16xf32>
    %204 = vector.broadcast %203 : vector<1x16xf32> to vector<16x16xf32>
    %205 = arith.addf %201, %204 : vector<16x16xf32>
    %cst_156 = arith.constant dense<0.000000e+00> : vector<16x16xf32>
    %206 = tpu.matmul %191, %198, %cst_156 {dimension_numbers = #tpu.dot_dimension_numbers<[1], [1], [0], [0], [0, 0, 1, 0], [], []>} : vector<16x16xf32>, vector<16x16xf32>, vector<16x16xf32> -> vector<16x16xf32>
    %cst_157 = arith.constant 2.500000e-01 : f32
    %207 = vector.broadcast %cst_157 : f32 to vector<16x16xf32>
    %208 = arith.mulf %206, %207 : vector<16x16xf32>
    %209 = arith.addf %208, %0 : vector<16x16xf32>
    %cst_158 = arith.constant dense<0xFF800000> : vector<16xf32>
    %210 = vector.multi_reduction <maximumf>, %209, %cst_158 [1] : vector<16x16xf32> to vector<16xf32>
    %211 = vector.shape_cast %210 : vector<16xf32> to vector<16x1xf32>
    %212 = vector.broadcast %211 : vector<16x1xf32> to vector<16x16xf32>
    %213 = arith.subf %209, %212 : vector<16x16xf32>
    %214 = math.exp %213 : vector<16x16xf32>
    %cst_159 = arith.constant dense<0.000000e+00> : vector<16xf32>
    %215 = vector.multi_reduction <add>, %214, %cst_159 [1] : vector<16x16xf32> to vector<16xf32>
    %216 = vector.shape_cast %215 : vector<16xf32> to vector<16x1xf32>
    %217 = vector.broadcast %216 : vector<16x1xf32> to vector<16x16xf32>
    %218 = arith.divf %214, %217 : vector<16x16xf32>
    %cst_160 = arith.constant dense<0.000000e+00> : vector<16x16xf32>
    %219 = tpu.matmul %218, %205, %cst_160 {dimension_numbers = #tpu.dot_dimension_numbers<[1], [0], [0], [1], [0, 0, 1, 1], [], []>} : vector<16x16xf32>, vector<16x16xf32>, vector<16x16xf32> -> vector<16x16xf32>
    %c1_161 = arith.constant 1 : index
    %c0_162 = arith.constant 0 : index
    %c0_163 = arith.constant 0 : index
    %c0_164 = arith.constant 0 : index
    %220 = vector.load %arg10[%c1_161, %c0_162, %c0_163, %c0_164] : memref<2x2x16x32xf32, #tpu.memory_space<vmem>>, vector<1x1x16x32xf32>
    %221 = vector.shape_cast %220 : vector<1x1x16x32xf32> to vector<16x32xf32>
    %cst_165 = arith.constant dense<0.000000e+00> : vector<16x32xf32>
    %222 = tpu.matmul %219, %221, %cst_165 {dimension_numbers = #tpu.dot_dimension_numbers<[1], [0], [0], [1], [0, 0, 1, 1], [], []>} : vector<16x16xf32>, vector<16x32xf32>, vector<16x32xf32> -> vector<16x32xf32>
    %223 = arith.addf %184, %222 : vector<16x32xf32>
    %c1_166 = arith.constant 1 : index
    %c1_167 = arith.constant 1 : index
    %c0_168 = arith.constant 0 : index
    %c0_169 = arith.constant 0 : index
    %224 = vector.load %arg4[%c1_166, %c1_167, %c0_168, %c0_169] : memref<2x2x32x16xf32, #tpu.memory_space<vmem>>, vector<1x1x32x16xf32>
    %225 = vector.shape_cast %224 : vector<1x1x32x16xf32> to vector<32x16xf32>
    %cst_170 = arith.constant dense<0.000000e+00> : vector<16x16xf32>
    %226 = tpu.matmul %183, %225, %cst_170 {dimension_numbers = #tpu.dot_dimension_numbers<[1], [0], [0], [1], [0, 0, 1, 1], [], []>} : vector<16x32xf32>, vector<32x16xf32>, vector<16x16xf32> -> vector<16x16xf32>
    %c1_171 = arith.constant 1 : index
    %c1_172 = arith.constant 1 : index
    %c0_173 = arith.constant 0 : index
    %c0_174 = arith.constant 0 : index
    %227 = vector.load %arg5[%c1_171, %c1_172, %c0_173, %c0_174] : memref<2x2x1x16xf32, #tpu.memory_space<vmem>>, vector<1x1x1x16xf32>
    %228 = vector.shape_cast %227 : vector<1x1x1x16xf32> to vector<1x16xf32>
    %229 = vector.broadcast %228 : vector<1x16xf32> to vector<16x16xf32>
    %230 = arith.addf %226, %229 : vector<16x16xf32>
    %c1_175 = arith.constant 1 : index
    %c1_176 = arith.constant 1 : index
    %c0_177 = arith.constant 0 : index
    %c0_178 = arith.constant 0 : index
    %231 = vector.load %arg6[%c1_175, %c1_176, %c0_177, %c0_178] : memref<2x2x32x16xf32, #tpu.memory_space<vmem>>, vector<1x1x32x16xf32>
    %232 = vector.shape_cast %231 : vector<1x1x32x16xf32> to vector<32x16xf32>
    %cst_179 = arith.constant dense<0.000000e+00> : vector<16x16xf32>
    %233 = tpu.matmul %183, %232, %cst_179 {dimension_numbers = #tpu.dot_dimension_numbers<[1], [0], [0], [1], [0, 0, 1, 1], [], []>} : vector<16x32xf32>, vector<32x16xf32>, vector<16x16xf32> -> vector<16x16xf32>
    %c1_180 = arith.constant 1 : index
    %c1_181 = arith.constant 1 : index
    %c0_182 = arith.constant 0 : index
    %c0_183 = arith.constant 0 : index
    %234 = vector.load %arg7[%c1_180, %c1_181, %c0_182, %c0_183] : memref<2x2x1x16xf32, #tpu.memory_space<vmem>>, vector<1x1x1x16xf32>
    %235 = vector.shape_cast %234 : vector<1x1x1x16xf32> to vector<1x16xf32>
    %236 = vector.broadcast %235 : vector<1x16xf32> to vector<16x16xf32>
    %237 = arith.addf %233, %236 : vector<16x16xf32>
    %c1_184 = arith.constant 1 : index
    %c1_185 = arith.constant 1 : index
    %c0_186 = arith.constant 0 : index
    %c0_187 = arith.constant 0 : index
    %238 = vector.load %arg8[%c1_184, %c1_185, %c0_186, %c0_187] : memref<2x2x32x16xf32, #tpu.memory_space<vmem>>, vector<1x1x32x16xf32>
    %239 = vector.shape_cast %238 : vector<1x1x32x16xf32> to vector<32x16xf32>
    %cst_188 = arith.constant dense<0.000000e+00> : vector<16x16xf32>
    %240 = tpu.matmul %183, %239, %cst_188 {dimension_numbers = #tpu.dot_dimension_numbers<[1], [0], [0], [1], [0, 0, 1, 1], [], []>} : vector<16x32xf32>, vector<32x16xf32>, vector<16x16xf32> -> vector<16x16xf32>
    %c1_189 = arith.constant 1 : index
    %c1_190 = arith.constant 1 : index
    %c0_191 = arith.constant 0 : index
    %c0_192 = arith.constant 0 : index
    %241 = vector.load %arg9[%c1_189, %c1_190, %c0_191, %c0_192] : memref<2x2x1x16xf32, #tpu.memory_space<vmem>>, vector<1x1x1x16xf32>
    %242 = vector.shape_cast %241 : vector<1x1x1x16xf32> to vector<1x16xf32>
    %243 = vector.broadcast %242 : vector<1x16xf32> to vector<16x16xf32>
    %244 = arith.addf %240, %243 : vector<16x16xf32>
    %cst_193 = arith.constant dense<0.000000e+00> : vector<16x16xf32>
    %245 = tpu.matmul %230, %237, %cst_193 {dimension_numbers = #tpu.dot_dimension_numbers<[1], [1], [0], [0], [0, 0, 1, 0], [], []>} : vector<16x16xf32>, vector<16x16xf32>, vector<16x16xf32> -> vector<16x16xf32>
    %cst_194 = arith.constant 2.500000e-01 : f32
    %246 = vector.broadcast %cst_194 : f32 to vector<16x16xf32>
    %247 = arith.mulf %245, %246 : vector<16x16xf32>
    %248 = arith.addf %247, %0 : vector<16x16xf32>
    %cst_195 = arith.constant dense<0xFF800000> : vector<16xf32>
    %249 = vector.multi_reduction <maximumf>, %248, %cst_195 [1] : vector<16x16xf32> to vector<16xf32>
    %250 = vector.shape_cast %249 : vector<16xf32> to vector<16x1xf32>
    %251 = vector.broadcast %250 : vector<16x1xf32> to vector<16x16xf32>
    %252 = arith.subf %248, %251 : vector<16x16xf32>
    %253 = math.exp %252 : vector<16x16xf32>
    %cst_196 = arith.constant dense<0.000000e+00> : vector<16xf32>
    %254 = vector.multi_reduction <add>, %253, %cst_196 [1] : vector<16x16xf32> to vector<16xf32>
    %255 = vector.shape_cast %254 : vector<16xf32> to vector<16x1xf32>
    %256 = vector.broadcast %255 : vector<16x1xf32> to vector<16x16xf32>
    %257 = arith.divf %253, %256 : vector<16x16xf32>
    %cst_197 = arith.constant dense<0.000000e+00> : vector<16x16xf32>
    %258 = tpu.matmul %257, %244, %cst_197 {dimension_numbers = #tpu.dot_dimension_numbers<[1], [0], [0], [1], [0, 0, 1, 1], [], []>} : vector<16x16xf32>, vector<16x16xf32>, vector<16x16xf32> -> vector<16x16xf32>
    %c1_198 = arith.constant 1 : index
    %c1_199 = arith.constant 1 : index
    %c0_200 = arith.constant 0 : index
    %c0_201 = arith.constant 0 : index
    %259 = vector.load %arg10[%c1_198, %c1_199, %c0_200, %c0_201] : memref<2x2x16x32xf32, #tpu.memory_space<vmem>>, vector<1x1x16x32xf32>
    %260 = vector.shape_cast %259 : vector<1x1x16x32xf32> to vector<16x32xf32>
    %cst_202 = arith.constant dense<0.000000e+00> : vector<16x32xf32>
    %261 = tpu.matmul %258, %260, %cst_202 {dimension_numbers = #tpu.dot_dimension_numbers<[1], [0], [0], [1], [0, 0, 1, 1], [], []>} : vector<16x16xf32>, vector<16x32xf32>, vector<16x32xf32> -> vector<16x32xf32>
    %262 = arith.addf %223, %261 : vector<16x32xf32>
    %c1_203 = arith.constant 1 : index
    %c0_204 = arith.constant 0 : index
    %c0_205 = arith.constant 0 : index
    %263 = vector.load %arg11[%c1_203, %c0_204, %c0_205] : memref<2x1x32xf32, #tpu.memory_space<vmem>>, vector<1x1x32xf32>
    %264 = vector.shape_cast %263 : vector<1x1x32xf32> to vector<1x32xf32>
    %265 = vector.broadcast %264 : vector<1x32xf32> to vector<16x32xf32>
    %266 = arith.addf %262, %265 : vector<16x32xf32>
    %267 = arith.addf %183, %266 : vector<16x32xf32>
    %c1_206 = arith.constant 1 : index
    %c0_207 = arith.constant 0 : index
    %c0_208 = arith.constant 0 : index
    %268 = vector.load %arg12[%c1_206, %c0_207, %c0_208] : memref<2x1x32xf32, #tpu.memory_space<vmem>>, vector<1x1x32xf32>
    %269 = vector.shape_cast %268 : vector<1x1x32xf32> to vector<1x32xf32>
    %c1_209 = arith.constant 1 : index
    %c0_210 = arith.constant 0 : index
    %c0_211 = arith.constant 0 : index
    %270 = vector.load %arg13[%c1_209, %c0_210, %c0_211] : memref<2x1x32xf32, #tpu.memory_space<vmem>>, vector<1x1x32xf32>
    %271 = vector.shape_cast %270 : vector<1x1x32xf32> to vector<1x32xf32>
    %cst_212 = arith.constant dense<0.000000e+00> : vector<16xf32>
    %272 = vector.multi_reduction <add>, %267, %cst_212 [1] : vector<16x32xf32> to vector<16xf32>
    %273 = vector.shape_cast %272 : vector<16xf32> to vector<16x1xf32>
    %cst_213 = arith.constant 3.200000e+01 : f32
    %274 = vector.broadcast %cst_213 : f32 to vector<16x1xf32>
    %275 = arith.divf %273, %274 : vector<16x1xf32>
    %276 = vector.broadcast %275 : vector<16x1xf32> to vector<16x32xf32>
    %277 = arith.subf %267, %276 : vector<16x32xf32>
    %278 = arith.mulf %277, %277 : vector<16x32xf32>
    %cst_214 = arith.constant dense<0.000000e+00> : vector<16xf32>
    %279 = vector.multi_reduction <add>, %278, %cst_214 [1] : vector<16x32xf32> to vector<16xf32>
    %280 = vector.shape_cast %279 : vector<16xf32> to vector<16x1xf32>
    %cst_215 = arith.constant 3.200000e+01 : f32
    %281 = vector.broadcast %cst_215 : f32 to vector<16x1xf32>
    %282 = arith.divf %280, %281 : vector<16x1xf32>
    %cst_216 = arith.constant 9.99999996E-13 : f32
    %283 = vector.broadcast %cst_216 : f32 to vector<16x1xf32>
    %284 = arith.addf %282, %283 : vector<16x1xf32>
    %285 = math.rsqrt %284 : vector<16x1xf32>
    %286 = vector.broadcast %285 : vector<16x1xf32> to vector<16x32xf32>
    %287 = arith.mulf %277, %286 : vector<16x32xf32>
    %288 = vector.broadcast %269 : vector<1x32xf32> to vector<16x32xf32>
    %289 = arith.mulf %287, %288 : vector<16x32xf32>
    %290 = vector.broadcast %271 : vector<1x32xf32> to vector<16x32xf32>
    %291 = arith.addf %289, %290 : vector<16x32xf32>
    %c1_217 = arith.constant 1 : index
    %c0_218 = arith.constant 0 : index
    %c0_219 = arith.constant 0 : index
    %292 = vector.load %arg14[%c1_217, %c0_218, %c0_219] : memref<2x32x64xf32, #tpu.memory_space<vmem>>, vector<1x32x64xf32>
    %293 = vector.shape_cast %292 : vector<1x32x64xf32> to vector<32x64xf32>
    %cst_220 = arith.constant dense<0.000000e+00> : vector<16x64xf32>
    %294 = tpu.matmul %291, %293, %cst_220 {dimension_numbers = #tpu.dot_dimension_numbers<[1], [0], [0], [1], [0, 0, 1, 1], [], []>} : vector<16x32xf32>, vector<32x64xf32>, vector<16x64xf32> -> vector<16x64xf32>
    %c1_221 = arith.constant 1 : index
    %c0_222 = arith.constant 0 : index
    %c0_223 = arith.constant 0 : index
    %295 = vector.load %arg15[%c1_221, %c0_222, %c0_223] : memref<2x1x64xf32, #tpu.memory_space<vmem>>, vector<1x1x64xf32>
    %296 = vector.shape_cast %295 : vector<1x1x64xf32> to vector<1x64xf32>
    %297 = vector.broadcast %296 : vector<1x64xf32> to vector<16x64xf32>
    %298 = arith.addf %294, %297 : vector<16x64xf32>
    %cst_224 = arith.constant 5.000000e-01 : f32
    %299 = vector.broadcast %cst_224 : f32 to vector<16x64xf32>
    %300 = arith.mulf %299, %298 : vector<16x64xf32>
    %cst_225 = arith.constant 4.471500e-02 : f32
    %301 = vector.broadcast %cst_225 : f32 to vector<16x64xf32>
    %302 = arith.mulf %301, %298 : vector<16x64xf32>
    %303 = arith.mulf %302, %298 : vector<16x64xf32>
    %304 = arith.mulf %303, %298 : vector<16x64xf32>
    %305 = arith.addf %298, %304 : vector<16x64xf32>
    %cst_226 = arith.constant 0.797884583 : f32
    %306 = vector.broadcast %cst_226 : f32 to vector<16x64xf32>
    %307 = arith.mulf %306, %305 : vector<16x64xf32>
    %308 = math.tanh %307 : vector<16x64xf32>
    %cst_227 = arith.constant 1.000000e+00 : f32
    %309 = vector.broadcast %cst_227 : f32 to vector<16x64xf32>
    %310 = arith.addf %309, %308 : vector<16x64xf32>
    %311 = arith.mulf %300, %310 : vector<16x64xf32>
    %c1_228 = arith.constant 1 : index
    %c0_229 = arith.constant 0 : index
    %c0_230 = arith.constant 0 : index
    %312 = vector.load %arg16[%c1_228, %c0_229, %c0_230] : memref<2x64x32xf32, #tpu.memory_space<vmem>>, vector<1x64x32xf32>
    %313 = vector.shape_cast %312 : vector<1x64x32xf32> to vector<64x32xf32>
    %cst_231 = arith.constant dense<0.000000e+00> : vector<16x32xf32>
    %314 = tpu.matmul %311, %313, %cst_231 {dimension_numbers = #tpu.dot_dimension_numbers<[1], [0], [0], [1], [0, 0, 1, 1], [], []>} : vector<16x64xf32>, vector<64x32xf32>, vector<16x32xf32> -> vector<16x32xf32>
    %c1_232 = arith.constant 1 : index
    %c0_233 = arith.constant 0 : index
    %c0_234 = arith.constant 0 : index
    %315 = vector.load %arg17[%c1_232, %c0_233, %c0_234] : memref<2x1x32xf32, #tpu.memory_space<vmem>>, vector<1x1x32xf32>
    %316 = vector.shape_cast %315 : vector<1x1x32xf32> to vector<1x32xf32>
    %317 = vector.broadcast %316 : vector<1x32xf32> to vector<16x32xf32>
    %318 = arith.addf %314, %317 : vector<16x32xf32>
    %319 = arith.addf %291, %318 : vector<16x32xf32>
    %c1_235 = arith.constant 1 : index
    %c0_236 = arith.constant 0 : index
    %c0_237 = arith.constant 0 : index
    %320 = vector.load %arg18[%c1_235, %c0_236, %c0_237] : memref<2x1x32xf32, #tpu.memory_space<vmem>>, vector<1x1x32xf32>
    %321 = vector.shape_cast %320 : vector<1x1x32xf32> to vector<1x32xf32>
    %c1_238 = arith.constant 1 : index
    %c0_239 = arith.constant 0 : index
    %c0_240 = arith.constant 0 : index
    %322 = vector.load %arg19[%c1_238, %c0_239, %c0_240] : memref<2x1x32xf32, #tpu.memory_space<vmem>>, vector<1x1x32xf32>
    %323 = vector.shape_cast %322 : vector<1x1x32xf32> to vector<1x32xf32>
    %cst_241 = arith.constant dense<0.000000e+00> : vector<16xf32>
    %324 = vector.multi_reduction <add>, %319, %cst_241 [1] : vector<16x32xf32> to vector<16xf32>
    %325 = vector.shape_cast %324 : vector<16xf32> to vector<16x1xf32>
    %cst_242 = arith.constant 3.200000e+01 : f32
    %326 = vector.broadcast %cst_242 : f32 to vector<16x1xf32>
    %327 = arith.divf %325, %326 : vector<16x1xf32>
    %328 = vector.broadcast %327 : vector<16x1xf32> to vector<16x32xf32>
    %329 = arith.subf %319, %328 : vector<16x32xf32>
    %330 = arith.mulf %329, %329 : vector<16x32xf32>
    %cst_243 = arith.constant dense<0.000000e+00> : vector<16xf32>
    %331 = vector.multi_reduction <add>, %330, %cst_243 [1] : vector<16x32xf32> to vector<16xf32>
    %332 = vector.shape_cast %331 : vector<16xf32> to vector<16x1xf32>
    %cst_244 = arith.constant 3.200000e+01 : f32
    %333 = vector.broadcast %cst_244 : f32 to vector<16x1xf32>
    %334 = arith.divf %332, %333 : vector<16x1xf32>
    %cst_245 = arith.constant 9.99999996E-13 : f32
    %335 = vector.broadcast %cst_245 : f32 to vector<16x1xf32>
    %336 = arith.addf %334, %335 : vector<16x1xf32>
    %337 = math.rsqrt %336 : vector<16x1xf32>
    %338 = vector.broadcast %337 : vector<16x1xf32> to vector<16x32xf32>
    %339 = arith.mulf %329, %338 : vector<16x32xf32>
    %340 = vector.broadcast %321 : vector<1x32xf32> to vector<16x32xf32>
    %341 = arith.mulf %339, %340 : vector<16x32xf32>
    %342 = vector.broadcast %323 : vector<1x32xf32> to vector<16x32xf32>
    %343 = arith.addf %341, %342 : vector<16x32xf32>
    %c0_246 = arith.constant 0 : index
    %c0_247 = arith.constant 0 : index
    %344 = vector.load %arg20[%c0_246, %c0_247] : memref<32x128xf32, #tpu.memory_space<vmem>>, vector<32x128xf32>
    %cst_248 = arith.constant dense<0.000000e+00> : vector<16x128xf32>
    %345 = tpu.matmul %343, %344, %cst_248 {dimension_numbers = #tpu.dot_dimension_numbers<[1], [0], [0], [1], [0, 0, 1, 1], [], []>} : vector<16x32xf32>, vector<32x128xf32>, vector<16x128xf32> -> vector<16x128xf32>
    %c0_249 = arith.constant 0 : index
    %c0_250 = arith.constant 0 : index
    %346 = vector.load %arg21[%c0_249, %c0_250] : memref<1x128xf32, #tpu.memory_space<vmem>>, vector<1x128xf32>
    %347 = vector.broadcast %346 : vector<1x128xf32> to vector<16x128xf32>
    %348 = arith.addf %345, %347 : vector<16x128xf32>
    %c0_251 = arith.constant 0 : index
    %c0_252 = arith.constant 0 : index
    %349 = vector.load %arg22[%c0_251, %c0_252] : memref<16x128xf32, #tpu.memory_space<vmem>>, vector<16x128xf32>
    tpu.vector_store %arg22[%c0_251, %c0_252], %348 {strides = array<i32>} : memref<16x128xf32, #tpu.memory_space<vmem>>, vector<16x128xf32>,
    return
  }
}

</mosaic_0001>

<llo_original>
// kernel: custom-call.11
$region0: #{custom-call.11}
  %s0 = inlined_call_operand.vmem [shape: s32[7,2,20], index: 0, kind: output, shape index: {}]

// kernel: custom-call.10
$region0: #{custom-call.10}
  %s0 = inlined_call_operand.vmem [shape: s32[7,2,4], index: 0, kind: output, shape index: {}]

// kernel: bert_multi_tagger_forward.1
$region0: #{bert_multi_tagger_forward.1}
  #allocation0 [shape = 'u32[]', space=smem, size = 0x4, offset = 0x4, fixed_abs, tag = 'smem constant byte address 0x4 - core index']
  #allocation1 [shape = 'u32[144,128]{1,0:T(1,128)}', space=vmem, size = 0x12000, scoped, tag = 'internal scratch']
  %s0 = inlined_call_operand.vmem [shape: f32[16,32], index: 0, kind: input, shape index: {}]
  %s1 = inlined_call_operand.vmem [shape: f32[16,16], index: 1, kind: input, shape index: {}]
  %s2 = inlined_call_operand.vmem [shape: f32[1,32], index: 2, kind: input, shape index: {}]
  %s3 = inlined_call_operand.vmem [shape: f32[1,32], index: 3, kind: input, shape index: {}]
  %s4 = inlined_call_operand.vmem [shape: f32[2,2,32,16], index: 4, kind: input, shape index: {}]
  %s5 = inlined_call_operand.vmem [shape: f32[2,2,1,16], index: 5, kind: input, shape index: {}]
  %s6 = inlined_call_operand.vmem [shape: f32[2,2,32,16], index: 6, kind: input, shape index: {}]
  %s7 = inlined_call_operand.vmem [shape: f32[2,2,1,16], index: 7, kind: input, shape index: {}]
  %s8 = inlined_call_operand.vmem [shape: f32[2,2,32,16], index: 8, kind: input, shape index: {}]
  %s9 = inlined_call_operand.vmem [shape: f32[2,2,1,16], index: 9, kind: input, shape index: {}]
  %s10 = inlined_call_operand.vmem [shape: f32[2,2,16,32], index: 10, kind: input, shape index: {}]
  %s11 = inlined_call_operand.vmem [shape: f32[2,1,32], index: 11, kind: input, shape index: {}]
  %s12 = inlined_call_operand.vmem [shape: f32[2,1,32], index: 12, kind: input, shape index: {}]
  %s13 = inlined_call_operand.vmem [shape: f32[2,1,32], index: 13, kind: input, shape index: {}]
  %s14 = inlined_call_operand.vmem [shape: f32[2,32,64], index: 14, kind: input, shape index: {}]
  %s15 = inlined_call_operand.vmem [shape: f32[2,1,64], index: 15, kind: input, shape index: {}]
  %s16 = inlined_call_operand.vmem [shape: f32[2,64,32], index: 16, kind: input, shape index: {}]
  %s17 = inlined_call_operand.vmem [shape: f32[2,1,32], index: 17, kind: input, shape index: {}]
  %s18 = inlined_call_operand.vmem [shape: f32[2,1,32], index: 18, kind: input, shape index: {}]
  %s19 = inlined_call_operand.vmem [shape: f32[2,1,32], index: 19, kind: input, shape index: {}]
  %s20 = inlined_call_operand.vmem [shape: f32[32,128], index: 20, kind: input, shape index: {}]
  %s21 = inlined_call_operand.vmem [shape: f32[1,128], index: 21, kind: input, shape index: {}]
  %s22 = inlined_call_operand.vmem [shape: f32[16,128], index: 22, kind: output, shape index: {}]
  %s23 = sld [smem:[#allocation0]]
  $region98: #{bert_multi_tagger_forward.1} parent=0
    _
  %s25 = ssub.s32 1, %s23
  %s26 = scalar_select 0, %s25, %s23
  // Predicated region
  $region2: #{bert_multi_tagger_forward.1} parent=0 // pred_check
    _
  $region3: #{bert_multi_tagger_forward.1} parent=0 // pred_check_branch
    %28 = sbr.rel (0) target = $region5
  $region4: #{bert_multi_tagger_forward.1} parent=0 // pred_region
    _
  $region5: #{bert_multi_tagger_forward.1} parent=0 // pred_fallthru
    _
  // Predicated region
  $region6: #{bert_multi_tagger_forward.1} parent=0 // pred_check
    _
  $region7: #{bert_multi_tagger_forward.1} parent=0 // pred_check_branch
    %30 = sbr.rel (0) target = $region9
  $region8: #{bert_multi_tagger_forward.1} parent=0 // pred_region
    _
  $region9: #{bert_multi_tagger_forward.1} parent=0 // pred_fallthru
    _
  // Predicated region
  $region10: #{bert_multi_tagger_forward.1} parent=0 // pred_check
    _
  $region11: #{bert_multi_tagger_forward.1} parent=0 // pred_check_branch
    %32 = sbr.rel (0) target = $region13
  $region12: #{bert_multi_tagger_forward.1} parent=0 // pred_region
    _
  $region13: #{bert_multi_tagger_forward.1} parent=0 // pred_fallthru
    _
  // Predicated region
  $region14: #{bert_multi_tagger_forward.1} parent=0 // pred_check
    _
  $region15: #{bert_multi_tagger_forward.1} parent=0 // pred_check_branch
    %34 = sbr.rel (0) target = $region17
  $region16: #{bert_multi_tagger_forward.1} parent=0 // pred_region
    _
  $region17: #{bert_multi_tagger_forward.1} parent=0 // pred_fallthru
    _
  // Predicated region
  $region18: #{bert_multi_tagger_forward.1} parent=0 // pred_check
    _
  $region19: #{bert_multi_tagger_forward.1} parent=0 // pred_check_branch
    %36 = sbr.rel (0) target = $region21
  $region20: #{bert_multi_tagger_forward.1} parent=0 // pred_region
    _
  $region21: #{bert_multi_tagger_forward.1} parent=0 // pred_fallthru
    _
  // Predicated region
  $region22: #{bert_multi_tagger_forward.1} parent=0 // pred_check
    _
  $region23: #{bert_multi_tagger_forward.1} parent=0 // pred_check_branch
    %38 = sbr.rel (0) target = $region25
  $region24: #{bert_multi_tagger_forward.1} parent=0 // pred_region
    _
  $region25: #{bert_multi_tagger_forward.1} parent=0 // pred_fallthru
    _
  // Predicated region
  $region26: #{bert_multi_tagger_forward.1} parent=0 // pred_check
    _
  $region27: #{bert_multi_tagger_forward.1} parent=0 // pred_check_branch
    %40 = sbr.rel (0) target = $region29
  $region28: #{bert_multi_tagger_forward.1} parent=0 // pred_region
    _
  $region29: #{bert_multi_tagger_forward.1} parent=0 // pred_fallthru
    _
  // Predicated region
  $region30: #{bert_multi_tagger_forward.1} parent=0 // pred_check
    _
  $region31: #{bert_multi_tagger_forward.1} parent=0 // pred_check_branch
    %42 = sbr.rel (0) target = $region33
  $region32: #{bert_multi_tagger_forward.1} parent=0 // pred_region
    _
  $region33: #{bert_multi_tagger_forward.1} parent=0 // pred_fallthru
    _
  // Predicated region
  $region34: #{bert_multi_tagger_forward.1} parent=0 // pred_check
    _
  $region35: #{bert_multi_tagger_forward.1} parent=0 // pred_check_branch
    %44 = sbr.rel (0) target = $region37
  $region36: #{bert_multi_tagger_forward.1} parent=0 // pred_region
    _
  $region37: #{bert_multi_tagger_forward.1} parent=0 // pred_fallthru
    _
  // Predicated region
  $region38: #{bert_multi_tagger_forward.1} parent=0 // pred_check
    _
  $region39: #{bert_multi_tagger_forward.1} parent=0 // pred_check_branch
    %46 = sbr.rel (0) target = $region41
  $region40: #{bert_multi_tagger_forward.1} parent=0 // pred_region
    _
  $region41: #{bert_multi_tagger_forward.1} parent=0 // pred_fallthru
    _
  // Predicated region
  $region42: #{bert_multi_tagger_forward.1} parent=0 // pred_check
    _
  $region43: #{bert_multi_tagger_forward.1} parent=0 // pred_check_branch
    %48 = sbr.rel (0) target = $region45
  $region44: #{bert_multi_tagger_forward.1} parent=0 // pred_region
    _
  $region45: #{bert_multi_tagger_forward.1} parent=0 // pred_fallthru
    _
  // Predicated region
  $region46: #{bert_multi_tagger_forward.1} parent=0 // pred_check
    _
  $region47: #{bert_multi_tagger_forward.1} parent=0 // pred_check_branch
    %50 = sbr.rel (0) target = $region49
  $region48: #{bert_multi_tagger_forward.1} parent=0 // pred_region
    _
  $region49: #{bert_multi_tagger_forward.1} parent=0 // pred_fallthru
    _
  // Predicated region
  $region50: #{bert_multi_tagger_forward.1} parent=0 // pred_check
    _
  $region51: #{bert_multi_tagger_forward.1} parent=0 // pred_check_branch
    %52 = sbr.rel (0) target = $region53
  $region52: #{bert_multi_tagger_forward.1} parent=0 // pred_region
    _
  $region53: #{bert_multi_tagger_forward.1} parent=0 // pred_fallthru
    _
  // Predicated region
  $region54: #{bert_multi_tagger_forward.1} parent=0 // pred_check
    _
  $region55: #{bert_multi_tagger_forward.1} parent=0 // pred_check_branch
    %54 = sbr.rel (0) target = $region57
  $region56: #{bert_multi_tagger_forward.1} parent=0 // pred_region
    _
  $region57: #{bert_multi_tagger_forward.1} parent=0 // pred_fallthru
    _
  // Predicated region
  $region58: #{bert_multi_tagger_forward.1} parent=0 // pred_check
    _
  $region59: #{bert_multi_tagger_forward.1} parent=0 // pred_check_branch
    %56 = sbr.rel (0) target = $region61
  $region60: #{bert_multi_tagger_forward.1} parent=0 // pred_region
    _
  $region61: #{bert_multi_tagger_forward.1} parent=0 // pred_fallthru
    _
  // Predicated region
  $region62: #{bert_multi_tagger_forward.1} parent=0 // pred_check
    _
  $region63: #{bert_multi_tagger_forward.1} parent=0 // pred_check_branch
    %58 = sbr.rel (0) target = $region65
  $region64: #{bert_multi_tagger_forward.1} parent=0 // pred_region
    _
  $region65: #{bert_multi_tagger_forward.1} parent=0 // pred_fallthru
    _
  // Predicated region
  $region66: #{bert_multi_tagger_forward.1} parent=0 // pred_check
    _
  $region67: #{bert_multi_tagger_forward.1} parent=0 // pred_check_branch
    %60 = sbr.rel (0) target = $region69
  $region68: #{bert_multi_tagger_forward.1} parent=0 // pred_region
    _
  $region69: #{bert_multi_tagger_forward.1} parent=0 // pred_fallthru
    _
  // Predicated region
  $region70: #{bert_multi_tagger_forward.1} parent=0 // pred_check
    _
  $region71: #{bert_multi_tagger_forward.1} parent=0 // pred_check_branch
    %62 = sbr.rel (0) target = $region73
  $region72: #{bert_multi_tagger_forward.1} parent=0 // pred_region
    _
  $region73: #{bert_multi_tagger_forward.1} parent=0 // pred_fallthru
    _
  // Predicated region
  $region74: #{bert_multi_tagger_forward.1} parent=0 // pred_check
    _
  $region75: #{bert_multi_tagger_forward.1} parent=0 // pred_check_branch
    %64 = sbr.rel (0) target = $region77
  $region76: #{bert_multi_tagger_forward.1} parent=0 // pred_region
    _
  $region77: #{bert_multi_tagger_forward.1} parent=0 // pred_fallthru
    _
  // Predicated region
  $region78: #{bert_multi_tagger_forward.1} parent=0 // pred_check
    _
  $region79: #{bert_multi_tagger_forward.1} parent=0 // pred_check_branch
    %66 = sbr.rel (0) target = $region81
  $region80: #{bert_multi_tagger_forward.1} parent=0 // pred_region
    _
  $region81: #{bert_multi_tagger_forward.1} parent=0 // pred_fallthru
    _
  // Predicated region
  $region82: #{bert_multi_tagger_forward.1} parent=0 // pred_check
    _
  $region83: #{bert_multi_tagger_forward.1} parent=0 // pred_check_branch
    %68 = sbr.rel (0) target = $region85
  $region84: #{bert_multi_tagger_forward.1} parent=0 // pred_region
    _
  $region85: #{bert_multi_tagger_forward.1} parent=0 // pred_fallthru
    _
  // Predicated region
  $region86: #{bert_multi_tagger_forward.1} parent=0 // pred_check
    _
  $region87: #{bert_multi_tagger_forward.1} parent=0 // pred_check_branch
    %70 = sbr.rel (0) target = $region89
  $region88: #{bert_multi_tagger_forward.1} parent=0 // pred_region
    _
  $region89: #{bert_multi_tagger_forward.1} parent=0 // pred_fallthru
    _
  %v71 = vld [vmem:[%s1] sm:$0xff]
  %v72 = vld [vmem:[%s1 + $0x8] sm:$0xff]
  %v73 = vld [vmem:[%s0] sm:$0xff]
  %v74 = vld [vmem:[%s0 + $0x8] sm:$0xff]
  %v75 = vld [vmem:[%s2] sm:$0x1]
  %v76 = vld [vmem:[%s3] sm:$0x1]
  %vm77 = vcmask 261120
  %v78 = vsel %vm77, %v73, 0.0
  %79 = vadd.xlane.f32.xlu0 %v78
  %v80 = vpop.xlane.xlu0 %79
  %v81 = vsel %vm77, %v74, 0.0
  %82 = vadd.xlane.f32.xlu0 %v81
  %v83 = vpop.xlane.xlu0 %82
  %v84 = vrcp.pop 32.0
  %v85 = vmul.f32 %v80, %v84
  %v86 = vmul.f32 %v83, %v84
  %v87 = vsub.f32 %v73, %v85
  %v88 = vsub.f32 %v74, %v86
  %v89 = vmul.f32 %v87, %v87
  %v90 = vmul.f32 %v88, %v88
  %v91 = vsel %vm77, %v89, 0.0
  %92 = vadd.xlane.f32.xlu0 %v91
  %v93 = vpop.xlane.xlu0 %92
  %v94 = vsel %vm77, %v90, 0.0
  %95 = vadd.xlane.f32.xlu0 %v94
  %v96 = vpop.xlane.xlu0 %95
  %v97 = vmul.f32 %v93, %v84
  %v98 = vmul.f32 %v96, %v84
  %v99 = vadd.f32 %v97, 1e-12
  %v100 = vadd.f32 %v98, 1e-12
  %v101 = vrsqrt.pop %v99
  %v102 = vrsqrt.pop %v100
  %v103 = vmul.f32 %v87, %v101
  %v104 = vmul.f32 %v88, %v102
  %v106 = vlaneseq
  %v107 = vshrl.u32 %v106, 7
  %v108 = vsub.s32 0, %v107
  %v109 = vrot.slane %v75, %v108
  %v111 = vmul.f32 %v103, %v109
  %v112 = vmul.f32 %v104, %v109
  %v114 = vlaneseq
  %v115 = vshrl.u32 %v114, 7
  %v116 = vsub.s32 0, %v115
  %v117 = vrot.slane %v76, %v116
  %v119 = vadd.f32 %v111, %v117
  %v120 = vadd.f32 %v112, %v117
  %v121 = vld [vmem:[%s4] sm:$0xff]
  %v122 = vld [vmem:[%s4 + $0x8] sm:$0xff]
  %v123 = vld [vmem:[%s4 + $0x10] sm:$0xff]
  %v124 = vld [vmem:[%s4 + $0x18] sm:$0xff]
  %v125 = vld [vmem:[%s5] sm:$0x1]
  %v127 = vlaneseq
  %v128 = vshrl.u32 %v127, 7
  %v129 = vsub.s32 0, %v128
  %v130 = vrot.slane %v125, %v129
  %v133 = vsel %vm77, %v119, 0
  %v136 = vsel %vm77, %v120, 0
  %138 = vmatprep.subr.mxu0 0.0
  %139 = vmatpush1.msra.mxu0 %v121
  %140 = vmatprep.subr.mxu0 0.0
  %141 = vmatpush1.msra.mxu0 %v122
  %142 = vmatprep.subr.mxu0 0.0
  %143 = vmatpush1.msra.mxu0 %v123
  %144 = vmatprep.subr.mxu0 0.0
  %145 = vmatpush1.msra.mxu0 %v124
  %146 = vmatprep.subr.mxu0 0.0
  %147 = vmatpush1.msra.mxu0 0.0
  %148 = vmatprep.subr.mxu0 0.0
  %149 = vmatpush1.msra.mxu0 0.0
  %150 = vmatprep.subr.mxu0 0.0
  %151 = vmatpush1.msra.mxu0 0.0
  %152 = vmatprep.subr.mxu0 0.0
  %153 = vmatpush1.msra.mxu0 0.0
  %154 = vmatprep.subr.mxu0 0.0
  %155 = vmatpush1.msra.mxu0 0.0
  %156 = vmatprep.subr.mxu0 0.0
  %157 = vmatpush1.msra.mxu0 0.0
  %158 = vmatprep.subr.mxu0 0.0
  %159 = vmatpush1.msra.mxu0 0.0
  %160 = vmatprep.subr.mxu0 0.0
  %161 = vmatpush1.msra.mxu0 0.0
  %162 = vmatprep.subr.mxu0 0.0
  %163 = vmatpush1.msra.mxu0 0.0
  %164 = vmatprep.subr.mxu0 0.0
  %165 = vmatpush1.msra.mxu0 0.0
  %166 = vmatprep.subr.mxu0 0.0
  %167 = vmatpush1.msra.mxu0 0.0
  %168 = vmatprep.subr.mxu0 0.0
  %169 = vmatpush1.msra.mxu0 0.0
  %170 = vmatprep.subr.mxu0 0.0
  %171 = vmatpush1.msra.mxu0 0.0
  %172 = vmatprep.subr.mxu0 0.0
  %173 = vmatpush1.msra.mxu0 0.0
  %174 = vmatprep.subr.mxu0 0.0
  %175 = vmatpush1.msra.mxu0 0.0
  %176 = vmatprep.subr.mxu0 0.0
  %177 = vmatpush1.msra.mxu0 0.0
  %178 = vmatprep.subr.mxu0 0.0
  %179 = vmatpush1.msra.mxu0 0.0
  %180 = vmatprep.subr.mxu0 0.0
  %181 = vmatpush1.msra.mxu0 0.0
  %182 = vmatprep.subr.mxu0 0.0
  %183 = vmatpush1.msra.mxu0 0.0
  %184 = vmatprep.subr.mxu0 0.0
  %185 = vmatpush1.msra.mxu0 0.0
  %186 = vmatprep.subr.mxu0 0.0
  %187 = vmatpush1.msra.mxu0 0.0
  %188 = vmatprep.subr.mxu0 0.0
  %189 = vmatpush1.msra.mxu0 0.0
  %190 = vmatprep.subr.mxu0 0.0
  %191 = vmatpush1.msra.mxu0 0.0
  %192 = vmatprep.subr.mxu0 0.0
  %193 = vmatpush1.msra.mxu0 0.0
  %194 = vmatprep.subr.mxu0 0.0
  %195 = vmatpush1.msra.mxu0 0.0
  %196 = vmatprep.subr.mxu0 0.0
  %197 = vmatpush1.msra.mxu0 0.0
  %198 = vmatprep.subr.mxu0 0.0
  %199 = vmatpush1.msra.mxu0 0.0
  %200 = vmatprep.subr.mxu0 0.0
  %201 = vmatpush1.msra.mxu0 0.0
  %202 = vmatprep.mubr.f32.mxu0 0.0
  %203 = vmatmul.mubr.f32.gmra.mrb[0].mxu0 %v133
  %v204 = vpop.f32.mrb[0].mxu0
  %v205 = vadd.f32 %v130, %v204
  %v206 = vpop.f32.mrb[0].mxu0
  %207 = vmatprep.mubr.f32.mxu0 0.0
  %208 = vmatmul.mubr.f32.gmra.mrb[0].mxu0 %v136
  %v209 = vpop.f32.mrb[0].mxu0
  %v210 = vadd.f32 %v130, %v209
  %v211 = vpop.f32.mrb[0].mxu0
  %212 = vdwg.mxu0
  %v213 = vld [vmem:[%s6] sm:$0xff]
  %v214 = vld [vmem:[%s6 + $0x8] sm:$0xff]
  %v215 = vld [vmem:[%s6 + $0x10] sm:$0xff]
  %v216 = vld [vmem:[%s6 + $0x18] sm:$0xff]
  %v217 = vld [vmem:[%s7] sm:$0x1]
  %v219 = vlaneseq
  %v220 = vshrl.u32 %v219, 7
  %v221 = vsub.s32 0, %v220
  %v222 = vrot.slane %v217, %v221
  %224 = vmatprep.subr.mxu0 0.0
  %225 = vmatpush1.msra.mxu0 %v213
  %226 = vmatprep.subr.mxu0 0.0
  %227 = vmatpush1.msra.mxu0 %v214
  %228 = vmatprep.subr.mxu0 0.0
  %229 = vmatpush1.msra.mxu0 %v215
  %230 = vmatprep.subr.mxu0 0.0
  %231 = vmatpush1.msra.mxu0 %v216
  %232 = vmatprep.subr.mxu0 0.0
  %233 = vmatpush1.msra.mxu0 0.0
  %234 = vmatprep.subr.mxu0 0.0
  %235 = vmatpush1.msra.mxu0 0.0
  %236 = vmatprep.subr.mxu0 0.0
  %237 = vmatpush1.msra.mxu0 0.0
  %238 = vmatprep.subr.mxu0 0.0
  %239 = vmatpush1.msra.mxu0 0.0
  %240 = vmatprep.subr.mxu0 0.0
  %241 = vmatpush1.msra.mxu0 0.0
  %242 = vmatprep.subr.mxu0 0.0
  %243 = vmatpush1.msra.mxu0 0.0
  %244 = vmatprep.subr.mxu0 0.0
  %245 = vmatpush1.msra.mxu0 0.0
  %246 = vmatprep.subr.mxu0 0.0
  %247 = vmatpush1.msra.mxu0 0.0
  %248 = vmatprep.subr.mxu0 0.0
  %249 = vmatpush1.msra.mxu0 0.0
  %250 = vmatprep.subr.mxu0 0.0
  %251 = vmatpush1.msra.mxu0 0.0
  %252 = vmatprep.subr.mxu0 0.0
  %253 = vmatpush1.msra.mxu0 0.0
  %254 = vmatprep.subr.mxu0 0.0
  %255 = vmatpush1.msra.mxu0 0.0
  %256 = vmatprep.subr.mxu0 0.0
  %257 = vmatpush1.msra.mxu0 0.0
  %258 = vmatprep.subr.mxu0 0.0
  %259 = vmatpush1.msra.mxu0 0.0
  %260 = vmatprep.subr.mxu0 0.0
  %261 = vmatpush1.msra.mxu0 0.0
  %262 = vmatprep.subr.mxu0 0.0
  %263 = vmatpush1.msra.mxu0 0.0
  %264 = vmatprep.subr.mxu0 0.0
  %265 = vmatpush1.msra.mxu0 0.0
  %266 = vmatprep.subr.mxu0 0.0
  %267 = vmatpush1.msra.mxu0 0.0
  %268 = vmatprep.subr.mxu0 0.0
  %269 = vmatpush1.msra.mxu0 0.0
  %270 = vmatprep.subr.mxu0 0.0
  %271 = vmatpush1.msra.mxu0 0.0
  %272 = vmatprep.subr.mxu0 0.0
  %273 = vmatpush1.msra.mxu0 0.0
  %274 = vmatprep.subr.mxu0 0.0
  %275 = vmatpush1.msra.mxu0 0.0
  %276 = vmatprep.subr.mxu0 0.0
  %277 = vmatpush1.msra.mxu0 0.0
  %278 = vmatprep.subr.mxu0 0.0
  %279 = vmatpush1.msra.mxu0 0.0
  %280 = vmatprep.subr.mxu0 0.0
  %281 = vmatpush1.msra.mxu0 0.0
  %282 = vmatprep.subr.mxu0 0.0
  %283 = vmatpush1.msra.mxu0 0.0
  %284 = vmatprep.subr.mxu0 0.0
  %285 = vmatpush1.msra.mxu0 0.0
  %286 = vmatprep.subr.mxu0 0.0
  %287 = vmatpush1.msra.mxu0 0.0
  %288 = vmatprep.mubr.f32.mxu0 0.0
  %289 = vmatmul.mubr.f32.gmra.mrb[0].mxu0 %v133
  %v290 = vpop.f32.mrb[0].mxu0
  %v291 = vadd.f32 %v222, %v290
  %v292 = vpop.f32.mrb[0].mxu0
  %293 = vmatprep.mubr.f32.mxu0 0.0
  %294 = vmatmul.mubr.f32.gmra.mrb[0].mxu0 %v136
  %v295 = vpop.f32.mrb[0].mxu0
  %v296 = vadd.f32 %v222, %v295
  %v297 = vpop.f32.mrb[0].mxu0
  %298 = vdwg.mxu0
  %v299 = vld [vmem:[%s8] sm:$0xff]
  %v300 = vld [vmem:[%s8 + $0x8] sm:$0xff]
  %v301 = vld [vmem:[%s8 + $0x10] sm:$0xff]
  %v302 = vld [vmem:[%s8 + $0x18] sm:$0xff]
  %v303 = vld [vmem:[%s9] sm:$0x1]
  %v305 = vlaneseq
  %v306 = vshrl.u32 %v305, 7
  %v307 = vsub.s32 0, %v306
  %v308 = vrot.slane %v303, %v307
  %310 = vmatprep.subr.mxu0 0.0
  %311 = vmatpush1.msra.mxu0 %v299
  %312 = vmatprep.subr.mxu0 0.0
  %313 = vmatpush1.msra.mxu0 %v300
  %314 = vmatprep.subr.mxu0 0.0
  %315 = vmatpush1.msra.mxu0 %v301
  %316 = vmatprep.subr.mxu0 0.0
  %317 = vmatpush1.msra.mxu0 %v302
  %318 = vmatprep.subr.mxu0 0.0
  %319 = vmatpush1.msra.mxu0 0.0
  %320 = vmatprep.subr.mxu0 0.0
  %321 = vmatpush1.msra.mxu0 0.0
  %322 = vmatprep.subr.mxu0 0.0
  %323 = vmatpush1.msra.mxu0 0.0
  %324 = vmatprep.subr.mxu0 0.0
  %325 = vmatpush1.msra.mxu0 0.0
  %326 = vmatprep.subr.mxu0 0.0
  %327 = vmatpush1.msra.mxu0 0.0
  %328 = vmatprep.subr.mxu0 0.0
  %329 = vmatpush1.msra.mxu0 0.0
  %330 = vmatprep.subr.mxu0 0.0
  %331 = vmatpush1.msra.mxu0 0.0
  %332 = vmatprep.subr.mxu0 0.0
  %333 = vmatpush1.msra.mxu0 0.0
  %334 = vmatprep.subr.mxu0 0.0
  %335 = vmatpush1.msra.mxu0 0.0
  %336 = vmatprep.subr.mxu0 0.0
  %337 = vmatpush1.msra.mxu0 0.0
  %338 = vmatprep.subr.mxu0 0.0
  %339 = vmatpush1.msra.mxu0 0.0
  %340 = vmatprep.subr.mxu0 0.0
  %341 = vmatpush1.msra.mxu0 0.0
  %342 = vmatprep.subr.mxu0 0.0
  %343 = vmatpush1.msra.mxu0 0.0
  %344 = vmatprep.subr.mxu0 0.0
  %345 = vmatpush1.msra.mxu0 0.0
  %346 = vmatprep.subr.mxu0 0.0
  %347 = vmatpush1.msra.mxu0 0.0
  %348 = vmatprep.subr.mxu0 0.0
  %349 = vmatpush1.msra.mxu0 0.0
  %350 = vmatprep.subr.mxu0 0.0
  %351 = vmatpush1.msra.mxu0 0.0
  %352 = vmatprep.subr.mxu0 0.0
  %353 = vmatpush1.msra.mxu0 0.0
  %354 = vmatprep.subr.mxu0 0.0
  %355 = vmatpush1.msra.mxu0 0.0
  %356 = vmatprep.subr.mxu0 0.0
  %357 = vmatpush1.msra.mxu0 0.0
  %358 = vmatprep.subr.mxu0 0.0
  %359 = vmatpush1.msra.mxu0 0.0
  %360 = vmatprep.subr.mxu0 0.0
  %361 = vmatpush1.msra.mxu0 0.0
  %362 = vmatprep.subr.mxu0 0.0
  %363 = vmatpush1.msra.mxu0 0.0
  %364 = vmatprep.subr.mxu0 0.0
  %365 = vmatpush1.msra.mxu0 0.0
  %366 = vmatprep.subr.mxu0 0.0
  %367 = vmatpush1.msra.mxu0 0.0
  %368 = vmatprep.subr.mxu0 0.0
  %369 = vmatpush1.msra.mxu0 0.0
  %370 = vmatprep.subr.mxu0 0.0
  %371 = vmatpush1.msra.mxu0 0.0
  %372 = vmatprep.subr.mxu0 0.0
  %373 = vmatpush1.msra.mxu0 0.0
  %374 = vmatprep.mubr.f32.mxu0 0.0
  %375 = vmatmul.mubr.f32.gmra.mrb[0].mxu0 %v133
  %v376 = vpop.f32.mrb[0].mxu0
  %v377 = vadd.f32 %v308, %v376
  %v378 = vpop.f32.mrb[0].mxu0
  %379 = vmatprep.mubr.f32.mxu0 0.0
  %380 = vmatmul.mubr.f32.gmra.mrb[0].mxu0 %v136
  %v381 = vpop.f32.mrb[0].mxu0
  %v382 = vadd.f32 %v308, %v381
  %v383 = vpop.f32.mrb[0].mxu0
  %384 = vdwg.mxu0
  %vm385 = vcmask 130048
  %v387 = vsel %vm385, %v205, 0
  %v390 = vsel %vm385, %v210, 0
  %v393 = vsel %vm385, %v291, 0
  %v396 = vsel %vm385, %v296, 0
  %398 = vmatprep.subr.mxu0 0.0
  %399 = vmatpush1.xpose.msra.mxu0 %v393
  %400 = vmatprep.subr.mxu0 0.0
  %401 = vmatpush1.xpose.msra.mxu0 %v396
  %402 = vmatprep.subr.mxu0 0.0
  %403 = vmatpush1.xpose.msra.mxu0 0.0
  %404 = vmatprep.subr.mxu0 0.0
  %405 = vmatpush1.xpose.msra.mxu0 0.0
  %406 = vmatprep.subr.mxu0 0.0
  %407 = vmatpush1.xpose.msra.mxu0 0.0
  %408 = vmatprep.subr.mxu0 0.0
  %409 = vmatpush1.xpose.msra.mxu0 0.0
  %410 = vmatprep.subr.mxu0 0.0
  %411 = vmatpush1.xpose.msra.mxu0 0.0
  %412 = vmatprep.subr.mxu0 0.0
  %413 = vmatpush1.xpose.msra.mxu0 0.0
  %414 = vmatprep.subr.mxu0 0.0
  %415 = vmatpush1.xpose.msra.mxu0 0.0
  %416 = vmatprep.subr.mxu0 0.0
  %417 = vmatpush1.xpose.msra.mxu0 0.0
  %418 = vmatprep.subr.mxu0 0.0
  %419 = vmatpush1.xpose.msra.mxu0 0.0
  %420 = vmatprep.subr.mxu0 0.0
  %421 = vmatpush1.xpose.msra.mxu0 0.0
  %422 = vmatprep.subr.mxu0 0.0
  %423 = vmatpush1.xpose.msra.mxu0 0.0
  %424 = vmatprep.subr.mxu0 0.0
  %425 = vmatpush1.xpose.msra.mxu0 0.0
  %426 = vmatprep.subr.mxu0 0.0
  %427 = vmatpush1.xpose.msra.mxu0 0.0
  %428 = vmatprep.subr.mxu0 0.0
  %429 = vmatpush1.xpose.msra.mxu0 0.0
  %430 = vmatprep.subr.mxu0 0.0
  %431 = vmatpush1.xpose.msra.mxu0 0.0
  %432 = vmatprep.subr.mxu0 0.0
  %433 = vmatpush1.xpose.msra.mxu0 0.0
  %434 = vmatprep.subr.mxu0 0.0
  %435 = vmatpush1.xpose.msra.mxu0 0.0
  %436 = vmatprep.subr.mxu0 0.0
  %437 = vmatpush1.xpose.msra.mxu0 0.0
  %438 = vmatprep.subr.mxu0 0.0
  %439 = vmatpush1.xpose.msra.mxu0 0.0
  %440 = vmatprep.subr.mxu0 0.0
  %441 = vmatpush1.xpose.msra.mxu0 0.0
  %442 = vmatprep.subr.mxu0 0.0
  %443 = vmatpush1.xpose.msra.mxu0 0.0
  %444 = vmatprep.subr.mxu0 0.0
  %445 = vmatpush1.xpose.msra.mxu0 0.0
  %446 = vmatprep.subr.mxu0 0.0
  %447 = vmatpush1.xpose.msra.mxu0 0.0
  %448 = vmatprep.subr.mxu0 0.0
  %449 = vmatpush1.xpose.msra.mxu0 0.0
  %450 = vmatprep.subr.mxu0 0.0
  %451 = vmatpush1.xpose.msra.mxu0 0.0
  %452 = vmatprep.subr.mxu0 0.0
  %453 = vmatpush1.xpose.msra.mxu0 0.0
  %454 = vmatprep.subr.mxu0 0.0
  %455 = vmatpush1.xpose.msra.mxu0 0.0
  %456 = vmatprep.subr.mxu0 0.0
  %457 = vmatpush1.xpose.msra.mxu0 0.0
  %458 = vmatprep.subr.mxu0 0.0
  %459 = vmatpush1.xpose.msra.mxu0 0.0
  %460 = vmatprep.subr.mxu0 0.0
  %461 = vmatpush1.xpose.msra.mxu0 0.0
  %462 = vmatprep.mubr.f32.mxu0 0.0
  %463 = vmatmul.mubr.f32.gmra.mrb[0].mxu0 %v387
  %v464 = vpop.f32.mrb[0].mxu0
  %v465 = vadd.f32 0.0, %v464
  %v466 = vpop.f32.mrb[0].mxu0
  %467 = vmatprep.mubr.f32.mxu0 0.0
  %468 = vmatmul.mubr.f32.gmra.mrb[0].mxu0 %v390
  %v469 = vpop.f32.mrb[0].mxu0
  %v470 = vadd.f32 0.0, %v469
  %v471 = vpop.f32.mrb[0].mxu0
  %472 = vdwg.mxu0
  %v473 = vmul.f32 %v465, 0.25
  %v474 = vmul.f32 %v470, 0.25
  %v475 = vadd.f32 %v473, %v71
  %v476 = vadd.f32 %v474, %v72
  %v477 = vsel %vm385, %v475, -inf
  %478 = vmax.xlane.f32.xlu0 %v477
  %v479 = vpop.xlane.xlu0 %478
  %v480 = vsel %vm385, %v476, -inf
  %481 = vmax.xlane.f32.xlu0 %v480
  %v482 = vpop.xlane.xlu0 %481
  %v483 = vsub.f32 %v475, %v479
  %v484 = vsub.f32 %v476, %v482
  %v485 = vmul.f32 %v483, 1.442695
  %v486 = vpow.pop %v485
  %v487 = vmul.f32 %v484, 1.442695
  %v488 = vpow.pop %v487
  %v489 = vsel %vm385, %v486, 0.0
  %490 = vadd.xlane.f32.xlu0 %v489
  %v491 = vpop.xlane.xlu0 %490
  %v492 = vsel %vm385, %v488, 0.0
  %493 = vadd.xlane.f32.xlu0 %v492
  %v494 = vpop.xlane.xlu0 %493
  %v495 = vrcp.pop %v491
  %v496 = vmul.f32 %v486, %v495
  %v497 = vrcp.pop %v494
  %v498 = vmul.f32 %v488, %v497
  %v500 = vsel %vm385, %v496, 0
  %v503 = vsel %vm385, %v498, 0
  %505 = vmatprep.subr.mxu0 0.0
  %506 = vmatpush1.msra.mxu0 %v377
  %507 = vmatprep.subr.mxu0 0.0
  %508 = vmatpush1.msra.mxu0 %v382
  %509 = vmatprep.subr.mxu0 0.0
  %510 = vmatpush1.msra.mxu0 0.0
  %511 = vmatprep.subr.mxu0 0.0
  %512 = vmatpush1.msra.mxu0 0.0
  %513 = vmatprep.subr.mxu0 0.0
  %514 = vmatpush1.msra.mxu0 0.0
  %515 = vmatprep.subr.mxu0 0.0
  %516 = vmatpush1.msra.mxu0 0.0
  %517 = vmatprep.subr.mxu0 0.0
  %518 = vmatpush1.msra.mxu0 0.0
  %519 = vmatprep.subr.mxu0 0.0
  %520 = vmatpush1.msra.mxu0 0.0
  %521 = vmatprep.subr.mxu0 0.0
  %522 = vmatpush1.msra.mxu0 0.0
  %523 = vmatprep.subr.mxu0 0.0
  %524 = vmatpush1.msra.mxu0 0.0
  %525 = vmatprep.subr.mxu0 0.0
  %526 = vmatpush1.msra.mxu0 0.0
  %527 = vmatprep.subr.mxu0 0.0
  %528 = vmatpush1.msra.mxu0 0.0
  %529 = vmatprep.subr.mxu0 0.0
  %530 = vmatpush1.msra.mxu0 0.0
  %531 = vmatprep.subr.mxu0 0.0
  %532 = vmatpush1.msra.mxu0 0.0
  %533 = vmatprep.subr.mxu0 0.0
  %534 = vmatpush1.msra.mxu0 0.0
  %535 = vmatprep.subr.mxu0 0.0
  %536 = vmatpush1.msra.mxu0 0.0
  %537 = vmatprep.subr.mxu0 0.0
  %538 = vmatpush1.msra.mxu0 0.0
  %539 = vmatprep.subr.mxu0 0.0
  %540 = vmatpush1.msra.mxu0 0.0
  %541 = vmatprep.subr.mxu0 0.0
  %542 = vmatpush1.msra.mxu0 0.0
  %543 = vmatprep.subr.mxu0 0.0
  %544 = vmatpush1.msra.mxu0 0.0
  %545 = vmatprep.subr.mxu0 0.0
  %546 = vmatpush1.msra.mxu0 0.0
  %547 = vmatprep.subr.mxu0 0.0
  %548 = vmatpush1.msra.mxu0 0.0
  %549 = vmatprep.subr.mxu0 0.0
  %550 = vmatpush1.msra.mxu0 0.0
  %551 = vmatprep.subr.mxu0 0.0
  %552 = vmatpush1.msra.mxu0 0.0
  %553 = vmatprep.subr.mxu0 0.0
  %554 = vmatpush1.msra.mxu0 0.0
  %555 = vmatprep.subr.mxu0 0.0
  %556 = vmatpush1.msra.mxu0 0.0
  %557 = vmatprep.subr.mxu0 0.0
  %558 = vmatpush1.msra.mxu0 0.0
  %559 = vmatprep.subr.mxu0 0.0
  %560 = vmatpush1.msra.mxu0 0.0
  %561 = vmatprep.subr.mxu0 0.0
  %562 = vmatpush1.msra.mxu0 0.0
  %563 = vmatprep.subr.mxu0 0.0
  %564 = vmatpush1.msra.mxu0 0.0
  %565 = vmatprep.subr.mxu0 0.0
  %566 = vmatpush1.msra.mxu0 0.0
  %567 = vmatprep.subr.mxu0 0.0
  %568 = vmatpush1.msra.mxu0 0.0
  %569 = vmatprep.mubr.f32.mxu0 0.0
  %570 = vmatmul.mubr.f32.gmra.mrb[0].mxu0 %v500
  %v571 = vpop.f32.mrb[0].mxu0
  %v572 = vadd.f32 0.0, %v571
  %v573 = vpop.f32.mrb[0].mxu0
  %574 = vmatprep.mubr.f32.mxu0 0.0
  %575 = vmatmul.mubr.f32.gmra.mrb[0].mxu0 %v503
  %v576 = vpop.f32.mrb[0].mxu0
  %v577 = vadd.f32 0.0, %v576
  %v578 = vpop.f32.mrb[0].mxu0
  %579 = vdwg.mxu0
  %v580 = vld [vmem:[%s10] sm:$0xff]
  %v581 = vld [vmem:[%s10 + $0x8] sm:$0xff]
  %s582 = scalar_lea.vmem %s4, 32
  %v583 = vld [vmem:[%s582] sm:$0xff]
  %v584 = vld [vmem:[%s582 + $0x8] sm:$0xff]
  %v585 = vld [vmem:[%s582 + $0x10] sm:$0xff]
  %v586 = vld [vmem:[%s582 + $0x18] sm:$0xff]
  %s587 = scalar_lea.vmem %s5, 1
  %v588 = vld [vmem:[%s587] sm:$0x1]
  %v590 = vlaneseq
  %v591 = vshrl.u32 %v590, 7
  %v592 = vsub.s32 0, %v591
  %v593 = vrot.slane %v588, %v592
  %595 = vmatprep.subr.mxu0 0.0
  %596 = vmatpush1.msra.mxu0 %v583
  %597 = vmatprep.subr.mxu0 0.0
  %598 = vmatpush1.msra.mxu0 %v584
  %599 = vmatprep.subr.mxu0 0.0
  %600 = vmatpush1.msra.mxu0 %v585
  %601 = vmatprep.subr.mxu0 0.0
  %602 = vmatpush1.msra.mxu0 %v586
  %603 = vmatprep.subr.mxu0 0.0
  %604 = vmatpush1.msra.mxu0 0.0
  %605 = vmatprep.subr.mxu0 0.0
  %606 = vmatpush1.msra.mxu0 0.0
  %607 = vmatprep.subr.mxu0 0.0
  %608 = vmatpush1.msra.mxu0 0.0
  %609 = vmatprep.subr.mxu0 0.0
  %610 = vmatpush1.msra.mxu0 0.0
  %611 = vmatprep.subr.mxu0 0.0
  %612 = vmatpush1.msra.mxu0 0.0
  %613 = vmatprep.subr.mxu0 0.0
  %614 = vmatpush1.msra.mxu0 0.0
  %615 = vmatprep.subr.mxu0 0.0
  %616 = vmatpush1.msra.mxu0 0.0
  %617 = vmatprep.subr.mxu0 0.0
  %618 = vmatpush1.msra.mxu0 0.0
  %619 = vmatprep.subr.mxu0 0.0
  %620 = vmatpush1.msra.mxu0 0.0
  %621 = vmatprep.subr.mxu0 0.0
  %622 = vmatpush1.msra.mxu0 0.0
  %623 = vmatprep.subr.mxu0 0.0
  %624 = vmatpush1.msra.mxu0 0.0
  %625 = vmatprep.subr.mxu0 0.0
  %626 = vmatpush1.msra.mxu0 0.0
  %627 = vmatprep.subr.mxu0 0.0
  %628 = vmatpush1.msra.mxu0 0.0
  %629 = vmatprep.subr.mxu0 0.0
  %630 = vmatpush1.msra.mxu0 0.0
  %631 = vmatprep.subr.mxu0 0.0
  %632 = vmatpush1.msra.mxu0 0.0
  %633 = vmatprep.subr.mxu0 0.0
  %634 = vmatpush1.msra.mxu0 0.0
  %635 = vmatprep.subr.mxu0 0.0
  %636 = vmatpush1.msra.mxu0 0.0
  %637 = vmatprep.subr.mxu0 0.0
  %638 = vmatpush1.msra.mxu0 0.0
  %639 = vmatprep.subr.mxu0 0.0
  %640 = vmatpush1.msra.mxu0 0.0
  %641 = vmatprep.subr.mxu0 0.0
  %642 = vmatpush1.msra.mxu0 0.0
  %643 = vmatprep.subr.mxu0 0.0
  %644 = vmatpush1.msra.mxu0 0.0
  %645 = vmatprep.subr.mxu0 0.0
  %646 = vmatpush1.msra.mxu0 0.0
  %647 = vmatprep.subr.mxu0 0.0
  %648 = vmatpush1.msra.mxu0 0.0
  %649 = vmatprep.subr.mxu0 0.0
  %650 = vmatpush1.msra.mxu0 0.0
  %651 = vmatprep.subr.mxu0 0.0
  %652 = vmatpush1.msra.mxu0 0.0
  %653 = vmatprep.subr.mxu0 0.0
  %654 = vmatpush1.msra.mxu0 0.0
  %655 = vmatprep.subr.mxu0 0.0
  %656 = vmatpush1.msra.mxu0 0.0
  %657 = vmatprep.subr.mxu0 0.0
  %658 = vmatpush1.msra.mxu0 0.0
  %659 = vmatprep.mubr.f32.mxu0 0.0
  %660 = vmatmul.mubr.f32.gmra.mrb[0].mxu0 %v133
  %v661 = vpop.f32.mrb[0].mxu0
  %v662 = vadd.f32 %v593, %v661
  %v663 = vpop.f32.mrb[0].mxu0
  %664 = vmatprep.mubr.f32.mxu0 0.0
  %665 = vmatmul.mubr.f32.gmra.mrb[0].mxu0 %v136
  %v666 = vpop.f32.mrb[0].mxu0
  %v667 = vadd.f32 %v593, %v666
  %v668 = vpop.f32.mrb[0].mxu0
  %669 = vdwg.mxu0
  %s670 = scalar_lea.vmem %s6, 32
  %v671 = vld [vmem:[%s670] sm:$0xff]
  %v672 = vld [vmem:[%s670 + $0x8] sm:$0xff]
  %v673 = vld [vmem:[%s670 + $0x10] sm:$0xff]
  %v674 = vld [vmem:[%s670 + $0x18] sm:$0xff]
  %s675 = scalar_lea.vmem %s7, 1
  %v676 = vld [vmem:[%s675] sm:$0x1]
  %v678 = vlaneseq
  %v679 = vshrl.u32 %v678, 7
  %v680 = vsub.s32 0, %v679
  %v681 = vrot.slane %v676, %v680
  %683 = vmatprep.subr.mxu0 0.0
  %684 = vmatpush1.msra.mxu0 %v671
  %685 = vmatprep.subr.mxu0 0.0
  %686 = vmatpush1.msra.mxu0 %v672
  %687 = vmatprep.subr.mxu0 0.0
  %688 = vmatpush1.msra.mxu0 %v673
  %689 = vmatprep.subr.mxu0 0.0
  %690 = vmatpush1.msra.mxu0 %v674
  %691 = vmatprep.subr.mxu0 0.0
  %692 = vmatpush1.msra.mxu0 0.0
  %693 = vmatprep.subr.mxu0 0.0
  %694 = vmatpush1.msra.mxu0 0.0
  %695 = vmatprep.subr.mxu0 0.0
  %696 = vmatpush1.msra.mxu0 0.0
  %697 = vmatprep.subr.mxu0 0.0
  %698 = vmatpush1.msra.mxu0 0.0
  %699 = vmatprep.subr.mxu0 0.0
  %700 = vmatpush1.msra.mxu0 0.0
  %701 = vmatprep.subr.mxu0 0.0
  %702 = vmatpush1.msra.mxu0 0.0
  %703 = vmatprep.subr.mxu0 0.0
  %704 = vmatpush1.msra.mxu0 0.0
  %705 = vmatprep.subr.mxu0 0.0
  %706 = vmatpush1.msra.mxu0 0.0
  %707 = vmatprep.subr.mxu0 0.0
  %708 = vmatpush1.msra.mxu0 0.0
  %709 = vmatprep.subr.mxu0 0.0
  %710 = vmatpush1.msra.mxu0 0.0
  %711 = vmatprep.subr.mxu0 0.0
  %712 = vmatpush1.msra.mxu0 0.0
  %713 = vmatprep.subr.mxu0 0.0
  %714 = vmatpush1.msra.mxu0 0.0
  %715 = vmatprep.subr.mxu0 0.0
  %716 = vmatpush1.msra.mxu0 0.0
  %717 = vmatprep.subr.mxu0 0.0
  %718 = vmatpush1.msra.mxu0 0.0
  %719 = vmatprep.subr.mxu0 0.0
  %720 = vmatpush1.msra.mxu0 0.0
  %721 = vmatprep.subr.mxu0 0.0
  %722 = vmatpush1.msra.mxu0 0.0
  %723 = vmatprep.subr.mxu0 0.0
  %724 = vmatpush1.msra.mxu0 0.0
  %725 = vmatprep.subr.mxu0 0.0
  %726 = vmatpush1.msra.mxu0 0.0
  %727 = vmatprep.subr.mxu0 0.0
  %728 = vmatpush1.msra.mxu0 0.0
  %729 = vmatprep.subr.mxu0 0.0
  %730 = vmatpush1.msra.mxu0 0.0
  %731 = vmatprep.subr.mxu0 0.0
  %732 = vmatpush1.msra.mxu0 0.0
  %733 = vmatprep.subr.mxu0 0.0
  %734 = vmatpush1.msra.mxu0 0.0
  %735 = vmatprep.subr.mxu0 0.0
  %736 = vmatpush1.msra.mxu0 0.0
  %737 = vmatprep.subr.mxu0 0.0
  %738 = vmatpush1.msra.mxu0 0.0
  %739 = vmatprep.subr.mxu0 0.0
  %740 = vmatpush1.msra.mxu0 0.0
  %741 = vmatprep.subr.mxu0 0.0
  %742 = vmatpush1.msra.mxu0 0.0
  %743 = vmatprep.subr.mxu0 0.0
  %744 = vmatpush1.msra.mxu0 0.0
  %745 = vmatprep.subr.mxu0 0.0
  %746 = vmatpush1.msra.mxu0 0.0
  %747 = vmatprep.mubr.f32.mxu0 0.0
  %748 = vmatmul.mubr.f32.gmra.mrb[0].mxu0 %v133
  %v749 = vpop.f32.mrb[0].mxu0
  %v750 = vadd.f32 %v681, %v749
  %v751 = vpop.f32.mrb[0].mxu0
  %752 = vmatprep.mubr.f32.mxu0 0.0
  %753 = vmatmul.mubr.f32.gmra.mrb[0].mxu0 %v136
  %v754 = vpop.f32.mrb[0].mxu0
  %v755 = vadd.f32 %v681, %v754
  %v756 = vpop.f32.mrb[0].mxu0
  %757 = vdwg.mxu0
  %s758 = scalar_lea.vmem %s8, 32
  %v759 = vld [vmem:[%s758] sm:$0xff]
  %v760 = vld [vmem:[%s758 + $0x8] sm:$0xff]
  %v761 = vld [vmem:[%s758 + $0x10] sm:$0xff]
  %v762 = vld [vmem:[%s758 + $0x18] sm:$0xff]
  %s763 = scalar_lea.vmem %s9, 1
  %v764 = vld [vmem:[%s763] sm:$0x1]
  %v766 = vlaneseq
  %v767 = vshrl.u32 %v766, 7
  %v768 = vsub.s32 0, %v767
  %v769 = vrot.slane %v764, %v768
  %771 = vmatprep.subr.mxu0 0.0
  %772 = vmatpush1.msra.mxu0 %v759
  %773 = vmatprep.subr.mxu0 0.0
  %774 = vmatpush1.msra.mxu0 %v760
  %775 = vmatprep.subr.mxu0 0.0
  %776 = vmatpush1.msra.mxu0 %v761
  %777 = vmatprep.subr.mxu0 0.0
  %778 = vmatpush1.msra.mxu0 %v762
  %779 = vmatprep.subr.mxu0 0.0
  %780 = vmatpush1.msra.mxu0 0.0
  %781 = vmatprep.subr.mxu0 0.0
  %782 = vmatpush1.msra.mxu0 0.0
  %783 = vmatprep.subr.mxu0 0.0
  %784 = vmatpush1.msra.mxu0 0.0
  %785 = vmatprep.subr.mxu0 0.0
  %786 = vmatpush1.msra.mxu0 0.0
  %787 = vmatprep.subr.mxu0 0.0
  %788 = vmatpush1.msra.mxu0 0.0
  %789 = vmatprep.subr.mxu0 0.0
  %790 = vmatpush1.msra.mxu0 0.0
  %791 = vmatprep.subr.mxu0 0.0
  %792 = vmatpush1.msra.mxu0 0.0
  %793 = vmatprep.subr.mxu0 0.0
  %794 = vmatpush1.msra.mxu0 0.0
  %795 = vmatprep.subr.mxu0 0.0
  %796 = vmatpush1.msra.mxu0 0.0
  %797 = vmatprep.subr.mxu0 0.0
  %798 = vmatpush1.msra.mxu0 0.0
  %799 = vmatprep.subr.mxu0 0.0
  %800 = vmatpush1.msra.mxu0 0.0
  %801 = vmatprep.subr.mxu0 0.0
  %802 = vmatpush1.msra.mxu0 0.0
  %803 = vmatprep.subr.mxu0 0.0
  %804 = vmatpush1.msra.mxu0 0.0
  %805 = vmatprep.subr.mxu0 0.0
  %806 = vmatpush1.msra.mxu0 0.0
  %807 = vmatprep.subr.mxu0 0.0
  %808 = vmatpush1.msra.mxu0 0.0
  %809 = vmatprep.subr.mxu0 0.0
  %810 = vmatpush1.msra.mxu0 0.0
  %811 = vmatprep.subr.mxu0 0.0
  %812 = vmatpush1.msra.mxu0 0.0
  %813 = vmatprep.subr.mxu0 0.0
  %814 = vmatpush1.msra.mxu0 0.0
  %815 = vmatprep.subr.mxu0 0.0
  %816 = vmatpush1.msra.mxu0 0.0
  %817 = vmatprep.subr.mxu0 0.0
  %818 = vmatpush1.msra.mxu0 0.0
  %819 = vmatprep.subr.mxu0 0.0
  %820 = vmatpush1.msra.mxu0 0.0
  %821 = vmatprep.subr.mxu0 0.0
  %822 = vmatpush1.msra.mxu0 0.0
  %823 = vmatprep.subr.mxu0 0.0
  %824 = vmatpush1.msra.mxu0 0.0
  %825 = vmatprep.subr.mxu0 0.0
  %826 = vmatpush1.msra.mxu0 0.0
  %827 = vmatprep.subr.mxu0 0.0
  %828 = vmatpush1.msra.mxu0 0.0
  %829 = vmatprep.subr.mxu0 0.0
  %830 = vmatpush1.msra.mxu0 0.0
  %831 = vmatprep.subr.mxu0 0.0
  %832 = vmatpush1.msra.mxu0 0.0
  %833 = vmatprep.subr.mxu0 0.0
  %834 = vmatpush1.msra.mxu0 0.0
  %835 = vmatprep.mubr.f32.mxu0 0.0
  %836 = vmatmul.mubr.f32.gmra.mrb[0].mxu0 %v133
  %v837 = vpop.f32.mrb[0].mxu0
  %v838 = vadd.f32 %v769, %v837
  %v839 = vpop.f32.mrb[0].mxu0
  %840 = vmatprep.mubr.f32.mxu0 0.0
  %841 = vmatmul.mubr.f32.gmra.mrb[0].mxu0 %v136
  %v842 = vpop.f32.mrb[0].mxu0
  %v843 = vadd.f32 %v769, %v842
  %v844 = vpop.f32.mrb[0].mxu0
  %845 = vdwg.mxu0
  %v847 = vsel %vm385, %v662, 0
  %v850 = vsel %vm385, %v667, 0
  %v853 = vsel %vm385, %v750, 0
  %v856 = vsel %vm385, %v755, 0
  %858 = vmatprep.subr.mxu0 0.0
  %859 = vmatpush1.xpose.msra.mxu0 %v853
  %860 = vmatprep.subr.mxu0 0.0
  %861 = vmatpush1.xpose.msra.mxu0 %v856
  %862 = vmatprep.subr.mxu0 0.0
  %863 = vmatpush1.xpose.msra.mxu0 0.0
  %864 = vmatprep.subr.mxu0 0.0
  %865 = vmatpush1.xpose.msra.mxu0 0.0
  %866 = vmatprep.subr.mxu0 0.0
  %867 = vmatpush1.xpose.msra.mxu0 0.0
  %868 = vmatprep.subr.mxu0 0.0
  %869 = vmatpush1.xpose.msra.mxu0 0.0
  %870 = vmatprep.subr.mxu0 0.0
  %871 = vmatpush1.xpose.msra.mxu0 0.0
  %872 = vmatprep.subr.mxu0 0.0
  %873 = vmatpush1.xpose.msra.mxu0 0.0
  %874 = vmatprep.subr.mxu0 0.0
  %875 = vmatpush1.xpose.msra.mxu0 0.0
  %876 = vmatprep.subr.mxu0 0.0
  %877 = vmatpush1.xpose.msra.mxu0 0.0
  %878 = vmatprep.subr.mxu0 0.0
  %879 = vmatpush1.xpose.msra.mxu0 0.0
  %880 = vmatprep.subr.mxu0 0.0
  %881 = vmatpush1.xpose.msra.mxu0 0.0
  %882 = vmatprep.subr.mxu0 0.0
  %883 = vmatpush1.xpose.msra.mxu0 0.0
  %884 = vmatprep.subr.mxu0 0.0
  %885 = vmatpush1.xpose.msra.mxu0 0.0
  %886 = vmatprep.subr.mxu0 0.0
  %887 = vmatpush1.xpose.msra.mxu0 0.0
  %888 = vmatprep.subr.mxu0 0.0
  %889 = vmatpush1.xpose.msra.mxu0 0.0
  %890 = vmatprep.subr.mxu0 0.0
  %891 = vmatpush1.xpose.msra.mxu0 0.0
  %892 = vmatprep.subr.mxu0 0.0
  %893 = vmatpush1.xpose.msra.mxu0 0.0
  %894 = vmatprep.subr.mxu0 0.0
  %895 = vmatpush1.xpose.msra.mxu0 0.0
  %896 = vmatprep.subr.mxu0 0.0
  %897 = vmatpush1.xpose.msra.mxu0 0.0
  %898 = vmatprep.subr.mxu0 0.0
  %899 = vmatpush1.xpose.msra.mxu0 0.0
  %900 = vmatprep.subr.mxu0 0.0
  %901 = vmatpush1.xpose.msra.mxu0 0.0
  %902 = vmatprep.subr.mxu0 0.0
  %903 = vmatpush1.xpose.msra.mxu0 0.0
  %904 = vmatprep.subr.mxu0 0.0
  %905 = vmatpush1.xpose.msra.mxu0 0.0
  %906 = vmatprep.subr.mxu0 0.0
  %907 = vmatpush1.xpose.msra.mxu0 0.0
  %908 = vmatprep.subr.mxu0 0.0
  %909 = vmatpush1.xpose.msra.mxu0 0.0
  %910 = vmatprep.subr.mxu0 0.0
  %911 = vmatpush1.xpose.msra.mxu0 0.0
  %912 = vmatprep.subr.mxu0 0.0
  %913 = vmatpush1.xpose.msra.mxu0 0.0
  %914 = vmatprep.subr.mxu0 0.0
  %915 = vmatpush1.xpose.msra.mxu0 0.0
  %916 = vmatprep.subr.mxu0 0.0
  %917 = vmatpush1.xpose.msra.mxu0 0.0
  %918 = vmatprep.subr.mxu0 0.0
  %919 = vmatpush1.xpose.msra.mxu0 0.0
  %920 = vmatprep.subr.mxu0 0.0
  %921 = vmatpush1.xpose.msra.mxu0 0.0
  %922 = vmatprep.mubr.f32.mxu0 0.0
  %923 = vmatmul.mubr.f32.gmra.mrb[0].mxu0 %v847
  %v924 = vpop.f32.mrb[0].mxu0
  %v925 = vadd.f32 0.0, %v924
  %v926 = vpop.f32.mrb[0].mxu0
  %927 = vmatprep.mubr.f32.mxu0 0.0
  %928 = vmatmul.mubr.f32.gmra.mrb[0].mxu0 %v850
  %v929 = vpop.f32.mrb[0].mxu0
  %v930 = vadd.f32 0.0, %v929
  %v931 = vpop.f32.mrb[0].mxu0
  %932 = vdwg.mxu0
  %v933 = vmul.f32 %v925, 0.25
  %v934 = vmul.f32 %v930, 0.25
  %v935 = vadd.f32 %v933, %v71
  %v936 = vadd.f32 %v934, %v72
  %v937 = vsel %vm385, %v935, -inf
  %938 = vmax.xlane.f32.xlu0 %v937
  %v939 = vpop.xlane.xlu0 %938
  %v940 = vsel %vm385, %v936, -inf
  %941 = vmax.xlane.f32.xlu0 %v940
  %v942 = vpop.xlane.xlu0 %941
  %v943 = vsub.f32 %v935, %v939
  %v944 = vsub.f32 %v936, %v942
  %v945 = vmul.f32 %v943, 1.442695
  %v946 = vpow.pop %v945
  %v947 = vmul.f32 %v944, 1.442695
  %v948 = vpow.pop %v947
  %v949 = vsel %vm385, %v946, 0.0
  %950 = vadd.xlane.f32.xlu0 %v949
  %v951 = vpop.xlane.xlu0 %950
  %v952 = vsel %vm385, %v948, 0.0
  %953 = vadd.xlane.f32.xlu0 %v952
  %v954 = vpop.xlane.xlu0 %953
  %v955 = vrcp.pop %v951
  %v956 = vmul.f32 %v946, %v955
  %v957 = vrcp.pop %v954
  %v958 = vmul.f32 %v948, %v957
  %v960 = vsel %vm385, %v956, 0
  %v963 = vsel %vm385, %v958, 0
  %965 = vmatprep.subr.mxu0 0.0
  %966 = vmatpush1.msra.mxu0 %v838
  %967 = vmatprep.subr.mxu0 0.0
  %968 = vmatpush1.msra.mxu0 %v843
  %969 = vmatprep.subr.mxu0 0.0
  %970 = vmatpush1.msra.mxu0 0.0
  %971 = vmatprep.subr.mxu0 0.0
  %972 = vmatpush1.msra.mxu0 0.0
  %973 = vmatprep.subr.mxu0 0.0
  %974 = vmatpush1.msra.mxu0 0.0
  %975 = vmatprep.subr.mxu0 0.0
  %976 = vmatpush1.msra.mxu0 0.0
  %977 = vmatprep.subr.mxu0 0.0
  %978 = vmatpush1.msra.mxu0 0.0
  %979 = vmatprep.subr.mxu0 0.0
  %980 = vmatpush1.msra.mxu0 0.0
  %981 = vmatprep.subr.mxu0 0.0
  %982 = vmatpush1.msra.mxu0 0.0
  %983 = vmatprep.subr.mxu0 0.0
  %984 = vmatpush1.msra.mxu0 0.0
  %985 = vmatprep.subr.mxu0 0.0
  %986 = vmatpush1.msra.mxu0 0.0
  %987 = vmatprep.subr.mxu0 0.0
  %988 = vmatpush1.msra.mxu0 0.0
  %989 = vmatprep.subr.mxu0 0.0
  %990 = vmatpush1.msra.mxu0 0.0
  %991 = vmatprep.subr.mxu0 0.0
  %992 = vmatpush1.msra.mxu0 0.0
  %993 = vmatprep.subr.mxu0 0.0
  %994 = vmatpush1.msra.mxu0 0.0
  %995 = vmatprep.subr.mxu0 0.0
  %996 = vmatpush1.msra.mxu0 0.0
  %997 = vmatprep.subr.mxu0 0.0
  %998 = vmatpush1.msra.mxu0 0.0
  %999 = vmatprep.subr.mxu0 0.0
  %1000 = vmatpush1.msra.mxu0 0.0
  %1001 = vmatprep.subr.mxu0 0.0
  %1002 = vmatpush1.msra.mxu0 0.0
  %1003 = vmatprep.subr.mxu0 0.0
  %1004 = vmatpush1.msra.mxu0 0.0
  %1005 = vmatprep.subr.mxu0 0.0
  %1006 = vmatpush1.msra.mxu0 0.0
  %1007 = vmatprep.subr.mxu0 0.0
  %1008 = vmatpush1.msra.mxu0 0.0
  %1009 = vmatprep.subr.mxu0 0.0
  %1010 = vmatpush1.msra.mxu0 0.0
  %1011 = vmatprep.subr.mxu0 0.0
  %1012 = vmatpush1.msra.mxu0 0.0
  %1013 = vmatprep.subr.mxu0 0.0
  %1014 = vmatpush1.msra.mxu0 0.0
  %1015 = vmatprep.subr.mxu0 0.0
  %1016 = vmatpush1.msra.mxu0 0.0
  %1017 = vmatprep.subr.mxu0 0.0
  %1018 = vmatpush1.msra.mxu0 0.0
  %1019 = vmatprep.subr.mxu0 0.0
  %1020 = vmatpush1.msra.mxu0 0.0
  %1021 = vmatprep.subr.mxu0 0.0
  %1022 = vmatpush1.msra.mxu0 0.0
  %1023 = vmatprep.subr.mxu0 0.0
  %1024 = vmatpush1.msra.mxu0 0.0
  %1025 = vmatprep.subr.mxu0 0.0
  %1026 = vmatpush1.msra.mxu0 0.0
  %1027 = vmatprep.subr.mxu0 0.0
  %1028 = vmatpush1.msra.mxu0 0.0
  %1029 = vmatprep.mubr.f32.mxu0 0.0
  %1030 = vmatmul.mubr.f32.gmra.mrb[0].mxu0 %v960
  %v1031 = vpop.f32.mrb[0].mxu0
  %v1032 = vadd.f32 0.0, %v1031
  %v1033 = vpop.f32.mrb[0].mxu0
  %1034 = vmatprep.mubr.f32.mxu0 0.0
  %1035 = vmatmul.mubr.f32.gmra.mrb[0].mxu0 %v963
  %v1036 = vpop.f32.mrb[0].mxu0
  %v1037 = vadd.f32 0.0, %v1036
  %v1038 = vpop.f32.mrb[0].mxu0
  %1039 = vdwg.mxu0
  %s1040 = scalar_lea.vmem %s10, 16
  %v1041 = vld [vmem:[%s1040] sm:$0xff]
  %v1042 = vld [vmem:[%s1040 + $0x8] sm:$0xff]
  %v1044 = vsel %vm385, %v1032, 0
  %v1047 = vsel %vm385, %v1037, 0
  %1049 = vmatprep.subr.mxu0 0.0
  %1050 = vmatpush1.msra.mxu0 %v1041
  %1051 = vmatprep.subr.mxu0 0.0
  %1052 = vmatpush1.msra.mxu0 %v1042
  %1053 = vmatprep.subr.mxu0 0.0
  %1054 = vmatpush1.msra.mxu0 0.0
  %1055 = vmatprep.subr.mxu0 0.0
  %1056 = vmatpush1.msra.mxu0 0.0
  %1057 = vmatprep.subr.mxu0 0.0
  %1058 = vmatpush1.msra.mxu0 0.0
  %1059 = vmatprep.subr.mxu0 0.0
  %1060 = vmatpush1.msra.mxu0 0.0
  %1061 = vmatprep.subr.mxu0 0.0
  %1062 = vmatpush1.msra.mxu0 0.0
  %1063 = vmatprep.subr.mxu0 0.0
  %1064 = vmatpush1.msra.mxu0 0.0
  %1065 = vmatprep.subr.mxu0 0.0
  %1066 = vmatpush1.msra.mxu0 0.0
  %1067 = vmatprep.subr.mxu0 0.0
  %1068 = vmatpush1.msra.mxu0 0.0
  %1069 = vmatprep.subr.mxu0 0.0
  %1070 = vmatpush1.msra.mxu0 0.0
  %1071 = vmatprep.subr.mxu0 0.0
  %1072 = vmatpush1.msra.mxu0 0.0
  %1073 = vmatprep.subr.mxu0 0.0
  %1074 = vmatpush1.msra.mxu0 0.0
  %1075 = vmatprep.subr.mxu0 0.0
  %1076 = vmatpush1.msra.mxu0 0.0
  %1077 = vmatprep.subr.mxu0 0.0
  %1078 = vmatpush1.msra.mxu0 0.0
  %1079 = vmatprep.subr.mxu0 0.0
  %1080 = vmatpush1.msra.mxu0 0.0
  %1081 = vmatprep.subr.mxu0 0.0
  %1082 = vmatpush1.msra.mxu0 0.0
  %1083 = vmatprep.subr.mxu0 0.0
  %1084 = vmatpush1.msra.mxu0 0.0
  %1085 = vmatprep.subr.mxu0 0.0
  %1086 = vmatpush1.msra.mxu0 0.0
  %1087 = vmatprep.subr.mxu0 0.0
  %1088 = vmatpush1.msra.mxu0 0.0
  %1089 = vmatprep.subr.mxu0 0.0
  %1090 = vmatpush1.msra.mxu0 0.0
  %1091 = vmatprep.subr.mxu0 0.0
  %1092 = vmatpush1.msra.mxu0 0.0
  %1093 = vmatprep.subr.mxu0 0.0
  %1094 = vmatpush1.msra.mxu0 0.0
  %1095 = vmatprep.subr.mxu0 0.0
  %1096 = vmatpush1.msra.mxu0 0.0
  %1097 = vmatprep.subr.mxu0 0.0
  %1098 = vmatpush1.msra.mxu0 0.0
  %1099 = vmatprep.subr.mxu0 0.0
  %1100 = vmatpush1.msra.mxu0 0.0
  %1101 = vmatprep.subr.mxu0 0.0
  %1102 = vmatpush1.msra.mxu0 0.0
  %1103 = vmatprep.subr.mxu0 0.0
  %1104 = vmatpush1.msra.mxu0 0.0
  %1105 = vmatprep.subr.mxu0 0.0
  %1106 = vmatpush1.msra.mxu0 0.0
  %1107 = vmatprep.subr.mxu0 0.0
  %1108 = vmatpush1.msra.mxu0 0.0
  %1109 = vmatprep.subr.mxu0 0.0
  %1110 = vmatpush1.msra.mxu0 0.0
  %1111 = vmatprep.subr.mxu0 0.0
  %1112 = vmatpush1.msra.mxu0 0.0
  %1113 = vmatprep.mubr.f32.mxu0 0.0
  %1114 = vmatmul.mubr.f32.gmra.mrb[0].mxu0 %v1044
  %v1115 = vpop.f32.mrb[0].mxu0
  %v1116 = vadd.f32 0.0, %v1115
  %v1117 = vpop.f32.mrb[0].mxu0
  %1118 = vmatprep.mubr.f32.mxu0 0.0
  %1119 = vmatmul.mubr.f32.gmra.mrb[0].mxu0 %v1047
  %v1120 = vpop.f32.mrb[0].mxu0
  %v1121 = vadd.f32 0.0, %v1120
  %v1122 = vpop.f32.mrb[0].mxu0
  %1123 = vdwg.mxu0
  %v1125 = vsel %vm385, %v572, 0
  %v1128 = vsel %vm385, %v577, 0
  %1130 = vmatprep.subr.mxu0 0.0
  %1131 = vmatpush1.msra.mxu0 %v580
  %1132 = vmatprep.subr.mxu0 0.0
  %1133 = vmatpush1.msra.mxu0 %v581
  %1134 = vmatprep.subr.mxu0 0.0
  %1135 = vmatpush1.msra.mxu0 0.0
  %1136 = vmatprep.subr.mxu0 0.0
  %1137 = vmatpush1.msra.mxu0 0.0
  %1138 = vmatprep.subr.mxu0 0.0
  %1139 = vmatpush1.msra.mxu0 0.0
  %1140 = vmatprep.subr.mxu0 0.0
  %1141 = vmatpush1.msra.mxu0 0.0
  %1142 = vmatprep.subr.mxu0 0.0
  %1143 = vmatpush1.msra.mxu0 0.0
  %1144 = vmatprep.subr.mxu0 0.0
  %1145 = vmatpush1.msra.mxu0 0.0
  %1146 = vmatprep.subr.mxu0 0.0
  %1147 = vmatpush1.msra.mxu0 0.0
  %1148 = vmatprep.subr.mxu0 0.0
  %1149 = vmatpush1.msra.mxu0 0.0
  %1150 = vmatprep.subr.mxu0 0.0
  %1151 = vmatpush1.msra.mxu0 0.0
  %1152 = vmatprep.subr.mxu0 0.0
  %1153 = vmatpush1.msra.mxu0 0.0
  %1154 = vmatprep.subr.mxu0 0.0
  %1155 = vmatpush1.msra.mxu0 0.0
  %1156 = vmatprep.subr.mxu0 0.0
  %1157 = vmatpush1.msra.mxu0 0.0
  %1158 = vmatprep.subr.mxu0 0.0
  %1159 = vmatpush1.msra.mxu0 0.0
  %1160 = vmatprep.subr.mxu0 0.0
  %1161 = vmatpush1.msra.mxu0 0.0
  %1162 = vmatprep.subr.mxu0 0.0
  %1163 = vmatpush1.msra.mxu0 0.0
  %1164 = vmatprep.subr.mxu0 0.0
  %1165 = vmatpush1.msra.mxu0 0.0
  %1166 = vmatprep.subr.mxu0 0.0
  %1167 = vmatpush1.msra.mxu0 0.0
  %1168 = vmatprep.subr.mxu0 0.0
  %1169 = vmatpush1.msra.mxu0 0.0
  %1170 = vmatprep.subr.mxu0 0.0
  %1171 = vmatpush1.msra.mxu0 0.0
  %1172 = vmatprep.subr.mxu0 0.0
  %1173 = vmatpush1.msra.mxu0 0.0
  %1174 = vmatprep.subr.mxu0 0.0
  %1175 = vmatpush1.msra.mxu0 0.0
  %1176 = vmatprep.subr.mxu0 0.0
  %1177 = vmatpush1.msra.mxu0 0.0
  %1178 = vmatprep.subr.mxu0 0.0
  %1179 = vmatpush1.msra.mxu0 0.0
  %1180 = vmatprep.subr.mxu0 0.0
  %1181 = vmatpush1.msra.mxu0 0.0
  %1182 = vmatprep.subr.mxu0 0.0
  %1183 = vmatpush1.msra.mxu0 0.0
  %1184 = vmatprep.subr.mxu0 0.0
  %1185 = vmatpush1.msra.mxu0 0.0
  %1186 = vmatprep.subr.mxu0 0.0
  %1187 = vmatpush1.msra.mxu0 0.0
  %1188 = vmatprep.subr.mxu0 0.0
  %1189 = vmatpush1.msra.mxu0 0.0
  %1190 = vmatprep.subr.mxu0 0.0
  %1191 = vmatpush1.msra.mxu0 0.0
  %1192 = vmatprep.subr.mxu0 0.0
  %1193 = vmatpush1.msra.mxu0 0.0
  %1194 = vmatprep.mubr.f32.mxu0 0.0
  %1195 = vmatmul.mubr.f32.gmra.mrb[0].mxu0 %v1125
  %v1196 = vpop.f32.mrb[0].mxu0
  %v1197 = vadd.f32 %v1116, %v1196
  %v1198 = vpop.f32.mrb[0].mxu0
  %1199 = vmatprep.mubr.f32.mxu0 0.0
  %1200 = vmatmul.mubr.f32.gmra.mrb[0].mxu0 %v1128
  %v1201 = vpop.f32.mrb[0].mxu0
  %v1202 = vadd.f32 %v1121, %v1201
  %v1203 = vpop.f32.mrb[0].mxu0
  %1204 = vdwg.mxu0
  %v1205 = vld [vmem:[%s11] sm:$0x1]
  %v1207 = vlaneseq
  %v1208 = vshrl.u32 %v1207, 7
  %v1209 = vsub.s32 0, %v1208
  %v1210 = vrot.slane %v1205, %v1209
  %v1212 = vadd.f32 %v1197, %v1210
  %v1213 = vadd.f32 %v1202, %v1210
  %v1214 = vadd.f32 %v119, %v1212
  %v1215 = vadd.f32 %v120, %v1213
  %v1216 = vld [vmem:[%s12] sm:$0x1]
  %v1217 = vld [vmem:[%s13] sm:$0x1]
  %v1218 = vsel %vm77, %v1214, 0.0
  %1219 = vadd.xlane.f32.xlu0 %v1218
  %v1220 = vpop.xlane.xlu0 %1219
  %v1221 = vsel %vm77, %v1215, 0.0
  %1222 = vadd.xlane.f32.xlu0 %v1221
  %v1223 = vpop.xlane.xlu0 %1222
  %v1224 = vmul.f32 %v1220, %v84
  %v1225 = vmul.f32 %v1223, %v84
  %v1226 = vsub.f32 %v1214, %v1224
  %v1227 = vsub.f32 %v1215, %v1225
  %v1228 = vmul.f32 %v1226, %v1226
  %v1229 = vmul.f32 %v1227, %v1227
  %v1230 = vsel %vm77, %v1228, 0.0
  %1231 = vadd.xlane.f32.xlu0 %v1230
  %v1232 = vpop.xlane.xlu0 %1231
  %v1233 = vsel %vm77, %v1229, 0.0
  %1234 = vadd.xlane.f32.xlu0 %v1233
  %v1235 = vpop.xlane.xlu0 %1234
  %v1236 = vmul.f32 %v1232, %v84
  %v1237 = vmul.f32 %v1235, %v84
  %v1238 = vadd.f32 %v1236, 1e-12
  %v1239 = vadd.f32 %v1237, 1e-12
  %v1240 = vrsqrt.pop %v1238
  %v1241 = vrsqrt.pop %v1239
  %v1242 = vmul.f32 %v1226, %v1240
  %v1243 = vmul.f32 %v1227, %v1241
  %v1245 = vlaneseq
  %v1246 = vshrl.u32 %v1245, 7
  %v1247 = vsub.s32 0, %v1246
  %v1248 = vrot.slane %v1216, %v1247
  %v1250 = vmul.f32 %v1242, %v1248
  %v1251 = vmul.f32 %v1243, %v1248
  %v1253 = vlaneseq
  %v1254 = vshrl.u32 %v1253, 7
  %v1255 = vsub.s32 0, %v1254
  %v1256 = vrot.slane %v1217, %v1255
  %v1258 = vadd.f32 %v1250, %v1256
  %v1259 = vadd.f32 %v1251, %v1256
  %v1260 = vld [vmem:[%s14] sm:$0xff]
  %v1261 = vld [vmem:[%s14 + $0x8] sm:$0xff]
  %v1262 = vld [vmem:[%s14 + $0x10] sm:$0xff]
  %v1263 = vld [vmem:[%s14 + $0x18] sm:$0xff]
  %v1264 = vld [vmem:[%s15] sm:$0x1]
  %v1266 = vlaneseq
  %v1267 = vshrl.u32 %v1266, 7
  %v1268 = vsub.s32 0, %v1267
  %v1269 = vrot.slane %v1264, %v1268
  %v1272 = vsel %vm77, %v1258, 0
  %v1275 = vsel %vm77, %v1259, 0
  %1277 = vmatprep.subr.mxu0 0.0
  %1278 = vmatpush1.msra.mxu0 %v1260
  %1279 = vmatprep.subr.mxu0 0.0
  %1280 = vmatpush1.msra.mxu0 %v1261
  %1281 = vmatprep.subr.mxu0 0.0
  %1282 = vmatpush1.msra.mxu0 %v1262
  %1283 = vmatprep.subr.mxu0 0.0
  %1284 = vmatpush1.msra.mxu0 %v1263
  %1285 = vmatprep.subr.mxu0 0.0
  %1286 = vmatpush1.msra.mxu0 0.0
  %1287 = vmatprep.subr.mxu0 0.0
  %1288 = vmatpush1.msra.mxu0 0.0
  %1289 = vmatprep.subr.mxu0 0.0
  %1290 = vmatpush1.msra.mxu0 0.0
  %1291 = vmatprep.subr.mxu0 0.0
  %1292 = vmatpush1.msra.mxu0 0.0
  %1293 = vmatprep.subr.mxu0 0.0
  %1294 = vmatpush1.msra.mxu0 0.0
  %1295 = vmatprep.subr.mxu0 0.0
  %1296 = vmatpush1.msra.mxu0 0.0
  %1297 = vmatprep.subr.mxu0 0.0
  %1298 = vmatpush1.msra.mxu0 0.0
  %1299 = vmatprep.subr.mxu0 0.0
  %1300 = vmatpush1.msra.mxu0 0.0
  %1301 = vmatprep.subr.mxu0 0.0
  %1302 = vmatpush1.msra.mxu0 0.0
  %1303 = vmatprep.subr.mxu0 0.0
  %1304 = vmatpush1.msra.mxu0 0.0
  %1305 = vmatprep.subr.mxu0 0.0
  %1306 = vmatpush1.msra.mxu0 0.0
  %1307 = vmatprep.subr.mxu0 0.0
  %1308 = vmatpush1.msra.mxu0 0.0
  %1309 = vmatprep.subr.mxu0 0.0
  %1310 = vmatpush1.msra.mxu0 0.0
  %1311 = vmatprep.subr.mxu0 0.0
  %1312 = vmatpush1.msra.mxu0 0.0
  %1313 = vmatprep.subr.mxu0 0.0
  %1314 = vmatpush1.msra.mxu0 0.0
  %1315 = vmatprep.subr.mxu0 0.0
  %1316 = vmatpush1.msra.mxu0 0.0
  %1317 = vmatprep.subr.mxu0 0.0
  %1318 = vmatpush1.msra.mxu0 0.0
  %1319 = vmatprep.subr.mxu0 0.0
  %1320 = vmatpush1.msra.mxu0 0.0
  %1321 = vmatprep.subr.mxu0 0.0
  %1322 = vmatpush1.msra.mxu0 0.0
  %1323 = vmatprep.subr.mxu0 0.0
  %1324 = vmatpush1.msra.mxu0 0.0
  %1325 = vmatprep.subr.mxu0 0.0
  %1326 = vmatpush1.msra.mxu0 0.0
  %1327 = vmatprep.subr.mxu0 0.0
  %1328 = vmatpush1.msra.mxu0 0.0
  %1329 = vmatprep.subr.mxu0 0.0
  %1330 = vmatpush1.msra.mxu0 0.0
  %1331 = vmatprep.subr.mxu0 0.0
  %1332 = vmatpush1.msra.mxu0 0.0
  %1333 = vmatprep.subr.mxu0 0.0
  %1334 = vmatpush1.msra.mxu0 0.0
  %1335 = vmatprep.subr.mxu0 0.0
  %1336 = vmatpush1.msra.mxu0 0.0
  %1337 = vmatprep.subr.mxu0 0.0
  %1338 = vmatpush1.msra.mxu0 0.0
  %1339 = vmatprep.subr.mxu0 0.0
  %1340 = vmatpush1.msra.mxu0 0.0
  %1341 = vmatprep.mubr.f32.mxu0 0.0
  %1342 = vmatmul.mubr.f32.gmra.mrb[0].mxu0 %v1272
  %v1343 = vpop.f32.mrb[0].mxu0
  %v1344 = vadd.f32 %v1269, %v1343
  %v1345 = vpop.f32.mrb[0].mxu0
  %1346 = vmatprep.mubr.f32.mxu0 0.0
  %1347 = vmatmul.mubr.f32.gmra.mrb[0].mxu0 %v1275
  %v1348 = vpop.f32.mrb[0].mxu0
  %v1349 = vadd.f32 %v1269, %v1348
  %v1350 = vpop.f32.mrb[0].mxu0
  %1351 = vdwg.mxu0
  %v1352 = vmul.f32 %v1344, 0.5
  %v1353 = vmul.f32 %v1349, 0.5
  %v1354 = vmul.f32 %v1344, 0.044715
  %v1355 = vmul.f32 %v1349, 0.044715
  %v1356 = vmul.f32 %v1354, %v1344
  %v1357 = vmul.f32 %v1355, %v1349
  %v1358 = vmul.f32 %v1356, %v1344
  %v1359 = vmul.f32 %v1357, %v1349
  %v1360 = vadd.f32 %v1344, %v1358
  %v1361 = vadd.f32 %v1349, %v1359
  %v1362 = vmul.f32 %v1360, 0.7978846
  %v1363 = vmul.f32 %v1361, 0.7978846
  %v1364 = vtanh.pop %v1362
  %v1365 = vtanh.pop %v1363
  %v1366 = vadd.f32 %v1364, 1.0
  %v1367 = vadd.f32 %v1365, 1.0
  %v1368 = vmul.f32 %v1352, %v1366
  %v1369 = vmul.f32 %v1353, %v1367
  %v1370 = vld [vmem:[%s16] sm:$0xff]
  %v1371 = vld [vmem:[%s16 + $0x8] sm:$0xff]
  %v1372 = vld [vmem:[%s16 + $0x10] sm:$0xff]
  %v1373 = vld [vmem:[%s16 + $0x18] sm:$0xff]
  %v1374 = vld [vmem:[%s16 + $0x20] sm:$0xff]
  %v1375 = vld [vmem:[%s16 + $0x28] sm:$0xff]
  %v1376 = vld [vmem:[%s16 + $0x30] sm:$0xff]
  %v1377 = vld [vmem:[%s16 + $0x38] sm:$0xff]
  %v1378 = vld [vmem:[%s17] sm:$0x1]
  %v1380 = vlaneseq
  %v1381 = vshrl.u32 %v1380, 7
  %v1382 = vsub.s32 0, %v1381
  %v1383 = vrot.slane %v1378, %v1382
  %vm1385 = vcmask 523264
  %v1387 = vsel %vm1385, %v1368, 0
  %v1390 = vsel %vm1385, %v1369, 0
  %1392 = vmatprep.subr.mxu0 0.0
  %1393 = vmatpush1.msra.mxu0 %v1370
  %1394 = vmatprep.subr.mxu0 0.0
  %1395 = vmatpush1.msra.mxu0 %v1371
  %1396 = vmatprep.subr.mxu0 0.0
  %1397 = vmatpush1.msra.mxu0 %v1372
  %1398 = vmatprep.subr.mxu0 0.0
  %1399 = vmatpush1.msra.mxu0 %v1373
  %1400 = vmatprep.subr.mxu0 0.0
  %1401 = vmatpush1.msra.mxu0 %v1374
  %1402 = vmatprep.subr.mxu0 0.0
  %1403 = vmatpush1.msra.mxu0 %v1375
  %1404 = vmatprep.subr.mxu0 0.0
  %1405 = vmatpush1.msra.mxu0 %v1376
  %1406 = vmatprep.subr.mxu0 0.0
  %1407 = vmatpush1.msra.mxu0 %v1377
  %1408 = vmatprep.subr.mxu0 0.0
  %1409 = vmatpush1.msra.mxu0 0.0
  %1410 = vmatprep.subr.mxu0 0.0
  %1411 = vmatpush1.msra.mxu0 0.0
  %1412 = vmatprep.subr.mxu0 0.0
  %1413 = vmatpush1.msra.mxu0 0.0
  %1414 = vmatprep.subr.mxu0 0.0
  %1415 = vmatpush1.msra.mxu0 0.0
  %1416 = vmatprep.subr.mxu0 0.0
  %1417 = vmatpush1.msra.mxu0 0.0
  %1418 = vmatprep.subr.mxu0 0.0
  %1419 = vmatpush1.msra.mxu0 0.0
  %1420 = vmatprep.subr.mxu0 0.0
  %1421 = vmatpush1.msra.mxu0 0.0
  %1422 = vmatprep.subr.mxu0 0.0
  %1423 = vmatpush1.msra.mxu0 0.0
  %1424 = vmatprep.subr.mxu0 0.0
  %1425 = vmatpush1.msra.mxu0 0.0
  %1426 = vmatprep.subr.mxu0 0.0
  %1427 = vmatpush1.msra.mxu0 0.0
  %1428 = vmatprep.subr.mxu0 0.0
  %1429 = vmatpush1.msra.mxu0 0.0
  %1430 = vmatprep.subr.mxu0 0.0
  %1431 = vmatpush1.msra.mxu0 0.0
  %1432 = vmatprep.subr.mxu0 0.0
  %1433 = vmatpush1.msra.mxu0 0.0
  %1434 = vmatprep.subr.mxu0 0.0
  %1435 = vmatpush1.msra.mxu0 0.0
  %1436 = vmatprep.subr.mxu0 0.0
  %1437 = vmatpush1.msra.mxu0 0.0
  %1438 = vmatprep.subr.mxu0 0.0
  %1439 = vmatpush1.msra.mxu0 0.0
  %1440 = vmatprep.subr.mxu0 0.0
  %1441 = vmatpush1.msra.mxu0 0.0
  %1442 = vmatprep.subr.mxu0 0.0
  %1443 = vmatpush1.msra.mxu0 0.0
  %1444 = vmatprep.subr.mxu0 0.0
  %1445 = vmatpush1.msra.mxu0 0.0
  %1446 = vmatprep.subr.mxu0 0.0
  %1447 = vmatpush1.msra.mxu0 0.0
  %1448 = vmatprep.subr.mxu0 0.0
  %1449 = vmatpush1.msra.mxu0 0.0
  %1450 = vmatprep.subr.mxu0 0.0
  %1451 = vmatpush1.msra.mxu0 0.0
  %1452 = vmatprep.subr.mxu0 0.0
  %1453 = vmatpush1.msra.mxu0 0.0
  %1454 = vmatprep.subr.mxu0 0.0
  %1455 = vmatpush1.msra.mxu0 0.0
  %1456 = vmatprep.mubr.f32.mxu0 0.0
  %1457 = vmatmul.mubr.f32.gmra.mrb[0].mxu0 %v1387
  %v1458 = vpop.f32.mrb[0].mxu0
  %v1459 = vadd.f32 %v1383, %v1458
  %v1460 = vpop.f32.mrb[0].mxu0
  %1461 = vmatprep.mubr.f32.mxu0 0.0
  %1462 = vmatmul.mubr.f32.gmra.mrb[0].mxu0 %v1390
  %v1463 = vpop.f32.mrb[0].mxu0
  %v1464 = vadd.f32 %v1383, %v1463
  %v1465 = vpop.f32.mrb[0].mxu0
  %1466 = vdwg.mxu0
  %v1467 = vadd.f32 %v1258, %v1459
  %v1468 = vadd.f32 %v1259, %v1464
  %v1469 = vld [vmem:[%s18] sm:$0x1]
  %v1470 = vld [vmem:[%s19] sm:$0x1]
  %v1471 = vsel %vm77, %v1467, 0.0
  %1472 = vadd.xlane.f32.xlu0 %v1471
  %v1473 = vpop.xlane.xlu0 %1472
  %v1474 = vsel %vm77, %v1468, 0.0
  %1475 = vadd.xlane.f32.xlu0 %v1474
  %v1476 = vpop.xlane.xlu0 %1475
  %v1477 = vmul.f32 %v1473, %v84
  %v1478 = vmul.f32 %v1476, %v84
  %v1479 = vsub.f32 %v1467, %v1477
  %v1480 = vsub.f32 %v1468, %v1478
  %v1481 = vmul.f32 %v1479, %v1479
  %v1482 = vmul.f32 %v1480, %v1480
  %v1483 = vsel %vm77, %v1481, 0.0
  %1484 = vadd.xlane.f32.xlu0 %v1483
  %v1485 = vpop.xlane.xlu0 %1484
  %v1486 = vsel %vm77, %v1482, 0.0
  %1487 = vadd.xlane.f32.xlu0 %v1486
  %v1488 = vpop.xlane.xlu0 %1487
  %v1489 = vmul.f32 %v1485, %v84
  %v1490 = vmul.f32 %v1488, %v84
  %v1491 = vadd.f32 %v1489, 1e-12
  %v1492 = vadd.f32 %v1490, 1e-12
  %v1493 = vrsqrt.pop %v1491
  %v1494 = vrsqrt.pop %v1492
  %v1495 = vmul.f32 %v1479, %v1493
  %v1496 = vmul.f32 %v1480, %v1494
  %v1498 = vlaneseq
  %v1499 = vshrl.u32 %v1498, 7
  %v1500 = vsub.s32 0, %v1499
  %v1501 = vrot.slane %v1469, %v1500
  %v1503 = vmul.f32 %v1495, %v1501
  %v1504 = vmul.f32 %v1496, %v1501
  %v1506 = vlaneseq
  %v1507 = vshrl.u32 %v1506, 7
  %v1508 = vsub.s32 0, %v1507
  %v1509 = vrot.slane %v1470, %v1508
  %v1511 = vadd.f32 %v1503, %v1509
  %v1512 = vadd.f32 %v1504, %v1509
  %s1513 = scalar_lea.vmem %s4, 64
  %v1514 = vld [vmem:[%s1513] sm:$0xff]
  %v1515 = vld [vmem:[%s1513 + $0x8] sm:$0xff]
  %v1516 = vld [vmem:[%s1513 + $0x10] sm:$0xff]
  %v1517 = vld [vmem:[%s1513 + $0x18] sm:$0xff]
  %s1518 = scalar_lea.vmem %s5, 2
  %v1519 = vld [vmem:[%s1518] sm:$0x1]
  %v1521 = vlaneseq
  %v1522 = vshrl.u32 %v1521, 7
  %v1523 = vsub.s32 0, %v1522
  %v1524 = vrot.slane %v1519, %v1523
  %v1527 = vsel %vm77, %v1511, 0
  %v1530 = vsel %vm77, %v1512, 0
  %1532 = vmatprep.subr.mxu0 0.0
  %1533 = vmatpush1.msra.mxu0 %v1514
  %1534 = vmatprep.subr.mxu0 0.0
  %1535 = vmatpush1.msra.mxu0 %v1515
  %1536 = vmatprep.subr.mxu0 0.0
  %1537 = vmatpush1.msra.mxu0 %v1516
  %1538 = vmatprep.subr.mxu0 0.0
  %1539 = vmatpush1.msra.mxu0 %v1517
  %1540 = vmatprep.subr.mxu0 0.0
  %1541 = vmatpush1.msra.mxu0 0.0
  %1542 = vmatprep.subr.mxu0 0.0
  %1543 = vmatpush1.msra.mxu0 0.0
  %1544 = vmatprep.subr.mxu0 0.0
  %1545 = vmatpush1.msra.mxu0 0.0
  %1546 = vmatprep.subr.mxu0 0.0
  %1547 = vmatpush1.msra.mxu0 0.0
  %1548 = vmatprep.subr.mxu0 0.0
  %1549 = vmatpush1.msra.mxu0 0.0
  %1550 = vmatprep.subr.mxu0 0.0
  %1551 = vmatpush1.msra.mxu0 0.0
  %1552 = vmatprep.subr.mxu0 0.0
  %1553 = vmatpush1.msra.mxu0 0.0
  %1554 = vmatprep.subr.mxu0 0.0
  %1555 = vmatpush1.msra.mxu0 0.0
  %1556 = vmatprep.subr.mxu0 0.0
  %1557 = vmatpush1.msra.mxu0 0.0
  %1558 = vmatprep.subr.mxu0 0.0
  %1559 = vmatpush1.msra.mxu0 0.0
  %1560 = vmatprep.subr.mxu0 0.0
  %1561 = vmatpush1.msra.mxu0 0.0
  %1562 = vmatprep.subr.mxu0 0.0
  %1563 = vmatpush1.msra.mxu0 0.0
  %1564 = vmatprep.subr.mxu0 0.0
  %1565 = vmatpush1.msra.mxu0 0.0
  %1566 = vmatprep.subr.mxu0 0.0
  %1567 = vmatpush1.msra.mxu0 0.0
  %1568 = vmatprep.subr.mxu0 0.0
  %1569 = vmatpush1.msra.mxu0 0.0
  %1570 = vmatprep.subr.mxu0 0.0
  %1571 = vmatpush1.msra.mxu0 0.0
  %1572 = vmatprep.subr.mxu0 0.0
  %1573 = vmatpush1.msra.mxu0 0.0
  %1574 = vmatprep.subr.mxu0 0.0
  %1575 = vmatpush1.msra.mxu0 0.0
  %1576 = vmatprep.subr.mxu0 0.0
  %1577 = vmatpush1.msra.mxu0 0.0
  %1578 = vmatprep.subr.mxu0 0.0
  %1579 = vmatpush1.msra.mxu0 0.0
  %1580 = vmatprep.subr.mxu0 0.0
  %1581 = vmatpush1.msra.mxu0 0.0
  %1582 = vmatprep.subr.mxu0 0.0
  %1583 = vmatpush1.msra.mxu0 0.0
  %1584 = vmatprep.subr.mxu0 0.0
  %1585 = vmatpush1.msra.mxu0 0.0
  %1586 = vmatprep.subr.mxu0 0.0
  %1587 = vmatpush1.msra.mxu0 0.0
  %1588 = vmatprep.subr.mxu0 0.0
  %1589 = vmatpush1.msra.mxu0 0.0
  %1590 = vmatprep.subr.mxu0 0.0
  %1591 = vmatpush1.msra.mxu0 0.0
  %1592 = vmatprep.subr.mxu0 0.0
  %1593 = vmatpush1.msra.mxu0 0.0
  %1594 = vmatprep.subr.mxu0 0.0
  %1595 = vmatpush1.msra.mxu0 0.0
  %1596 = vmatprep.mubr.f32.mxu0 0.0
  %1597 = vmatmul.mubr.f32.gmra.mrb[0].mxu0 %v1527
  %v1598 = vpop.f32.mrb[0].mxu0
  %v1599 = vadd.f32 %v1524, %v1598
  %v1600 = vpop.f32.mrb[0].mxu0
  %1601 = vmatprep.mubr.f32.mxu0 0.0
  %1602 = vmatmul.mubr.f32.gmra.mrb[0].mxu0 %v1530
  %v1603 = vpop.f32.mrb[0].mxu0
  %v1604 = vadd.f32 %v1524, %v1603
  %v1605 = vpop.f32.mrb[0].mxu0
  %1606 = vdwg.mxu0
  %s1607 = scalar_lea.vmem %s6, 64
  %v1608 = vld [vmem:[%s1607] sm:$0xff]
  %v1609 = vld [vmem:[%s1607 + $0x8] sm:$0xff]
  %v1610 = vld [vmem:[%s1607 + $0x10] sm:$0xff]
  %v1611 = vld [vmem:[%s1607 + $0x18] sm:$0xff]
  %s1612 = scalar_lea.vmem %s7, 2
  %v1613 = vld [vmem:[%s1612] sm:$0x1]
  %v1615 = vlaneseq
  %v1616 = vshrl.u32 %v1615, 7
  %v1617 = vsub.s32 0, %v1616
  %v1618 = vrot.slane %v1613, %v1617
  %1620 = vmatprep.subr.mxu0 0.0
  %1621 = vmatpush1.msra.mxu0 %v1608
  %1622 = vmatprep.subr.mxu0 0.0
  %1623 = vmatpush1.msra.mxu0 %v1609
  %1624 = vmatprep.subr.mxu0 0.0
  %1625 = vmatpush1.msra.mxu0 %v1610
  %1626 = vmatprep.subr.mxu0 0.0
  %1627 = vmatpush1.msra.mxu0 %v1611
  %1628 = vmatprep.subr.mxu0 0.0
  %1629 = vmatpush1.msra.mxu0 0.0
  %1630 = vmatprep.subr.mxu0 0.0
  %1631 = vmatpush1.msra.mxu0 0.0
  %1632 = vmatprep.subr.mxu0 0.0
  %1633 = vmatpush1.msra.mxu0 0.0
  %1634 = vmatprep.subr.mxu0 0.0
  %1635 = vmatpush1.msra.mxu0 0.0
  %1636 = vmatprep.subr.mxu0 0.0
  %1637 = vmatpush1.msra.mxu0 0.0
  %1638 = vmatprep.subr.mxu0 0.0
  %1639 = vmatpush1.msra.mxu0 0.0
  %1640 = vmatprep.subr.mxu0 0.0
  %1641 = vmatpush1.msra.mxu0 0.0
  %1642 = vmatprep.subr.mxu0 0.0
  %1643 = vmatpush1.msra.mxu0 0.0
  %1644 = vmatprep.subr.mxu0 0.0
  %1645 = vmatpush1.msra.mxu0 0.0
  %1646 = vmatprep.subr.mxu0 0.0
  %1647 = vmatpush1.msra.mxu0 0.0
  %1648 = vmatprep.subr.mxu0 0.0
  %1649 = vmatpush1.msra.mxu0 0.0
  %1650 = vmatprep.subr.mxu0 0.0
  %1651 = vmatpush1.msra.mxu0 0.0
  %1652 = vmatprep.subr.mxu0 0.0
  %1653 = vmatpush1.msra.mxu0 0.0
  %1654 = vmatprep.subr.mxu0 0.0
  %1655 = vmatpush1.msra.mxu0 0.0
  %1656 = vmatprep.subr.mxu0 0.0
  %1657 = vmatpush1.msra.mxu0 0.0
  %1658 = vmatprep.subr.mxu0 0.0
  %1659 = vmatpush1.msra.mxu0 0.0
  %1660 = vmatprep.subr.mxu0 0.0
  %1661 = vmatpush1.msra.mxu0 0.0
  %1662 = vmatprep.subr.mxu0 0.0
  %1663 = vmatpush1.msra.mxu0 0.0
  %1664 = vmatprep.subr.mxu0 0.0
  %1665 = vmatpush1.msra.mxu0 0.0
  %1666 = vmatprep.subr.mxu0 0.0
  %1667 = vmatpush1.msra.mxu0 0.0
  %1668 = vmatprep.subr.mxu0 0.0
  %1669 = vmatpush1.msra.mxu0 0.0
  %1670 = vmatprep.subr.mxu0 0.0
  %1671 = vmatpush1.msra.mxu0 0.0
  %1672 = vmatprep.subr.mxu0 0.0
  %1673 = vmatpush1.msra.mxu0 0.0
  %1674 = vmatprep.subr.mxu0 0.0
  %1675 = vmatpush1.msra.mxu0 0.0
  %1676 = vmatprep.subr.mxu0 0.0
  %1677 = vmatpush1.msra.mxu0 0.0
  %1678 = vmatprep.subr.mxu0 0.0
  %1679 = vmatpush1.msra.mxu0 0.0
  %1680 = vmatprep.subr.mxu0 0.0
  %1681 = vmatpush1.msra.mxu0 0.0
  %1682 = vmatprep.subr.mxu0 0.0
  %1683 = vmatpush1.msra.mxu0 0.0
  %1684 = vmatprep.mubr.f32.mxu0 0.0
  %1685 = vmatmul.mubr.f32.gmra.mrb[0].mxu0 %v1527
  %v1686 = vpop.f32.mrb[0].mxu0
  %v1687 = vadd.f32 %v1618, %v1686
  %v1688 = vpop.f32.mrb[0].mxu0
  %1689 = vmatprep.mubr.f32.mxu0 0.0
  %1690 = vmatmul.mubr.f32.gmra.mrb[0].mxu0 %v1530
  %v1691 = vpop.f32.mrb[0].mxu0
  %v1692 = vadd.f32 %v1618, %v1691
  %v1693 = vpop.f32.mrb[0].mxu0
  %1694 = vdwg.mxu0
  %s1695 = scalar_lea.vmem %s8, 64
  %v1696 = vld [vmem:[%s1695] sm:$0xff]
  %v1697 = vld [vmem:[%s1695 + $0x8] sm:$0xff]
  %v1698 = vld [vmem:[%s1695 + $0x10] sm:$0xff]
  %v1699 = vld [vmem:[%s1695 + $0x18] sm:$0xff]
  %s1700 = scalar_lea.vmem %s9, 2
  %v1701 = vld [vmem:[%s1700] sm:$0x1]
  %v1703 = vlaneseq
  %v1704 = vshrl.u32 %v1703, 7
  %v1705 = vsub.s32 0, %v1704
  %v1706 = vrot.slane %v1701, %v1705
  %1708 = vmatprep.subr.mxu0 0.0
  %1709 = vmatpush1.msra.mxu0 %v1696
  %1710 = vmatprep.subr.mxu0 0.0
  %1711 = vmatpush1.msra.mxu0 %v1697
  %1712 = vmatprep.subr.mxu0 0.0
  %1713 = vmatpush1.msra.mxu0 %v1698
  %1714 = vmatprep.subr.mxu0 0.0
  %1715 = vmatpush1.msra.mxu0 %v1699
  %1716 = vmatprep.subr.mxu0 0.0
  %1717 = vmatpush1.msra.mxu0 0.0
  %1718 = vmatprep.subr.mxu0 0.0
  %1719 = vmatpush1.msra.mxu0 0.0
  %1720 = vmatprep.subr.mxu0 0.0
  %1721 = vmatpush1.msra.mxu0 0.0
  %1722 = vmatprep.subr.mxu0 0.0
  %1723 = vmatpush1.msra.mxu0 0.0
  %1724 = vmatprep.subr.mxu0 0.0
  %1725 = vmatpush1.msra.mxu0 0.0
  %1726 = vmatprep.subr.mxu0 0.0
  %1727 = vmatpush1.msra.mxu0 0.0
  %1728 = vmatprep.subr.mxu0 0.0
  %1729 = vmatpush1.msra.mxu0 0.0
  %1730 = vmatprep.subr.mxu0 0.0
  %1731 = vmatpush1.msra.mxu0 0.0
  %1732 = vmatprep.subr.mxu0 0.0
  %1733 = vmatpush1.msra.mxu0 0.0
  %1734 = vmatprep.subr.mxu0 0.0
  %1735 = vmatpush1.msra.mxu0 0.0
  %1736 = vmatprep.subr.mxu0 0.0
  %1737 = vmatpush1.msra.mxu0 0.0
  %1738 = vmatprep.subr.mxu0 0.0
  %1739 = vmatpush1.msra.mxu0 0.0
  %1740 = vmatprep.subr.mxu0 0.0
  %1741 = vmatpush1.msra.mxu0 0.0
  %1742 = vmatprep.subr.mxu0 0.0
  %1743 = vmatpush1.msra.mxu0 0.0
  %1744 = vmatprep.subr.mxu0 0.0
  %1745 = vmatpush1.msra.mxu0 0.0
  %1746 = vmatprep.subr.mxu0 0.0
  %1747 = vmatpush1.msra.mxu0 0.0
  %1748 = vmatprep.subr.mxu0 0.0
  %1749 = vmatpush1.msra.mxu0 0.0
  %1750 = vmatprep.subr.mxu0 0.0
  %1751 = vmatpush1.msra.mxu0 0.0
  %1752 = vmatprep.subr.mxu0 0.0
  %1753 = vmatpush1.msra.mxu0 0.0
  %1754 = vmatprep.subr.mxu0 0.0
  %1755 = vmatpush1.msra.mxu0 0.0
  %1756 = vmatprep.subr.mxu0 0.0
  %1757 = vmatpush1.msra.mxu0 0.0
  %1758 = vmatprep.subr.mxu0 0.0
  %1759 = vmatpush1.msra.mxu0 0.0
  %1760 = vmatprep.subr.mxu0 0.0
  %1761 = vmatpush1.msra.mxu0 0.0
  %1762 = vmatprep.subr.mxu0 0.0
  %1763 = vmatpush1.msra.mxu0 0.0
  %1764 = vmatprep.subr.mxu0 0.0
  %1765 = vmatpush1.msra.mxu0 0.0
  %1766 = vmatprep.subr.mxu0 0.0
  %1767 = vmatpush1.msra.mxu0 0.0
  %1768 = vmatprep.subr.mxu0 0.0
  %1769 = vmatpush1.msra.mxu0 0.0
  %1770 = vmatprep.subr.mxu0 0.0
  %1771 = vmatpush1.msra.mxu0 0.0
  %1772 = vmatprep.mubr.f32.mxu0 0.0
  %1773 = vmatmul.mubr.f32.gmra.mrb[0].mxu0 %v1527
  %v1774 = vpop.f32.mrb[0].mxu0
  %v1775 = vadd.f32 %v1706, %v1774
  %v1776 = vpop.f32.mrb[0].mxu0
  %1777 = vmatprep.mubr.f32.mxu0 0.0
  %1778 = vmatmul.mubr.f32.gmra.mrb[0].mxu0 %v1530
  %v1779 = vpop.f32.mrb[0].mxu0
  %v1780 = vadd.f32 %v1706, %v1779
  %v1781 = vpop.f32.mrb[0].mxu0
  %1782 = vdwg.mxu0
  %v1784 = vsel %vm385, %v1599, 0
  %v1787 = vsel %vm385, %v1604, 0
  %v1790 = vsel %vm385, %v1687, 0
  %v1793 = vsel %vm385, %v1692, 0
  %1795 = vmatprep.subr.mxu0 0.0
  %1796 = vmatpush1.xpose.msra.mxu0 %v1790
  %1797 = vmatprep.subr.mxu0 0.0
  %1798 = vmatpush1.xpose.msra.mxu0 %v1793
  %1799 = vmatprep.subr.mxu0 0.0
  %1800 = vmatpush1.xpose.msra.mxu0 0.0
  %1801 = vmatprep.subr.mxu0 0.0
  %1802 = vmatpush1.xpose.msra.mxu0 0.0
  %1803 = vmatprep.subr.mxu0 0.0
  %1804 = vmatpush1.xpose.msra.mxu0 0.0
  %1805 = vmatprep.subr.mxu0 0.0
  %1806 = vmatpush1.xpose.msra.mxu0 0.0
  %1807 = vmatprep.subr.mxu0 0.0
  %1808 = vmatpush1.xpose.msra.mxu0 0.0
  %1809 = vmatprep.subr.mxu0 0.0
  %1810 = vmatpush1.xpose.msra.mxu0 0.0
  %1811 = vmatprep.subr.mxu0 0.0
  %1812 = vmatpush1.xpose.msra.mxu0 0.0
  %1813 = vmatprep.subr.mxu0 0.0
  %1814 = vmatpush1.xpose.msra.mxu0 0.0
  %1815 = vmatprep.subr.mxu0 0.0
  %1816 = vmatpush1.xpose.msra.mxu0 0.0
  %1817 = vmatprep.subr.mxu0 0.0
  %1818 = vmatpush1.xpose.msra.mxu0 0.0
  %1819 = vmatprep.subr.mxu0 0.0
  %1820 = vmatpush1.xpose.msra.mxu0 0.0
  %1821 = vmatprep.subr.mxu0 0.0
  %1822 = vmatpush1.xpose.msra.mxu0 0.0
  %1823 = vmatprep.subr.mxu0 0.0
  %1824 = vmatpush1.xpose.msra.mxu0 0.0
  %1825 = vmatprep.subr.mxu0 0.0
  %1826 = vmatpush1.xpose.msra.mxu0 0.0
  %1827 = vmatprep.subr.mxu0 0.0
  %1828 = vmatpush1.xpose.msra.mxu0 0.0
  %1829 = vmatprep.subr.mxu0 0.0
  %1830 = vmatpush1.xpose.msra.mxu0 0.0
  %1831 = vmatprep.subr.mxu0 0.0
  %1832 = vmatpush1.xpose.msra.mxu0 0.0
  %1833 = vmatprep.subr.mxu0 0.0
  %1834 = vmatpush1.xpose.msra.mxu0 0.0
  %1835 = vmatprep.subr.mxu0 0.0
  %1836 = vmatpush1.xpose.msra.mxu0 0.0
  %1837 = vmatprep.subr.mxu0 0.0
  %1838 = vmatpush1.xpose.msra.mxu0 0.0
  %1839 = vmatprep.subr.mxu0 0.0
  %1840 = vmatpush1.xpose.msra.mxu0 0.0
  %1841 = vmatprep.subr.mxu0 0.0
  %1842 = vmatpush1.xpose.msra.mxu0 0.0
  %1843 = vmatprep.subr.mxu0 0.0
  %1844 = vmatpush1.xpose.msra.mxu0 0.0
  %1845 = vmatprep.subr.mxu0 0.0
  %1846 = vmatpush1.xpose.msra.mxu0 0.0
  %1847 = vmatprep.subr.mxu0 0.0
  %1848 = vmatpush1.xpose.msra.mxu0 0.0
  %1849 = vmatprep.subr.mxu0 0.0
  %1850 = vmatpush1.xpose.msra.mxu0 0.0
  %1851 = vmatprep.subr.mxu0 0.0
  %1852 = vmatpush1.xpose.msra.mxu0 0.0
  %1853 = vmatprep.subr.mxu0 0.0
  %1854 = vmatpush1.xpose.msra.mxu0 0.0
  %1855 = vmatprep.subr.mxu0 0.0
  %1856 = vmatpush1.xpose.msra.mxu0 0.0
  %1857 = vmatprep.subr.mxu0 0.0
  %1858 = vmatpush1.xpose.msra.mxu0 0.0
  %1859 = vmatprep.mubr.f32.mxu0 0.0
  %1860 = vmatmul.mubr.f32.gmra.mrb[0].mxu0 %v1784
  %v1861 = vpop.f32.mrb[0].mxu0
  %v1862 = vadd.f32 0.0, %v1861
  %v1863 = vpop.f32.mrb[0].mxu0
  %1864 = vmatprep.mubr.f32.mxu0 0.0
  %1865 = vmatmul.mubr.f32.gmra.mrb[0].mxu0 %v1787
  %v1866 = vpop.f32.mrb[0].mxu0
  %v1867 = vadd.f32 0.0, %v1866
  %v1868 = vpop.f32.mrb[0].mxu0
  %1869 = vdwg.mxu0
  %v1870 = vmul.f32 %v1862, 0.25
  %v1871 = vmul.f32 %v1867, 0.25
  %v1872 = vadd.f32 %v1870, %v71
  %v1873 = vadd.f32 %v1871, %v72
  %v1874 = vsel %vm385, %v1872, -inf
  %1875 = vmax.xlane.f32.xlu0 %v1874
  %v1876 = vpop.xlane.xlu0 %1875
  %v1877 = vsel %vm385, %v1873, -inf
  %1878 = vmax.xlane.f32.xlu0 %v1877
  %v1879 = vpop.xlane.xlu0 %1878
  %v1880 = vsub.f32 %v1872, %v1876
  %v1881 = vsub.f32 %v1873, %v1879
  %v1882 = vmul.f32 %v1880, 1.442695
  %v1883 = vpow.pop %v1882
  %v1884 = vmul.f32 %v1881, 1.442695
  %v1885 = vpow.pop %v1884
  %v1886 = vsel %vm385, %v1883, 0.0
  %1887 = vadd.xlane.f32.xlu0 %v1886
  %v1888 = vpop.xlane.xlu0 %1887
  %v1889 = vsel %vm385, %v1885, 0.0
  %1890 = vadd.xlane.f32.xlu0 %v1889
  %v1891 = vpop.xlane.xlu0 %1890
  %v1892 = vrcp.pop %v1888
  %v1893 = vmul.f32 %v1883, %v1892
  %v1894 = vrcp.pop %v1891
  %v1895 = vmul.f32 %v1885, %v1894
  %v1897 = vsel %vm385, %v1893, 0
  %v1900 = vsel %vm385, %v1895, 0
  %1902 = vmatprep.subr.mxu0 0.0
  %1903 = vmatpush1.msra.mxu0 %v1775
  %1904 = vmatprep.subr.mxu0 0.0
  %1905 = vmatpush1.msra.mxu0 %v1780
  %1906 = vmatprep.subr.mxu0 0.0
  %1907 = vmatpush1.msra.mxu0 0.0
  %1908 = vmatprep.subr.mxu0 0.0
  %1909 = vmatpush1.msra.mxu0 0.0
  %1910 = vmatprep.subr.mxu0 0.0
  %1911 = vmatpush1.msra.mxu0 0.0
  %1912 = vmatprep.subr.mxu0 0.0
  %1913 = vmatpush1.msra.mxu0 0.0
  %1914 = vmatprep.subr.mxu0 0.0
  %1915 = vmatpush1.msra.mxu0 0.0
  %1916 = vmatprep.subr.mxu0 0.0
  %1917 = vmatpush1.msra.mxu0 0.0
  %1918 = vmatprep.subr.mxu0 0.0
  %1919 = vmatpush1.msra.mxu0 0.0
  %1920 = vmatprep.subr.mxu0 0.0
  %1921 = vmatpush1.msra.mxu0 0.0
  %1922 = vmatprep.subr.mxu0 0.0
  %1923 = vmatpush1.msra.mxu0 0.0
  %1924 = vmatprep.subr.mxu0 0.0
  %1925 = vmatpush1.msra.mxu0 0.0
  %1926 = vmatprep.subr.mxu0 0.0
  %1927 = vmatpush1.msra.mxu0 0.0
  %1928 = vmatprep.subr.mxu0 0.0
  %1929 = vmatpush1.msra.mxu0 0.0
  %1930 = vmatprep.subr.mxu0 0.0
  %1931 = vmatpush1.msra.mxu0 0.0
  %1932 = vmatprep.subr.mxu0 0.0
  %1933 = vmatpush1.msra.mxu0 0.0
  %1934 = vmatprep.subr.mxu0 0.0
  %1935 = vmatpush1.msra.mxu0 0.0
  %1936 = vmatprep.subr.mxu0 0.0
  %1937 = vmatpush1.msra.mxu0 0.0
  %1938 = vmatprep.subr.mxu0 0.0
  %1939 = vmatpush1.msra.mxu0 0.0
  %1940 = vmatprep.subr.mxu0 0.0
  %1941 = vmatpush1.msra.mxu0 0.0
  %1942 = vmatprep.subr.mxu0 0.0
  %1943 = vmatpush1.msra.mxu0 0.0
  %1944 = vmatprep.subr.mxu0 0.0
  %1945 = vmatpush1.msra.mxu0 0.0
  %1946 = vmatprep.subr.mxu0 0.0
  %1947 = vmatpush1.msra.mxu0 0.0
  %1948 = vmatprep.subr.mxu0 0.0
  %1949 = vmatpush1.msra.mxu0 0.0
  %1950 = vmatprep.subr.mxu0 0.0
  %1951 = vmatpush1.msra.mxu0 0.0
  %1952 = vmatprep.subr.mxu0 0.0
  %1953 = vmatpush1.msra.mxu0 0.0
  %1954 = vmatprep.subr.mxu0 0.0
  %1955 = vmatpush1.msra.mxu0 0.0
  %1956 = vmatprep.subr.mxu0 0.0
  %1957 = vmatpush1.msra.mxu0 0.0
  %1958 = vmatprep.subr.mxu0 0.0
  %1959 = vmatpush1.msra.mxu0 0.0
  %1960 = vmatprep.subr.mxu0 0.0
  %1961 = vmatpush1.msra.mxu0 0.0
  %1962 = vmatprep.subr.mxu0 0.0
  %1963 = vmatpush1.msra.mxu0 0.0
  %1964 = vmatprep.subr.mxu0 0.0
  %1965 = vmatpush1.msra.mxu0 0.0
  %1966 = vmatprep.mubr.f32.mxu0 0.0
  %1967 = vmatmul.mubr.f32.gmra.mrb[0].mxu0 %v1897
  %v1968 = vpop.f32.mrb[0].mxu0
  %v1969 = vadd.f32 0.0, %v1968
  %v1970 = vpop.f32.mrb[0].mxu0
  %1971 = vmatprep.mubr.f32.mxu0 0.0
  %1972 = vmatmul.mubr.f32.gmra.mrb[0].mxu0 %v1900
  %v1973 = vpop.f32.mrb[0].mxu0
  %v1974 = vadd.f32 0.0, %v1973
  %v1975 = vpop.f32.mrb[0].mxu0
  %1976 = vdwg.mxu0
  %s1977 = scalar_lea.vmem %s10, 32
  %v1978 = vld [vmem:[%s1977] sm:$0xff]
  %v1979 = vld [vmem:[%s1977 + $0x8] sm:$0xff]
  %s1980 = scalar_lea.vmem %s4, 96
  %v1981 = vld [vmem:[%s1980] sm:$0xff]
  %v1982 = vld [vmem:[%s1980 + $0x8] sm:$0xff]
  %v1983 = vld [vmem:[%s1980 + $0x10] sm:$0xff]
  %v1984 = vld [vmem:[%s1980 + $0x18] sm:$0xff]
  %s1985 = scalar_lea.vmem %s5, 3
  %v1986 = vld [vmem:[%s1985] sm:$0x1]
  %v1988 = vlaneseq
  %v1989 = vshrl.u32 %v1988, 7
  %v1990 = vsub.s32 0, %v1989
  %v1991 = vrot.slane %v1986, %v1990
  %1993 = vmatprep.subr.mxu0 0.0
  %1994 = vmatpush1.msra.mxu0 %v1981
  %1995 = vmatprep.subr.mxu0 0.0
  %1996 = vmatpush1.msra.mxu0 %v1982
  %1997 = vmatprep.subr.mxu0 0.0
  %1998 = vmatpush1.msra.mxu0 %v1983
  %1999 = vmatprep.subr.mxu0 0.0
  %2000 = vmatpush1.msra.mxu0 %v1984
  %2001 = vmatprep.subr.mxu0 0.0
  %2002 = vmatpush1.msra.mxu0 0.0
  %2003 = vmatprep.subr.mxu0 0.0
  %2004 = vmatpush1.msra.mxu0 0.0
  %2005 = vmatprep.subr.mxu0 0.0
  %2006 = vmatpush1.msra.mxu0 0.0
  %2007 = vmatprep.subr.mxu0 0.0
  %2008 = vmatpush1.msra.mxu0 0.0
  %2009 = vmatprep.subr.mxu0 0.0
  %2010 = vmatpush1.msra.mxu0 0.0
  %2011 = vmatprep.subr.mxu0 0.0
  %2012 = vmatpush1.msra.mxu0 0.0
  %2013 = vmatprep.subr.mxu0 0.0
  %2014 = vmatpush1.msra.mxu0 0.0
  %2015 = vmatprep.subr.mxu0 0.0
  %2016 = vmatpush1.msra.mxu0 0.0
  %2017 = vmatprep.subr.mxu0 0.0
  %2018 = vmatpush1.msra.mxu0 0.0
  %2019 = vmatprep.subr.mxu0 0.0
  %2020 = vmatpush1.msra.mxu0 0.0
  %2021 = vmatprep.subr.mxu0 0.0
  %2022 = vmatpush1.msra.mxu0 0.0
  %2023 = vmatprep.subr.mxu0 0.0
  %2024 = vmatpush1.msra.mxu0 0.0
  %2025 = vmatprep.subr.mxu0 0.0
  %2026 = vmatpush1.msra.mxu0 0.0
  %2027 = vmatprep.subr.mxu0 0.0
  %2028 = vmatpush1.msra.mxu0 0.0
  %2029 = vmatprep.subr.mxu0 0.0
  %2030 = vmatpush1.msra.mxu0 0.0
  %2031 = vmatprep.subr.mxu0 0.0
  %2032 = vmatpush1.msra.mxu0 0.0
  %2033 = vmatprep.subr.mxu0 0.0
  %2034 = vmatpush1.msra.mxu0 0.0
  %2035 = vmatprep.subr.mxu0 0.0
  %2036 = vmatpush1.msra.mxu0 0.0
  %2037 = vmatprep.subr.mxu0 0.0
  %2038 = vmatpush1.msra.mxu0 0.0
  %2039 = vmatprep.subr.mxu0 0.0
  %2040 = vmatpush1.msra.mxu0 0.0
  %2041 = vmatprep.subr.mxu0 0.0
  %2042 = vmatpush1.msra.mxu0 0.0
  %2043 = vmatprep.subr.mxu0 0.0
  %2044 = vmatpush1.msra.mxu0 0.0
  %2045 = vmatprep.subr.mxu0 0.0
  %2046 = vmatpush1.msra.mxu0 0.0
  %2047 = vmatprep.subr.mxu0 0.0
  %2048 = vmatpush1.msra.mxu0 0.0
  %2049 = vmatprep.subr.mxu0 0.0
  %2050 = vmatpush1.msra.mxu0 0.0
  %2051 = vmatprep.subr.mxu0 0.0
  %2052 = vmatpush1.msra.mxu0 0.0
  %2053 = vmatprep.subr.mxu0 0.0
  %2054 = vmatpush1.msra.mxu0 0.0
  %2055 = vmatprep.subr.mxu0 0.0
  %2056 = vmatpush1.msra.mxu0 0.0
  %2057 = vmatprep.mubr.f32.mxu0 0.0
  %2058 = vmatmul.mubr.f32.gmra.mrb[0].mxu0 %v1527
  %v2059 = vpop.f32.mrb[0].mxu0
  %v2060 = vadd.f32 %v1991, %v2059
  %v2061 = vpop.f32.mrb[0].mxu0
  %2062 = vmatprep.mubr.f32.mxu0 0.0
  %2063 = vmatmul.mubr.f32.gmra.mrb[0].mxu0 %v1530
  %v2064 = vpop.f32.mrb[0].mxu0
  %v2065 = vadd.f32 %v1991, %v2064
  %v2066 = vpop.f32.mrb[0].mxu0
  %2067 = vdwg.mxu0
  %s2068 = scalar_lea.vmem %s6, 96
  %v2069 = vld [vmem:[%s2068] sm:$0xff]
  %v2070 = vld [vmem:[%s2068 + $0x8] sm:$0xff]
  %v2071 = vld [vmem:[%s2068 + $0x10] sm:$0xff]
  %v2072 = vld [vmem:[%s2068 + $0x18] sm:$0xff]
  %s2073 = scalar_lea.vmem %s7, 3
  %v2074 = vld [vmem:[%s2073] sm:$0x1]
  %v2076 = vlaneseq
  %v2077 = vshrl.u32 %v2076, 7
  %v2078 = vsub.s32 0, %v2077
  %v2079 = vrot.slane %v2074, %v2078
  %2081 = vmatprep.subr.mxu0 0.0
  %2082 = vmatpush1.msra.mxu0 %v2069
  %2083 = vmatprep.subr.mxu0 0.0
  %2084 = vmatpush1.msra.mxu0 %v2070
  %2085 = vmatprep.subr.mxu0 0.0
  %2086 = vmatpush1.msra.mxu0 %v2071
  %2087 = vmatprep.subr.mxu0 0.0
  %2088 = vmatpush1.msra.mxu0 %v2072
  %2089 = vmatprep.subr.mxu0 0.0
  %2090 = vmatpush1.msra.mxu0 0.0
  %2091 = vmatprep.subr.mxu0 0.0
  %2092 = vmatpush1.msra.mxu0 0.0
  %2093 = vmatprep.subr.mxu0 0.0
  %2094 = vmatpush1.msra.mxu0 0.0
  %2095 = vmatprep.subr.mxu0 0.0
  %2096 = vmatpush1.msra.mxu0 0.0
  %2097 = vmatprep.subr.mxu0 0.0
  %2098 = vmatpush1.msra.mxu0 0.0
  %2099 = vmatprep.subr.mxu0 0.0
  %2100 = vmatpush1.msra.mxu0 0.0
  %2101 = vmatprep.subr.mxu0 0.0
  %2102 = vmatpush1.msra.mxu0 0.0
  %2103 = vmatprep.subr.mxu0 0.0
  %2104 = vmatpush1.msra.mxu0 0.0
  %2105 = vmatprep.subr.mxu0 0.0
  %2106 = vmatpush1.msra.mxu0 0.0
  %2107 = vmatprep.subr.mxu0 0.0
  %2108 = vmatpush1.msra.mxu0 0.0
  %2109 = vmatprep.subr.mxu0 0.0
  %2110 = vmatpush1.msra.mxu0 0.0
  %2111 = vmatprep.subr.mxu0 0.0
  %2112 = vmatpush1.msra.mxu0 0.0
  %2113 = vmatprep.subr.mxu0 0.0
  %2114 = vmatpush1.msra.mxu0 0.0
  %2115 = vmatprep.subr.mxu0 0.0
  %2116 = vmatpush1.msra.mxu0 0.0
  %2117 = vmatprep.subr.mxu0 0.0
  %2118 = vmatpush1.msra.mxu0 0.0
  %2119 = vmatprep.subr.mxu0 0.0
  %2120 = vmatpush1.msra.mxu0 0.0
  %2121 = vmatprep.subr.mxu0 0.0
  %2122 = vmatpush1.msra.mxu0 0.0
  %2123 = vmatprep.subr.mxu0 0.0
  %2124 = vmatpush1.msra.mxu0 0.0
  %2125 = vmatprep.subr.mxu0 0.0
  %2126 = vmatpush1.msra.mxu0 0.0
  %2127 = vmatprep.subr.mxu0 0.0
  %2128 = vmatpush1.msra.mxu0 0.0
  %2129 = vmatprep.subr.mxu0 0.0
  %2130 = vmatpush1.msra.mxu0 0.0
  %2131 = vmatprep.subr.mxu0 0.0
  %2132 = vmatpush1.msra.mxu0 0.0
  %2133 = vmatprep.subr.mxu0 0.0
  %2134 = vmatpush1.msra.mxu0 0.0
  %2135 = vmatprep.subr.mxu0 0.0
  %2136 = vmatpush1.msra.mxu0 0.0
  %2137 = vmatprep.subr.mxu0 0.0
  %2138 = vmatpush1.msra.mxu0 0.0
  %2139 = vmatprep.subr.mxu0 0.0
  %2140 = vmatpush1.msra.mxu0 0.0
  %2141 = vmatprep.subr.mxu0 0.0
  %2142 = vmatpush1.msra.mxu0 0.0
  %2143 = vmatprep.subr.mxu0 0.0
  %2144 = vmatpush1.msra.mxu0 0.0
  %2145 = vmatprep.mubr.f32.mxu0 0.0
  %2146 = vmatmul.mubr.f32.gmra.mrb[0].mxu0 %v1527
  %v2147 = vpop.f32.mrb[0].mxu0
  %v2148 = vadd.f32 %v2079, %v2147
  %v2149 = vpop.f32.mrb[0].mxu0
  %2150 = vmatprep.mubr.f32.mxu0 0.0
  %2151 = vmatmul.mubr.f32.gmra.mrb[0].mxu0 %v1530
  %v2152 = vpop.f32.mrb[0].mxu0
  %v2153 = vadd.f32 %v2079, %v2152
  %v2154 = vpop.f32.mrb[0].mxu0
  %2155 = vdwg.mxu0
  %s2156 = scalar_lea.vmem %s8, 96
  %v2157 = vld [vmem:[%s2156] sm:$0xff]
  %v2158 = vld [vmem:[%s2156 + $0x8] sm:$0xff]
  %v2159 = vld [vmem:[%s2156 + $0x10] sm:$0xff]
  %v2160 = vld [vmem:[%s2156 + $0x18] sm:$0xff]
  %s2161 = scalar_lea.vmem %s9, 3
  %v2162 = vld [vmem:[%s2161] sm:$0x1]
  %v2164 = vlaneseq
  %v2165 = vshrl.u32 %v2164, 7
  %v2166 = vsub.s32 0, %v2165
  %v2167 = vrot.slane %v2162, %v2166
  %2169 = vmatprep.subr.mxu0 0.0
  %2170 = vmatpush1.msra.mxu0 %v2157
  %2171 = vmatprep.subr.mxu0 0.0
  %2172 = vmatpush1.msra.mxu0 %v2158
  %2173 = vmatprep.subr.mxu0 0.0
  %2174 = vmatpush1.msra.mxu0 %v2159
  %2175 = vmatprep.subr.mxu0 0.0
  %2176 = vmatpush1.msra.mxu0 %v2160
  %2177 = vmatprep.subr.mxu0 0.0
  %2178 = vmatpush1.msra.mxu0 0.0
  %2179 = vmatprep.subr.mxu0 0.0
  %2180 = vmatpush1.msra.mxu0 0.0
  %2181 = vmatprep.subr.mxu0 0.0
  %2182 = vmatpush1.msra.mxu0 0.0
  %2183 = vmatprep.subr.mxu0 0.0
  %2184 = vmatpush1.msra.mxu0 0.0
  %2185 = vmatprep.subr.mxu0 0.0
  %2186 = vmatpush1.msra.mxu0 0.0
  %2187 = vmatprep.subr.mxu0 0.0
  %2188 = vmatpush1.msra.mxu0 0.0
  %2189 = vmatprep.subr.mxu0 0.0
  %2190 = vmatpush1.msra.mxu0 0.0
  %2191 = vmatprep.subr.mxu0 0.0
  %2192 = vmatpush1.msra.mxu0 0.0
  %2193 = vmatprep.subr.mxu0 0.0
  %2194 = vmatpush1.msra.mxu0 0.0
  %2195 = vmatprep.subr.mxu0 0.0
  %2196 = vmatpush1.msra.mxu0 0.0
  %2197 = vmatprep.subr.mxu0 0.0
  %2198 = vmatpush1.msra.mxu0 0.0
  %2199 = vmatprep.subr.mxu0 0.0
  %2200 = vmatpush1.msra.mxu0 0.0
  %2201 = vmatprep.subr.mxu0 0.0
  %2202 = vmatpush1.msra.mxu0 0.0
  %2203 = vmatprep.subr.mxu0 0.0
  %2204 = vmatpush1.msra.mxu0 0.0
  %2205 = vmatprep.subr.mxu0 0.0
  %2206 = vmatpush1.msra.mxu0 0.0
  %2207 = vmatprep.subr.mxu0 0.0
  %2208 = vmatpush1.msra.mxu0 0.0
  %2209 = vmatprep.subr.mxu0 0.0
  %2210 = vmatpush1.msra.mxu0 0.0
  %2211 = vmatprep.subr.mxu0 0.0
  %2212 = vmatpush1.msra.mxu0 0.0
  %2213 = vmatprep.subr.mxu0 0.0
  %2214 = vmatpush1.msra.mxu0 0.0
  %2215 = vmatprep.subr.mxu0 0.0
  %2216 = vmatpush1.msra.mxu0 0.0
  %2217 = vmatprep.subr.mxu0 0.0
  %2218 = vmatpush1.msra.mxu0 0.0
  %2219 = vmatprep.subr.mxu0 0.0
  %2220 = vmatpush1.msra.mxu0 0.0
  %2221 = vmatprep.subr.mxu0 0.0
  %2222 = vmatpush1.msra.mxu0 0.0
  %2223 = vmatprep.subr.mxu0 0.0
  %2224 = vmatpush1.msra.mxu0 0.0
  %2225 = vmatprep.subr.mxu0 0.0
  %2226 = vmatpush1.msra.mxu0 0.0
  %2227 = vmatprep.subr.mxu0 0.0
  %2228 = vmatpush1.msra.mxu0 0.0
  %2229 = vmatprep.subr.mxu0 0.0
  %2230 = vmatpush1.msra.mxu0 0.0
  %2231 = vmatprep.subr.mxu0 0.0
  %2232 = vmatpush1.msra.mxu0 0.0
  %2233 = vmatprep.mubr.f32.mxu0 0.0
  %2234 = vmatmul.mubr.f32.gmra.mrb[0].mxu0 %v1527
  %v2235 = vpop.f32.mrb[0].mxu0
  %v2236 = vadd.f32 %v2167, %v2235
  %v2237 = vpop.f32.mrb[0].mxu0
  %2238 = vmatprep.mubr.f32.mxu0 0.0
  %2239 = vmatmul.mubr.f32.gmra.mrb[0].mxu0 %v1530
  %v2240 = vpop.f32.mrb[0].mxu0
  %v2241 = vadd.f32 %v2167, %v2240
  %v2242 = vpop.f32.mrb[0].mxu0
  %2243 = vdwg.mxu0
  %v2245 = vsel %vm385, %v2060, 0
  %v2248 = vsel %vm385, %v2065, 0
  %v2251 = vsel %vm385, %v2148, 0
  %v2254 = vsel %vm385, %v2153, 0
  %2256 = vmatprep.subr.mxu0 0.0
  %2257 = vmatpush1.xpose.msra.mxu0 %v2251
  %2258 = vmatprep.subr.mxu0 0.0
  %2259 = vmatpush1.xpose.msra.mxu0 %v2254
  %2260 = vmatprep.subr.mxu0 0.0
  %2261 = vmatpush1.xpose.msra.mxu0 0.0
  %2262 = vmatprep.subr.mxu0 0.0
  %2263 = vmatpush1.xpose.msra.mxu0 0.0
  %2264 = vmatprep.subr.mxu0 0.0
  %2265 = vmatpush1.xpose.msra.mxu0 0.0
  %2266 = vmatprep.subr.mxu0 0.0
  %2267 = vmatpush1.xpose.msra.mxu0 0.0
  %2268 = vmatprep.subr.mxu0 0.0
  %2269 = vmatpush1.xpose.msra.mxu0 0.0
  %2270 = vmatprep.subr.mxu0 0.0
  %2271 = vmatpush1.xpose.msra.mxu0 0.0
  %2272 = vmatprep.subr.mxu0 0.0
  %2273 = vmatpush1.xpose.msra.mxu0 0.0
  %2274 = vmatprep.subr.mxu0 0.0
  %2275 = vmatpush1.xpose.msra.mxu0 0.0
  %2276 = vmatprep.subr.mxu0 0.0
  %2277 = vmatpush1.xpose.msra.mxu0 0.0
  %2278 = vmatprep.subr.mxu0 0.0
  %2279 = vmatpush1.xpose.msra.mxu0 0.0
  %2280 = vmatprep.subr.mxu0 0.0
  %2281 = vmatpush1.xpose.msra.mxu0 0.0
  %2282 = vmatprep.subr.mxu0 0.0
  %2283 = vmatpush1.xpose.msra.mxu0 0.0
  %2284 = vmatprep.subr.mxu0 0.0
  %2285 = vmatpush1.xpose.msra.mxu0 0.0
  %2286 = vmatprep.subr.mxu0 0.0
  %2287 = vmatpush1.xpose.msra.mxu0 0.0
  %2288 = vmatprep.subr.mxu0 0.0
  %2289 = vmatpush1.xpose.msra.mxu0 0.0
  %2290 = vmatprep.subr.mxu0 0.0
  %2291 = vmatpush1.xpose.msra.mxu0 0.0
  %2292 = vmatprep.subr.mxu0 0.0
  %2293 = vmatpush1.xpose.msra.mxu0 0.0
  %2294 = vmatprep.subr.mxu0 0.0
  %2295 = vmatpush1.xpose.msra.mxu0 0.0
  %2296 = vmatprep.subr.mxu0 0.0
  %2297 = vmatpush1.xpose.msra.mxu0 0.0
  %2298 = vmatprep.subr.mxu0 0.0
  %2299 = vmatpush1.xpose.msra.mxu0 0.0
  %2300 = vmatprep.subr.mxu0 0.0
  %2301 = vmatpush1.xpose.msra.mxu0 0.0
  %2302 = vmatprep.subr.mxu0 0.0
  %2303 = vmatpush1.xpose.msra.mxu0 0.0
  %2304 = vmatprep.subr.mxu0 0.0
  %2305 = vmatpush1.xpose.msra.mxu0 0.0
  %2306 = vmatprep.subr.mxu0 0.0
  %2307 = vmatpush1.xpose.msra.mxu0 0.0
  %2308 = vmatprep.subr.mxu0 0.0
  %2309 = vmatpush1.xpose.msra.mxu0 0.0
  %2310 = vmatprep.subr.mxu0 0.0
  %2311 = vmatpush1.xpose.msra.mxu0 0.0
  %2312 = vmatprep.subr.mxu0 0.0
  %2313 = vmatpush1.xpose.msra.mxu0 0.0
  %2314 = vmatprep.subr.mxu0 0.0
  %2315 = vmatpush1.xpose.msra.mxu0 0.0
  %2316 = vmatprep.subr.mxu0 0.0
  %2317 = vmatpush1.xpose.msra.mxu0 0.0
  %2318 = vmatprep.subr.mxu0 0.0
  %2319 = vmatpush1.xpose.msra.mxu0 0.0
  %2320 = vmatprep.mubr.f32.mxu0 0.0
  %2321 = vmatmul.mubr.f32.gmra.mrb[0].mxu0 %v2245
  %v2322 = vpop.f32.mrb[0].mxu0
  %v2323 = vadd.f32 0.0, %v2322
  %v2324 = vpop.f32.mrb[0].mxu0
  %2325 = vmatprep.mubr.f32.mxu0 0.0
  %2326 = vmatmul.mubr.f32.gmra.mrb[0].mxu0 %v2248
  %v2327 = vpop.f32.mrb[0].mxu0
  %v2328 = vadd.f32 0.0, %v2327
  %v2329 = vpop.f32.mrb[0].mxu0
  %2330 = vdwg.mxu0
  %v2331 = vmul.f32 %v2323, 0.25
  %v2332 = vmul.f32 %v2328, 0.25
  %v2333 = vadd.f32 %v2331, %v71
  %v2334 = vadd.f32 %v2332, %v72
  %v2335 = vsel %vm385, %v2333, -inf
  %2336 = vmax.xlane.f32.xlu0 %v2335
  %v2337 = vpop.xlane.xlu0 %2336
  %v2338 = vsel %vm385, %v2334, -inf
  %2339 = vmax.xlane.f32.xlu0 %v2338
  %v2340 = vpop.xlane.xlu0 %2339
  %v2341 = vsub.f32 %v2333, %v2337
  %v2342 = vsub.f32 %v2334, %v2340
  %v2343 = vmul.f32 %v2341, 1.442695
  %v2344 = vpow.pop %v2343
  %v2345 = vmul.f32 %v2342, 1.442695
  %v2346 = vpow.pop %v2345
  %v2347 = vsel %vm385, %v2344, 0.0
  %2348 = vadd.xlane.f32.xlu0 %v2347
  %v2349 = vpop.xlane.xlu0 %2348
  %v2350 = vsel %vm385, %v2346, 0.0
  %2351 = vadd.xlane.f32.xlu0 %v2350
  %v2352 = vpop.xlane.xlu0 %2351
  %v2353 = vrcp.pop %v2349
  %v2354 = vmul.f32 %v2344, %v2353
  %v2355 = vrcp.pop %v2352
  %v2356 = vmul.f32 %v2346, %v2355
  %v2358 = vsel %vm385, %v2354, 0
  %v2361 = vsel %vm385, %v2356, 0
  %2363 = vmatprep.subr.mxu0 0.0
  %2364 = vmatpush1.msra.mxu0 %v2236
  %2365 = vmatprep.subr.mxu0 0.0
  %2366 = vmatpush1.msra.mxu0 %v2241
  %2367 = vmatprep.subr.mxu0 0.0
  %2368 = vmatpush1.msra.mxu0 0.0
  %2369 = vmatprep.subr.mxu0 0.0
  %2370 = vmatpush1.msra.mxu0 0.0
  %2371 = vmatprep.subr.mxu0 0.0
  %2372 = vmatpush1.msra.mxu0 0.0
  %2373 = vmatprep.subr.mxu0 0.0
  %2374 = vmatpush1.msra.mxu0 0.0
  %2375 = vmatprep.subr.mxu0 0.0
  %2376 = vmatpush1.msra.mxu0 0.0
  %2377 = vmatprep.subr.mxu0 0.0
  %2378 = vmatpush1.msra.mxu0 0.0
  %2379 = vmatprep.subr.mxu0 0.0
  %2380 = vmatpush1.msra.mxu0 0.0
  %2381 = vmatprep.subr.mxu0 0.0
  %2382 = vmatpush1.msra.mxu0 0.0
  %2383 = vmatprep.subr.mxu0 0.0
  %2384 = vmatpush1.msra.mxu0 0.0
  %2385 = vmatprep.subr.mxu0 0.0
  %2386 = vmatpush1.msra.mxu0 0.0
  %2387 = vmatprep.subr.mxu0 0.0
  %2388 = vmatpush1.msra.mxu0 0.0
  %2389 = vmatprep.subr.mxu0 0.0
  %2390 = vmatpush1.msra.mxu0 0.0
  %2391 = vmatprep.subr.mxu0 0.0
  %2392 = vmatpush1.msra.mxu0 0.0
  %2393 = vmatprep.subr.mxu0 0.0
  %2394 = vmatpush1.msra.mxu0 0.0
  %2395 = vmatprep.subr.mxu0 0.0
  %2396 = vmatpush1.msra.mxu0 0.0
  %2397 = vmatprep.subr.mxu0 0.0
  %2398 = vmatpush1.msra.mxu0 0.0
  %2399 = vmatprep.subr.mxu0 0.0
  %2400 = vmatpush1.msra.mxu0 0.0
  %2401 = vmatprep.subr.mxu0 0.0
  %2402 = vmatpush1.msra.mxu0 0.0
  %2403 = vmatprep.subr.mxu0 0.0
  %2404 = vmatpush1.msra.mxu0 0.0
  %2405 = vmatprep.subr.mxu0 0.0
  %2406 = vmatpush1.msra.mxu0 0.0
  %2407 = vmatprep.subr.mxu0 0.0
  %2408 = vmatpush1.msra.mxu0 0.0
  %2409 = vmatprep.subr.mxu0 0.0
  %2410 = vmatpush1.msra.mxu0 0.0
  %2411 = vmatprep.subr.mxu0 0.0
  %2412 = vmatpush1.msra.mxu0 0.0
  %2413 = vmatprep.subr.mxu0 0.0
  %2414 = vmatpush1.msra.mxu0 0.0
  %2415 = vmatprep.subr.mxu0 0.0
  %2416 = vmatpush1.msra.mxu0 0.0
  %2417 = vmatprep.subr.mxu0 0.0
  %2418 = vmatpush1.msra.mxu0 0.0
  %2419 = vmatprep.subr.mxu0 0.0
  %2420 = vmatpush1.msra.mxu0 0.0
  %2421 = vmatprep.subr.mxu0 0.0
  %2422 = vmatpush1.msra.mxu0 0.0
  %2423 = vmatprep.subr.mxu0 0.0
  %2424 = vmatpush1.msra.mxu0 0.0
  %2425 = vmatprep.subr.mxu0 0.0
  %2426 = vmatpush1.msra.mxu0 0.0
  %2427 = vmatprep.mubr.f32.mxu0 0.0
  %2428 = vmatmul.mubr.f32.gmra.mrb[0].mxu0 %v2358
  %v2429 = vpop.f32.mrb[0].mxu0
  %v2430 = vadd.f32 0.0, %v2429
  %v2431 = vpop.f32.mrb[0].mxu0
  %2432 = vmatprep.mubr.f32.mxu0 0.0
  %2433 = vmatmul.mubr.f32.gmra.mrb[0].mxu0 %v2361
  %v2434 = vpop.f32.mrb[0].mxu0
  %v2435 = vadd.f32 0.0, %v2434
  %v2436 = vpop.f32.mrb[0].mxu0
  %2437 = vdwg.mxu0
  %s2438 = scalar_lea.vmem %s10, 48
  %v2439 = vld [vmem:[%s2438] sm:$0xff]
  %v2440 = vld [vmem:[%s2438 + $0x8] sm:$0xff]
  %v2442 = vsel %vm385, %v2430, 0
  %v2445 = vsel %vm385, %v2435, 0
  %2447 = vmatprep.subr.mxu0 0.0
  %2448 = vmatpush1.msra.mxu0 %v2439
  %2449 = vmatprep.subr.mxu0 0.0
  %2450 = vmatpush1.msra.mxu0 %v2440
  %2451 = vmatprep.subr.mxu0 0.0
  %2452 = vmatpush1.msra.mxu0 0.0
  %2453 = vmatprep.subr.mxu0 0.0
  %2454 = vmatpush1.msra.mxu0 0.0
  %2455 = vmatprep.subr.mxu0 0.0
  %2456 = vmatpush1.msra.mxu0 0.0
  %2457 = vmatprep.subr.mxu0 0.0
  %2458 = vmatpush1.msra.mxu0 0.0
  %2459 = vmatprep.subr.mxu0 0.0
  %2460 = vmatpush1.msra.mxu0 0.0
  %2461 = vmatprep.subr.mxu0 0.0
  %2462 = vmatpush1.msra.mxu0 0.0
  %2463 = vmatprep.subr.mxu0 0.0
  %2464 = vmatpush1.msra.mxu0 0.0
  %2465 = vmatprep.subr.mxu0 0.0
  %2466 = vmatpush1.msra.mxu0 0.0
  %2467 = vmatprep.subr.mxu0 0.0
  %2468 = vmatpush1.msra.mxu0 0.0
  %2469 = vmatprep.subr.mxu0 0.0
  %2470 = vmatpush1.msra.mxu0 0.0
  %2471 = vmatprep.subr.mxu0 0.0
  %2472 = vmatpush1.msra.mxu0 0.0
  %2473 = vmatprep.subr.mxu0 0.0
  %2474 = vmatpush1.msra.mxu0 0.0
  %2475 = vmatprep.subr.mxu0 0.0
  %2476 = vmatpush1.msra.mxu0 0.0
  %2477 = vmatprep.subr.mxu0 0.0
  %2478 = vmatpush1.msra.mxu0 0.0
  %2479 = vmatprep.subr.mxu0 0.0
  %2480 = vmatpush1.msra.mxu0 0.0
  %2481 = vmatprep.subr.mxu0 0.0
  %2482 = vmatpush1.msra.mxu0 0.0
  %2483 = vmatprep.subr.mxu0 0.0
  %2484 = vmatpush1.msra.mxu0 0.0
  %2485 = vmatprep.subr.mxu0 0.0
  %2486 = vmatpush1.msra.mxu0 0.0
  %2487 = vmatprep.subr.mxu0 0.0
  %2488 = vmatpush1.msra.mxu0 0.0
  %2489 = vmatprep.subr.mxu0 0.0
  %2490 = vmatpush1.msra.mxu0 0.0
  %2491 = vmatprep.subr.mxu0 0.0
  %2492 = vmatpush1.msra.mxu0 0.0
  %2493 = vmatprep.subr.mxu0 0.0
  %2494 = vmatpush1.msra.mxu0 0.0
  %2495 = vmatprep.subr.mxu0 0.0
  %2496 = vmatpush1.msra.mxu0 0.0
  %2497 = vmatprep.subr.mxu0 0.0
  %2498 = vmatpush1.msra.mxu0 0.0
  %2499 = vmatprep.subr.mxu0 0.0
  %2500 = vmatpush1.msra.mxu0 0.0
  %2501 = vmatprep.subr.mxu0 0.0
  %2502 = vmatpush1.msra.mxu0 0.0
  %2503 = vmatprep.subr.mxu0 0.0
  %2504 = vmatpush1.msra.mxu0 0.0
  %2505 = vmatprep.subr.mxu0 0.0
  %2506 = vmatpush1.msra.mxu0 0.0
  %2507 = vmatprep.subr.mxu0 0.0
  %2508 = vmatpush1.msra.mxu0 0.0
  %2509 = vmatprep.subr.mxu0 0.0
  %2510 = vmatpush1.msra.mxu0 0.0
  %2511 = vmatprep.mubr.f32.mxu0 0.0
  %2512 = vmatmul.mubr.f32.gmra.mrb[0].mxu0 %v2442
  %v2513 = vpop.f32.mrb[0].mxu0
  %v2514 = vadd.f32 0.0, %v2513
  %v2515 = vpop.f32.mrb[0].mxu0
  %2516 = vmatprep.mubr.f32.mxu0 0.0
  %2517 = vmatmul.mubr.f32.gmra.mrb[0].mxu0 %v2445
  %v2518 = vpop.f32.mrb[0].mxu0
  %v2519 = vadd.f32 0.0, %v2518
  %v2520 = vpop.f32.mrb[0].mxu0
  %2521 = vdwg.mxu0
  %v2523 = vsel %vm385, %v1969, 0
  %v2526 = vsel %vm385, %v1974, 0
  %2528 = vmatprep.subr.mxu0 0.0
  %2529 = vmatpush1.msra.mxu0 %v1978
  %2530 = vmatprep.subr.mxu0 0.0
  %2531 = vmatpush1.msra.mxu0 %v1979
  %2532 = vmatprep.subr.mxu0 0.0
  %2533 = vmatpush1.msra.mxu0 0.0
  %2534 = vmatprep.subr.mxu0 0.0
  %2535 = vmatpush1.msra.mxu0 0.0
  %2536 = vmatprep.subr.mxu0 0.0
  %2537 = vmatpush1.msra.mxu0 0.0
  %2538 = vmatprep.subr.mxu0 0.0
  %2539 = vmatpush1.msra.mxu0 0.0
  %2540 = vmatprep.subr.mxu0 0.0
  %2541 = vmatpush1.msra.mxu0 0.0
  %2542 = vmatprep.subr.mxu0 0.0
  %2543 = vmatpush1.msra.mxu0 0.0
  %2544 = vmatprep.subr.mxu0 0.0
  %2545 = vmatpush1.msra.mxu0 0.0
  %2546 = vmatprep.subr.mxu0 0.0
  %2547 = vmatpush1.msra.mxu0 0.0
  %2548 = vmatprep.subr.mxu0 0.0
  %2549 = vmatpush1.msra.mxu0 0.0
  %2550 = vmatprep.subr.mxu0 0.0
  %2551 = vmatpush1.msra.mxu0 0.0
  %2552 = vmatprep.subr.mxu0 0.0
  %2553 = vmatpush1.msra.mxu0 0.0
  %2554 = vmatprep.subr.mxu0 0.0
  %2555 = vmatpush1.msra.mxu0 0.0
  %2556 = vmatprep.subr.mxu0 0.0
  %2557 = vmatpush1.msra.mxu0 0.0
  %2558 = vmatprep.subr.mxu0 0.0
  %2559 = vmatpush1.msra.mxu0 0.0
  %2560 = vmatprep.subr.mxu0 0.0
  %2561 = vmatpush1.msra.mxu0 0.0
  %2562 = vmatprep.subr.mxu0 0.0
  %2563 = vmatpush1.msra.mxu0 0.0
  %2564 = vmatprep.subr.mxu0 0.0
  %2565 = vmatpush1.msra.mxu0 0.0
  %2566 = vmatprep.subr.mxu0 0.0
  %2567 = vmatpush1.msra.mxu0 0.0
  %2568 = vmatprep.subr.mxu0 0.0
  %2569 = vmatpush1.msra.mxu0 0.0
  %2570 = vmatprep.subr.mxu0 0.0
  %2571 = vmatpush1.msra.mxu0 0.0
  %2572 = vmatprep.subr.mxu0 0.0
  %2573 = vmatpush1.msra.mxu0 0.0
  %2574 = vmatprep.subr.mxu0 0.0
  %2575 = vmatpush1.msra.mxu0 0.0
  %2576 = vmatprep.subr.mxu0 0.0
  %2577 = vmatpush1.msra.mxu0 0.0
  %2578 = vmatprep.subr.mxu0 0.0
  %2579 = vmatpush1.msra.mxu0 0.0
  %2580 = vmatprep.subr.mxu0 0.0
  %2581 = vmatpush1.msra.mxu0 0.0
  %2582 = vmatprep.subr.mxu0 0.0
  %2583 = vmatpush1.msra.mxu0 0.0
  %2584 = vmatprep.subr.mxu0 0.0
  %2585 = vmatpush1.msra.mxu0 0.0
  %2586 = vmatprep.subr.mxu0 0.0
  %2587 = vmatpush1.msra.mxu0 0.0
  %2588 = vmatprep.subr.mxu0 0.0
  %2589 = vmatpush1.msra.mxu0 0.0
  %2590 = vmatprep.subr.mxu0 0.0
  %2591 = vmatpush1.msra.mxu0 0.0
  %2592 = vmatprep.mubr.f32.mxu0 0.0
  %2593 = vmatmul.mubr.f32.gmra.mrb[0].mxu0 %v2523
  %v2594 = vpop.f32.mrb[0].mxu0
  %v2595 = vadd.f32 %v2514, %v2594
  %v2596 = vpop.f32.mrb[0].mxu0
  %2597 = vmatprep.mubr.f32.mxu0 0.0
  %2598 = vmatmul.mubr.f32.gmra.mrb[0].mxu0 %v2526
  %v2599 = vpop.f32.mrb[0].mxu0
  %v2600 = vadd.f32 %v2519, %v2599
  %v2601 = vpop.f32.mrb[0].mxu0
  %2602 = vdwg.mxu0
  %s2603 = scalar_lea.vmem %s11, 1
  %v2604 = vld [vmem:[%s2603] sm:$0x1]
  %v2606 = vlaneseq
  %v2607 = vshrl.u32 %v2606, 7
  %v2608 = vsub.s32 0, %v2607
  %v2609 = vrot.slane %v2604, %v2608
  %v2611 = vadd.f32 %v2595, %v2609
  %v2612 = vadd.f32 %v2600, %v2609
  %v2613 = vadd.f32 %v1511, %v2611
  %v2614 = vadd.f32 %v1512, %v2612
  %s2615 = scalar_lea.vmem %s12, 1
  %v2616 = vld [vmem:[%s2615] sm:$0x1]
  %s2617 = scalar_lea.vmem %s13, 1
  %v2618 = vld [vmem:[%s2617] sm:$0x1]
  %v2619 = vsel %vm77, %v2613, 0.0
  %2620 = vadd.xlane.f32.xlu0 %v2619
  %v2621 = vpop.xlane.xlu0 %2620
  %v2622 = vsel %vm77, %v2614, 0.0
  %2623 = vadd.xlane.f32.xlu0 %v2622
  %v2624 = vpop.xlane.xlu0 %2623
  %v2625 = vmul.f32 %v2621, %v84
  %v2626 = vmul.f32 %v2624, %v84
  %v2627 = vsub.f32 %v2613, %v2625
  %v2628 = vsub.f32 %v2614, %v2626
  %v2629 = vmul.f32 %v2627, %v2627
  %v2630 = vmul.f32 %v2628, %v2628
  %v2631 = vsel %vm77, %v2629, 0.0
  %2632 = vadd.xlane.f32.xlu0 %v2631
  %v2633 = vpop.xlane.xlu0 %2632
  %v2634 = vsel %vm77, %v2630, 0.0
  %2635 = vadd.xlane.f32.xlu0 %v2634
  %v2636 = vpop.xlane.xlu0 %2635
  %v2637 = vmul.f32 %v2633, %v84
  %v2638 = vmul.f32 %v2636, %v84
  %v2639 = vadd.f32 %v2637, 1e-12
  %v2640 = vadd.f32 %v2638, 1e-12
  %v2641 = vrsqrt.pop %v2639
  %v2642 = vrsqrt.pop %v2640
  %v2643 = vmul.f32 %v2627, %v2641
  %v2644 = vmul.f32 %v2628, %v2642
  %v2646 = vlaneseq
  %v2647 = vshrl.u32 %v2646, 7
  %v2648 = vsub.s32 0, %v2647
  %v2649 = vrot.slane %v2616, %v2648
  %v2651 = vmul.f32 %v2643, %v2649
  %v2652 = vmul.f32 %v2644, %v2649
  %v2654 = vlaneseq
  %v2655 = vshrl.u32 %v2654, 7
  %v2656 = vsub.s32 0, %v2655
  %v2657 = vrot.slane %v2618, %v2656
  %v2659 = vadd.f32 %v2651, %v2657
  %v2660 = vadd.f32 %v2652, %v2657
  %s2661 = scalar_lea.vmem %s14, 32
  %v2662 = vld [vmem:[%s2661] sm:$0xff]
  %v2663 = vld [vmem:[%s2661 + $0x8] sm:$0xff]
  %v2664 = vld [vmem:[%s2661 + $0x10] sm:$0xff]
  %v2665 = vld [vmem:[%s2661 + $0x18] sm:$0xff]
  %s2666 = scalar_lea.vmem %s15, 1
  %v2667 = vld [vmem:[%s2666] sm:$0x1]
  %v2669 = vlaneseq
  %v2670 = vshrl.u32 %v2669, 7
  %v2671 = vsub.s32 0, %v2670
  %v2672 = vrot.slane %v2667, %v2671
  %v2675 = vsel %vm77, %v2659, 0
  %v2678 = vsel %vm77, %v2660, 0
  %2680 = vmatprep.subr.mxu0 0.0
  %2681 = vmatpush1.msra.mxu0 %v2662
  %2682 = vmatprep.subr.mxu0 0.0
  %2683 = vmatpush1.msra.mxu0 %v2663
  %2684 = vmatprep.subr.mxu0 0.0
  %2685 = vmatpush1.msra.mxu0 %v2664
  %2686 = vmatprep.subr.mxu0 0.0
  %2687 = vmatpush1.msra.mxu0 %v2665
  %2688 = vmatprep.subr.mxu0 0.0
  %2689 = vmatpush1.msra.mxu0 0.0
  %2690 = vmatprep.subr.mxu0 0.0
  %2691 = vmatpush1.msra.mxu0 0.0
  %2692 = vmatprep.subr.mxu0 0.0
  %2693 = vmatpush1.msra.mxu0 0.0
  %2694 = vmatprep.subr.mxu0 0.0
  %2695 = vmatpush1.msra.mxu0 0.0
  %2696 = vmatprep.subr.mxu0 0.0
  %2697 = vmatpush1.msra.mxu0 0.0
  %2698 = vmatprep.subr.mxu0 0.0
  %2699 = vmatpush1.msra.mxu0 0.0
  %2700 = vmatprep.subr.mxu0 0.0
  %2701 = vmatpush1.msra.mxu0 0.0
  %2702 = vmatprep.subr.mxu0 0.0
  %2703 = vmatpush1.msra.mxu0 0.0
  %2704 = vmatprep.subr.mxu0 0.0
  %2705 = vmatpush1.msra.mxu0 0.0
  %2706 = vmatprep.subr.mxu0 0.0
  %2707 = vmatpush1.msra.mxu0 0.0
  %2708 = vmatprep.subr.mxu0 0.0
  %2709 = vmatpush1.msra.mxu0 0.0
  %2710 = vmatprep.subr.mxu0 0.0
  %2711 = vmatpush1.msra.mxu0 0.0
  %2712 = vmatprep.subr.mxu0 0.0
  %2713 = vmatpush1.msra.mxu0 0.0
  %2714 = vmatprep.subr.mxu0 0.0
  %2715 = vmatpush1.msra.mxu0 0.0
  %2716 = vmatprep.subr.mxu0 0.0
  %2717 = vmatpush1.msra.mxu0 0.0
  %2718 = vmatprep.subr.mxu0 0.0
  %2719 = vmatpush1.msra.mxu0 0.0
  %2720 = vmatprep.subr.mxu0 0.0
  %2721 = vmatpush1.msra.mxu0 0.0
  %2722 = vmatprep.subr.mxu0 0.0
  %2723 = vmatpush1.msra.mxu0 0.0
  %2724 = vmatprep.subr.mxu0 0.0
  %2725 = vmatpush1.msra.mxu0 0.0
  %2726 = vmatprep.subr.mxu0 0.0
  %2727 = vmatpush1.msra.mxu0 0.0
  %2728 = vmatprep.subr.mxu0 0.0
  %2729 = vmatpush1.msra.mxu0 0.0
  %2730 = vmatprep.subr.mxu0 0.0
  %2731 = vmatpush1.msra.mxu0 0.0
  %2732 = vmatprep.subr.mxu0 0.0
  %2733 = vmatpush1.msra.mxu0 0.0
  %2734 = vmatprep.subr.mxu0 0.0
  %2735 = vmatpush1.msra.mxu0 0.0
  %2736 = vmatprep.subr.mxu0 0.0
  %2737 = vmatpush1.msra.mxu0 0.0
  %2738 = vmatprep.subr.mxu0 0.0
  %2739 = vmatpush1.msra.mxu0 0.0
  %2740 = vmatprep.subr.mxu0 0.0
  %2741 = vmatpush1.msra.mxu0 0.0
  %2742 = vmatprep.subr.mxu0 0.0
  %2743 = vmatpush1.msra.mxu0 0.0
  %2744 = vmatprep.mubr.f32.mxu0 0.0
  %2745 = vmatmul.mubr.f32.gmra.mrb[0].mxu0 %v2675
  %v2746 = vpop.f32.mrb[0].mxu0
  %v2747 = vadd.f32 %v2672, %v2746
  %v2748 = vpop.f32.mrb[0].mxu0
  %2749 = vmatprep.mubr.f32.mxu0 0.0
  %2750 = vmatmul.mubr.f32.gmra.mrb[0].mxu0 %v2678
  %v2751 = vpop.f32.mrb[0].mxu0
  %v2752 = vadd.f32 %v2672, %v2751
  %v2753 = vpop.f32.mrb[0].mxu0
  %2754 = vdwg.mxu0
  %v2755 = vmul.f32 %v2747, 0.5
  %v2756 = vmul.f32 %v2752, 0.5
  %v2757 = vmul.f32 %v2747, 0.044715
  %v2758 = vmul.f32 %v2752, 0.044715
  %v2759 = vmul.f32 %v2757, %v2747
  %v2760 = vmul.f32 %v2758, %v2752
  %v2761 = vmul.f32 %v2759, %v2747
  %v2762 = vmul.f32 %v2760, %v2752
  %v2763 = vadd.f32 %v2747, %v2761
  %v2764 = vadd.f32 %v2752, %v2762
  %v2765 = vmul.f32 %v2763, 0.7978846
  %v2766 = vmul.f32 %v2764, 0.7978846
  %v2767 = vtanh.pop %v2765
  %v2768 = vtanh.pop %v2766
  %v2769 = vadd.f32 %v2767, 1.0
  %v2770 = vadd.f32 %v2768, 1.0
  %v2771 = vmul.f32 %v2755, %v2769
  %v2772 = vmul.f32 %v2756, %v2770
  %s2773 = scalar_lea.vmem %s16, 64
  %v2774 = vld [vmem:[%s2773] sm:$0xff]
  %v2775 = vld [vmem:[%s2773 + $0x8] sm:$0xff]
  %v2776 = vld [vmem:[%s2773 + $0x10] sm:$0xff]
  %v2777 = vld [vmem:[%s2773 + $0x18] sm:$0xff]
  %v2778 = vld [vmem:[%s2773 + $0x20] sm:$0xff]
  %v2779 = vld [vmem:[%s2773 + $0x28] sm:$0xff]
  %v2780 = vld [vmem:[%s2773 + $0x30] sm:$0xff]
  %v2781 = vld [vmem:[%s2773 + $0x38] sm:$0xff]
  %s2782 = scalar_lea.vmem %s17, 1
  %v2783 = vld [vmem:[%s2782] sm:$0x1]
  %v2785 = vlaneseq
  %v2786 = vshrl.u32 %v2785, 7
  %v2787 = vsub.s32 0, %v2786
  %v2788 = vrot.slane %v2783, %v2787
  %v2791 = vsel %vm1385, %v2771, 0
  %v2794 = vsel %vm1385, %v2772, 0
  %2796 = vmatprep.subr.mxu0 0.0
  %2797 = vmatpush1.msra.mxu0 %v2774
  %2798 = vmatprep.subr.mxu0 0.0
  %2799 = vmatpush1.msra.mxu0 %v2775
  %2800 = vmatprep.subr.mxu0 0.0
  %2801 = vmatpush1.msra.mxu0 %v2776
  %2802 = vmatprep.subr.mxu0 0.0
  %2803 = vmatpush1.msra.mxu0 %v2777
  %2804 = vmatprep.subr.mxu0 0.0
  %2805 = vmatpush1.msra.mxu0 %v2778
  %2806 = vmatprep.subr.mxu0 0.0
  %2807 = vmatpush1.msra.mxu0 %v2779
  %2808 = vmatprep.subr.mxu0 0.0
  %2809 = vmatpush1.msra.mxu0 %v2780
  %2810 = vmatprep.subr.mxu0 0.0
  %2811 = vmatpush1.msra.mxu0 %v2781
  %2812 = vmatprep.subr.mxu0 0.0
  %2813 = vmatpush1.msra.mxu0 0.0
  %2814 = vmatprep.subr.mxu0 0.0
  %2815 = vmatpush1.msra.mxu0 0.0
  %2816 = vmatprep.subr.mxu0 0.0
  %2817 = vmatpush1.msra.mxu0 0.0
  %2818 = vmatprep.subr.mxu0 0.0
  %2819 = vmatpush1.msra.mxu0 0.0
  %2820 = vmatprep.subr.mxu0 0.0
  %2821 = vmatpush1.msra.mxu0 0.0
  %2822 = vmatprep.subr.mxu0 0.0
  %2823 = vmatpush1.msra.mxu0 0.0
  %2824 = vmatprep.subr.mxu0 0.0
  %2825 = vmatpush1.msra.mxu0 0.0
  %2826 = vmatprep.subr.mxu0 0.0
  %2827 = vmatpush1.msra.mxu0 0.0
  %2828 = vmatprep.subr.mxu0 0.0
  %2829 = vmatpush1.msra.mxu0 0.0
  %2830 = vmatprep.subr.mxu0 0.0
  %2831 = vmatpush1.msra.mxu0 0.0
  %2832 = vmatprep.subr.mxu0 0.0
  %2833 = vmatpush1.msra.mxu0 0.0
  %2834 = vmatprep.subr.mxu0 0.0
  %2835 = vmatpush1.msra.mxu0 0.0
  %2836 = vmatprep.subr.mxu0 0.0
  %2837 = vmatpush1.msra.mxu0 0.0
  %2838 = vmatprep.subr.mxu0 0.0
  %2839 = vmatpush1.msra.mxu0 0.0
  %2840 = vmatprep.subr.mxu0 0.0
  %2841 = vmatpush1.msra.mxu0 0.0
  %2842 = vmatprep.subr.mxu0 0.0
  %2843 = vmatpush1.msra.mxu0 0.0
  %2844 = vmatprep.subr.mxu0 0.0
  %2845 = vmatpush1.msra.mxu0 0.0
  %2846 = vmatprep.subr.mxu0 0.0
  %2847 = vmatpush1.msra.mxu0 0.0
  %2848 = vmatprep.subr.mxu0 0.0
  %2849 = vmatpush1.msra.mxu0 0.0
  %2850 = vmatprep.subr.mxu0 0.0
  %2851 = vmatpush1.msra.mxu0 0.0
  %2852 = vmatprep.subr.mxu0 0.0
  %2853 = vmatpush1.msra.mxu0 0.0
  %2854 = vmatprep.subr.mxu0 0.0
  %2855 = vmatpush1.msra.mxu0 0.0
  %2856 = vmatprep.subr.mxu0 0.0
  %2857 = vmatpush1.msra.mxu0 0.0
  %2858 = vmatprep.subr.mxu0 0.0
  %2859 = vmatpush1.msra.mxu0 0.0
  %2860 = vmatprep.mubr.f32.mxu0 0.0
  %2861 = vmatmul.mubr.f32.gmra.mrb[0].mxu0 %v2791
  %v2862 = vpop.f32.mrb[0].mxu0
  %v2863 = vadd.f32 %v2788, %v2862
  %v2864 = vpop.f32.mrb[0].mxu0
  %2865 = vmatprep.mubr.f32.mxu0 0.0
  %2866 = vmatmul.mubr.f32.gmra.mrb[0].mxu0 %v2794
  %v2867 = vpop.f32.mrb[0].mxu0
  %v2868 = vadd.f32 %v2788, %v2867
  %v2869 = vpop.f32.mrb[0].mxu0
  %2870 = vdwg.mxu0
  %v2871 = vadd.f32 %v2659, %v2863
  %v2872 = vadd.f32 %v2660, %v2868
  %s2873 = scalar_lea.vmem %s18, 1
  %v2874 = vld [vmem:[%s2873] sm:$0x1]
  %s2875 = scalar_lea.vmem %s19, 1
  %v2876 = vld [vmem:[%s2875] sm:$0x1]
  %v2877 = vsel %vm77, %v2871, 0.0
  %2878 = vadd.xlane.f32.xlu0 %v2877
  %v2879 = vpop.xlane.xlu0 %2878
  %v2880 = vsel %vm77, %v2872, 0.0
  %2881 = vadd.xlane.f32.xlu0 %v2880
  %v2882 = vpop.xlane.xlu0 %2881
  %v2883 = vmul.f32 %v2879, %v84
  %v2884 = vmul.f32 %v2882, %v84
  %v2885 = vsub.f32 %v2871, %v2883
  %v2886 = vsub.f32 %v2872, %v2884
  %v2887 = vmul.f32 %v2885, %v2885
  %v2888 = vmul.f32 %v2886, %v2886
  %v2889 = vsel %vm77, %v2887, 0.0
  %2890 = vadd.xlane.f32.xlu0 %v2889
  %v2891 = vpop.xlane.xlu0 %2890
  %v2892 = vsel %vm77, %v2888, 0.0
  %2893 = vadd.xlane.f32.xlu0 %v2892
  %v2894 = vpop.xlane.xlu0 %2893
  %v2895 = vmul.f32 %v2891, %v84
  %v2896 = vmul.f32 %v2894, %v84
  %v2897 = vadd.f32 %v2895, 1e-12
  %v2898 = vadd.f32 %v2896, 1e-12
  %v2899 = vrsqrt.pop %v2897
  %v2900 = vrsqrt.pop %v2898
  %v2901 = vmul.f32 %v2885, %v2899
  %v2902 = vmul.f32 %v2886, %v2900
  %v2904 = vlaneseq
  %v2905 = vshrl.u32 %v2904, 7
  %v2906 = vsub.s32 0, %v2905
  %v2907 = vrot.slane %v2874, %v2906
  %v2909 = vmul.f32 %v2901, %v2907
  %v2910 = vmul.f32 %v2902, %v2907
  %v2912 = vlaneseq
  %v2913 = vshrl.u32 %v2912, 7
  %v2914 = vsub.s32 0, %v2913
  %v2915 = vrot.slane %v2876, %v2914
  %v2917 = vadd.f32 %v2909, %v2915
  %v2918 = vadd.f32 %v2910, %v2915
  %v2919 = vld [vmem:[%s20] sm:$0xff]
  %v2920 = vld [vmem:[%s20 + $0x8] sm:$0xff]
  %v2921 = vld [vmem:[%s20 + $0x10] sm:$0xff]
  %v2922 = vld [vmem:[%s20 + $0x18] sm:$0xff]
  %v2923 = vld [vmem:[%s21] sm:$0x1]
  %v2925 = vlaneseq
  %v2926 = vshrl.u32 %v2925, 7
  %v2927 = vsub.s32 0, %v2926
  %v2928 = vrot.slane %v2923, %v2927
  %v2931 = vsel %vm77, %v2917, 0
  %v2934 = vsel %vm77, %v2918, 0
  %2936 = vmatprep.subr.mxu0 0.0
  %2937 = vmatpush1.msra.mxu0 %v2919
  %2938 = vmatprep.subr.mxu0 0.0
  %2939 = vmatpush1.msra.mxu0 %v2920
  %2940 = vmatprep.subr.mxu0 0.0
  %2941 = vmatpush1.msra.mxu0 %v2921
  %2942 = vmatprep.subr.mxu0 0.0
  %2943 = vmatpush1.msra.mxu0 %v2922
  %2944 = vmatprep.subr.mxu0 0.0
  %2945 = vmatpush1.msra.mxu0 0.0
  %2946 = vmatprep.subr.mxu0 0.0
  %2947 = vmatpush1.msra.mxu0 0.0
  %2948 = vmatprep.subr.mxu0 0.0
  %2949 = vmatpush1.msra.mxu0 0.0
  %2950 = vmatprep.subr.mxu0 0.0
  %2951 = vmatpush1.msra.mxu0 0.0
  %2952 = vmatprep.subr.mxu0 0.0
  %2953 = vmatpush1.msra.mxu0 0.0
  %2954 = vmatprep.subr.mxu0 0.0
  %2955 = vmatpush1.msra.mxu0 0.0
  %2956 = vmatprep.subr.mxu0 0.0
  %2957 = vmatpush1.msra.mxu0 0.0
  %2958 = vmatprep.subr.mxu0 0.0
  %2959 = vmatpush1.msra.mxu0 0.0
  %2960 = vmatprep.subr.mxu0 0.0
  %2961 = vmatpush1.msra.mxu0 0.0
  %2962 = vmatprep.subr.mxu0 0.0
  %2963 = vmatpush1.msra.mxu0 0.0
  %2964 = vmatprep.subr.mxu0 0.0
  %2965 = vmatpush1.msra.mxu0 0.0
  %2966 = vmatprep.subr.mxu0 0.0
  %2967 = vmatpush1.msra.mxu0 0.0
  %2968 = vmatprep.subr.mxu0 0.0
  %2969 = vmatpush1.msra.mxu0 0.0
  %2970 = vmatprep.subr.mxu0 0.0
  %2971 = vmatpush1.msra.mxu0 0.0
  %2972 = vmatprep.subr.mxu0 0.0
  %2973 = vmatpush1.msra.mxu0 0.0
  %2974 = vmatprep.subr.mxu0 0.0
  %2975 = vmatpush1.msra.mxu0 0.0
  %2976 = vmatprep.subr.mxu0 0.0
  %2977 = vmatpush1.msra.mxu0 0.0
  %2978 = vmatprep.subr.mxu0 0.0
  %2979 = vmatpush1.msra.mxu0 0.0
  %2980 = vmatprep.subr.mxu0 0.0
  %2981 = vmatpush1.msra.mxu0 0.0
  %2982 = vmatprep.subr.mxu0 0.0
  %2983 = vmatpush1.msra.mxu0 0.0
  %2984 = vmatprep.subr.mxu0 0.0
  %2985 = vmatpush1.msra.mxu0 0.0
  %2986 = vmatprep.subr.mxu0 0.0
  %2987 = vmatpush1.msra.mxu0 0.0
  %2988 = vmatprep.subr.mxu0 0.0
  %2989 = vmatpush1.msra.mxu0 0.0
  %2990 = vmatprep.subr.mxu0 0.0
  %2991 = vmatpush1.msra.mxu0 0.0
  %2992 = vmatprep.subr.mxu0 0.0
  %2993 = vmatpush1.msra.mxu0 0.0
  %2994 = vmatprep.subr.mxu0 0.0
  %2995 = vmatpush1.msra.mxu0 0.0
  %2996 = vmatprep.subr.mxu0 0.0
  %2997 = vmatpush1.msra.mxu0 0.0
  %2998 = vmatprep.subr.mxu0 0.0
  %2999 = vmatpush1.msra.mxu0 0.0
  %3000 = vmatprep.mubr.f32.mxu0 0.0
  %3001 = vmatmul.mubr.f32.gmra.mrb[0].mxu0 %v2931
  %v3002 = vpop.f32.mrb[0].mxu0
  %v3003 = vadd.f32 %v2928, %v3002
  %v3004 = vpop.f32.mrb[0].mxu0
  %3005 = vmatprep.mubr.f32.mxu0 0.0
  %3006 = vmatmul.mubr.f32.gmra.mrb[0].mxu0 %v2934
  %v3007 = vpop.f32.mrb[0].mxu0
  %v3008 = vadd.f32 %v2928, %v3007
  %v3009 = vpop.f32.mrb[0].mxu0
  %3010 = vdwg.mxu0
  %3011 = vst [vmem:[%s22] sm:$0xff] %v3003
  %3012 = vst [vmem:[%s22 + $0x8] sm:$0xff] %v3008
  // Predicated region
  $region90: #{bert_multi_tagger_forward.1} parent=0 // pred_check
    _
  $region91: #{bert_multi_tagger_forward.1} parent=0 // pred_check_branch
    %3014 = sbr.rel (0) target = $region93
  $region92: #{bert_multi_tagger_forward.1} parent=0 // pred_region
    _
  $region93: #{bert_multi_tagger_forward.1} parent=0 // pred_fallthru
    _
  // Predicated region
  $region94: #{bert_multi_tagger_forward.1} parent=0 // pred_check
    _
  $region95: #{bert_multi_tagger_forward.1} parent=0 // pred_check_branch
    %3016 = sbr.rel (0) target = $region97
  $region96: #{bert_multi_tagger_forward.1} parent=0 // pred_region
    _
  $region97: #{bert_multi_tagger_forward.1} parent=0 // pred_fallthru
    _

</llo_original>
